<compile_context>
chip_gen: v7x
topology: tpu7x:2x2x1
jax: 0.10.0
libtpu: 0.0.40
codegen_flags: <defaults>
</compile_context>

<pallas_src>
import functools

import jax
import jax.numpy as jnp
from jax import lax
from jax.experimental import pallas as pl
from jax.experimental.pallas import tpu as pltpu


def textbiattn_kernel(x_ref, wcat_ref, whh_ref, bn_ref, wc_ref,
                      out_ref, hist_scr,
                      *, seq_len, h_pad, batch_tile, mxu_dtype):
    S, Hp, BT = seq_len, h_pad, batch_tile
    f32 = jnp.float32

    # ---- hoisted, time-parallel input projection (biases folded via ones column) ----
    gi = jnp.dot(x_ref[0], wcat_ref[...], preferred_element_type=f32)     # [S*BT, 6*Hp]
    # TODO(synk): for long S, chunk this matmul over time (second "arbitrary" grid axis
    # with mirrored fwd/bwd x index_map) so the [S*BT,6Hp] value and the x double-buffer
    # stop dominating VMEM on v7x.

    whh_f = whh_ref[0]                                                    # [Hp, 3*Hp]
    whh_b = whh_ref[1]

    # Hoisted broadcasts (JAX does not CSE broadcast_in_dim across iterations).
    bnf = jnp.broadcast_to(bn_ref[0:1, :], (BT, Hp)).astype(f32)
    bnb = jnp.broadcast_to(bn_ref[1:2, :], (BT, Hp)).astype(f32)
    wcf = jnp.broadcast_to(wc_ref[0:1, :], (BT, Hp)).astype(f32)
    wcb = jnp.broadcast_to(wc_ref[1:2, :], (BT, Hp)).astype(f32)

    def gru_cell(h, g, w_hh, b_n):
        # g: [BT, 3*Hp] precomputed input projection (+ folded b_ih / b_hh for r,z).
        # Single fused MXU push per step per direction; 128-aligned gate slices.
        gh = jnp.dot(h.astype(mxu_dtype), w_hh, preferred_element_type=f32)
        r = jax.nn.sigmoid(g[:, 0:Hp] + gh[:, 0:Hp])
        z = jax.nn.sigmoid(g[:, Hp:2 * Hp] + gh[:, Hp:2 * Hp])
        n = jnp.tanh(g[:, 2 * Hp:3 * Hp] + r * (gh[:, 2 * Hp:3 * Hp] + b_n))
        return (1.0 - z) * n + z * h

    def softmax_update(state, hf_t, hb_t):
        # One time step of the online softmax-weighted pooling (all f32).
        m, l, af, ab = state
        s = jnp.sum(hf_t * wcf + hb_t * wcb, axis=-1, keepdims=True)      # [BT, 1] (XLU)
        m_new = jnp.maximum(m, s)
        alpha = jnp.exp(m - m_new)              # EUP slot: slack in latency-bound loop
        p = jnp.exp(s - m_new)
        l = alpha * l + p
        af = alpha * af + p * hf_t
        ab = alpha * ab + p * hb_t
        return (m_new, l, af, ab)

    h_f = jnp.zeros((BT, Hp), f32)
    h_b = jnp.zeros((BT, Hp), f32)
    state = (jnp.full((BT, 1), -jnp.inf, f32),   # running max
             jnp.zeros((BT, 1), f32),            # running denominator
             jnp.zeros((BT, Hp), f32),           # fwd accumulator
             jnp.zeros((BT, Hp), f32))           # bwd accumulator

    # Fused fwd/bwd recurrence, fully unrolled: two independent dependency chains per
    # step.  First half stashes fresh states; second half finishes two time steps of
    # the online pooling per iteration from fresh + stashed states.
    # TODO(synk): for S > ~32, switch to lax.fori_loop(..., unroll=4..8) with the
    # history indexed via pl.ds + pl.multiple_of to cap vreg pressure and code size.
    for i in range(S):
        tf, tb = i, S - 1 - i
        h_f = gru_cell(h_f, gi[tf * BT:(tf + 1) * BT, 0:3 * Hp], whh_f, bnf)
        h_b = gru_cell(h_b, gi[tb * BT:(tb + 1) * BT, 3 * Hp:6 * Hp], whh_b, bnb)
        if tf < tb:
            # Partner direction for these time steps arrives later: stash.
            hist_scr[tf] = h_f.astype(hist_scr.dtype)
            hist_scr[tb] = h_b.astype(hist_scr.dtype)
        elif tf == tb:
            # Odd-S middle step: both directions fresh at the same time index.
            state = softmax_update(state, h_f, h_b)
        else:
            # Two complete time steps per iteration: fresh + stashed partner.
            state = softmax_update(state, h_f, hist_scr[tf].astype(f32))   # time tf
            state = softmax_update(state, hist_scr[tb].astype(f32), h_b)   # time tb

    _, l, acc_f, acc_b = state
    inv_l = 1.0 / l   # exact divide; pl.reciprocal(l, approx=True) is fine at bf16 tolerances
    out_ref[0, :, 0:Hp] = acc_f * inv_l
    out_ref[0, :, Hp:2 * Hp] = acc_b * inv_l


def textbiattn_forward(ids, embedding, params, hidden, *,
                       batch_block=128, mxu_dtype=jnp.bfloat16,
                       vmem_limit_bytes=48 * 1024 * 1024):
    """Forward pass of TextBiattn.

    batch_block is the per-generation batch tile: 128 for v5e (4x128^2 MXU, single vst
    slot), up to 256 on v6e/v7x (2x256^2 MXU) when VMEM allows.  mxu_dtype=bf16 is the
    fast path on v6e/v7x; pass jnp.float32 for tight-tolerance checks.
    """
    H = hidden
    B, S = ids.shape
    E = embedding.shape[1]
    f32 = jnp.float32
    LANE = 128
    H_pad = -(-H // LANE) * LANE
    E_pad = -(-(E + 1) // LANE) * LANE          # +1 column reserved for the folded bias

    # Embedding lookup is a data-dependent gather -> stays in XLA glue.
    # TODO(synk): fuse the gather into the kernel (scalar-prefetched ids + DMA gather)
    # to remove this HBM round trip at large B*S.
    x = jnp.take(embedding, ids, axis=0).astype(mxu_dtype)                # [B, S, E]

    # ---- batch tiling: big tiles, but keep >=2 grid blocks when batch allows (v7x) ----
    bt = max(1, min(batch_block, B))
    while bt > 64 and -(-B // bt) < 2:
        bt //= 2
    nb = -(-B // bt)
    B_pad = nb * bt
    if B_pad != B:
        x = jnp.pad(x, ((0, B_pad - B), (0, 0), (0, 0)))
    # [nb, S*bt, E] with rows inside each block ordered time-major (t, b_local).
    x_blk = x.reshape(nb, bt, S, E).transpose(0, 2, 1, 3).reshape(nb, S * bt, E)
    # Lane-pad E and plant a ones column at index E to fold biases into the matmul.
    x_blk = jnp.pad(x_blk, ((0, 0), (0, 0), (0, E_pad - E)))
    x_blk = x_blk.at[:, :, E].set(1.0)

    # ---- weight re-layout (one-time plumbing): gate-/lane-padded, bias-folded ----
    def pad_gates(w):                                     # [R, 3H] -> [R, 3*H_pad]
        return jnp.concatenate(
            [jnp.pad(w[:, g * H:(g + 1) * H], ((0, 0), (0, H_pad - H))) for g in range(3)],
            axis=1)

    def fold_bias(b_ih, b_hh):                            # -> [1, 3*H_pad]
        # b_ih + b_hh for r,z ; b_hh_n must stay inside r*(...) so only b_ih for n.
        b = jnp.concatenate([b_ih[:, :2 * H] + b_hh[:, :2 * H], b_ih[:, 2 * H:3 * H]], axis=1)
        return pad_gates(b)

    w_top = jnp.concatenate([pad_gates(params["w_ih_f"]), pad_gates(params["w_ih_b"])], axis=1)
    bias_row = jnp.concatenate([fold_bias(params["b_ih_f"], params["b_hh_f"]),
                                fold_bias(params["b_ih_b"], params["b_hh_b"])], axis=1)
    w_cat = jnp.concatenate(
        [w_top, bias_row, jnp.zeros((E_pad - E - 1, 6 * H_pad), f32)],
        axis=0).astype(mxu_dtype)                                          # [E_pad, 6*H_pad]

    def pad_hh(w):                                        # [H, 3H] -> [H_pad, 3*H_pad]
        return jnp.pad(pad_gates(w), ((0, H_pad - H), (0, 0)))

    whh = jnp.stack([pad_hh(params["w_hh_f"]), pad_hh(params["w_hh_b"])],
                    axis=0).astype(mxu_dtype)                              # [2, Hp, 3*Hp]
    bhh_n = jnp.concatenate(
        [jnp.pad(params["b_hh_f"][:, 2 * H:3 * H], ((0, 0), (0, H_pad - H))),
         jnp.pad(params["b_hh_b"][:, 2 * H:3 * H], ((0, 0), (0, H_pad - H)))],
        axis=0).astype(f32)                                                # [2, Hp]
    wc = jnp.concatenate(
        [jnp.pad(params["wc"][:, 0:H], ((0, 0), (0, H_pad - H))),
         jnp.pad(params["wc"][:, H:2 * H], ((0, 0), (0, H_pad - H)))],
        axis=0).astype(f32)                                                # [2, Hp]

    # History scratch in the MXU dtype: bf16 halves the dominant VMEM term on v7x;
    # f32 keeps the tight-tolerance path exact (it only feeds the pooling VPU math).
    store_dtype = mxu_dtype

    kernel = functools.partial(textbiattn_kernel, seq_len=S, h_pad=H_pad,
                               batch_tile=bt, mxu_dtype=mxu_dtype)

    grid_spec = pltpu.PrefetchScalarGridSpec(
        num_scalar_prefetch=0,
        grid=(nb,),
        in_specs=[
            pl.BlockSpec((1, S * bt, E_pad), lambda b: (b, 0, 0)),   # x (batch-blocked, +ones col)
            pl.BlockSpec((E_pad, 6 * H_pad), lambda b: (0, 0)),      # w_cat (+ folded bias row)
            pl.BlockSpec((2, H_pad, 3 * H_pad), lambda b: (0, 0, 0)),# fused per-direction w_hh
            pl.BlockSpec((2, H_pad), lambda b: (0, 0)),              # b_hh_n (fwd, bwd)
            pl.BlockSpec((2, H_pad), lambda b: (0, 0)),              # wc halves (fwd, bwd)
        ],
        out_specs=pl.BlockSpec((1, bt, 2 * H_pad), lambda b: (b, 0, 0)),
        scratch_shapes=[
            pltpu.VMEM((S, bt, H_pad), store_dtype),                 # single fused history
        ],
    )

    out = pl.pallas_call(
        kernel,
        out_shape=jax.ShapeDtypeStruct((nb, bt, 2 * H_pad), jnp.float32),
        grid_spec=grid_spec,
        compiler_params=pltpu.CompilerParams(
            dimension_semantics=("parallel",),
            vmem_limit_bytes=vmem_limit_bytes),
    )(x_blk, w_cat, whh, bhh_n, wc)

    out = out.reshape(B_pad, 2 * H_pad)[:B]
    # Strip lane padding: real fwd half lives in [0:H], real bwd half in [H_pad:H_pad+H].
    return jnp.concatenate([out[:, :H], out[:, H_pad:H_pad + H]], axis=1)


# ---------------- pure-JAX reference (for correctness check) ----------------
def _gru_ref(x, w_ih, w_hh, b_ih, b_hh, H):
    B = x.shape[0]

    def step(h, x_t):
        gi = x_t @ w_ih + b_ih
        gh = h @ w_hh + b_hh
        r = jax.nn.sigmoid(gi[:, :H] + gh[:, :H])
        z = jax.nn.sigmoid(gi[:, H:2 * H] + gh[:, H:2 * H])
        n = jnp.tanh(gi[:, 2 * H:] + r * gh[:, 2 * H:])
        h_new = (1.0 - z) * n + z * h
        return h_new, h_new

    h0 = jnp.zeros((B, H), jnp.float32)
    _, hs = lax.scan(step, h0, jnp.transpose(x, (1, 0, 2)))
    return jnp.transpose(hs, (1, 0, 2))


def ref_forward(ids, embedding, p, H):
    x = jnp.take(embedding, ids, axis=0).astype(jnp.float32)             # [B, S, E]
    hf = _gru_ref(x, p["w_ih_f"], p["w_hh_f"], p["b_ih_f"], p["b_hh_f"], H)
    hb = _gru_ref(x[:, ::-1, :], p["w_ih_b"], p["w_hh_b"],
                  p["b_ih_b"], p["b_hh_b"], H)[:, ::-1, :]
    h = jnp.concatenate([hf, hb], axis=-1)                               # [B, S, 2H]
    s = jnp.einsum("bsd,d->bs", h, p["wc"][0])                           # Wc (no bias)
    a = jax.nn.softmax(s, axis=1)
    return jnp.einsum("bs,bsd->bd", a, h)                                # [B, 2H]


if __name__ == "__main__":
    # Small opts consistent with the module: embedding_size=32, hidden_size=32,
    # rnn_layer_num=1 (dropout irrelevant for forward), batch=2, seq=8, vocab=20.
    VOCAB, E, H, B, S = 20, 32, 32, 2, 8
    scale = 0.1

    key = jax.random.PRNGKey(0)
    ks = jax.random.split(key, 12)

    embedding = jax.random.normal(ks[0], (VOCAB, E), jnp.float32) * scale
    # PyTorch GRU stores weight_ih_l0: [3H, E], weight_hh_l0: [3H, H]; we keep the
    # kernel-friendly transposed layouts [E, 3H] / [H, 3H]. Gate order: (r, z, n).
    params = {
        "w_ih_f": jax.random.normal(ks[1], (E, 3 * H), jnp.float32) * scale,
        "w_hh_f": jax.random.normal(ks[2], (H, 3 * H), jnp.float32) * scale,
        "b_ih_f": jax.random.normal(ks[3], (1, 3 * H), jnp.float32) * scale,
        "b_hh_f": jax.random.normal(ks[4], (1, 3 * H), jnp.float32) * scale,
        "w_ih_b": jax.random.normal(ks[5], (E, 3 * H), jnp.float32) * scale,
        "w_hh_b": jax.random.normal(ks[6], (H, 3 * H), jnp.float32) * scale,
        "b_ih_b": jax.random.normal(ks[7], (1, 3 * H), jnp.float32) * scale,
        "b_hh_b": jax.random.normal(ks[8], (1, 3 * H), jnp.float32) * scale,
        # Wc.weight: [1, 2H] (Linear(2H, 1, bias=False))
        "wc": jax.random.normal(ks[9], (1, 2 * H), jnp.float32) * scale,
    }
    ids = jax.random.randint(ks[10], (B, S), 0, VOCAB)

    ref = jax.block_until_ready(ref_forward(ids, embedding, params, H))

    # Tight check on the f32-MXU path.
    out32 = jax.block_until_ready(
        textbiattn_forward(ids, embedding, params, H, mxu_dtype=jnp.float32))
    assert out32.shape == (B, 2 * H), out32.shape
    assert jnp.allclose(out32, ref, atol=1e-4, rtol=1e-4), (
        float(jnp.max(jnp.abs(out32 - ref))))

    # Default fast path (bf16 MXU operands, bf16 history scratch): looser tolerance.
    out16 = jax.block_until_ready(textbiattn_forward(ids, embedding, params, H))
    assert out16.shape == (B, 2 * H), out16.shape
    assert jnp.allclose(out16, ref, atol=5e-2, rtol=5e-2), (
        float(jnp.max(jnp.abs(out16 - ref))))

    print("KERNEL_OK")
</pallas_src>

<mosaic_0001>
module attributes {stable_mosaic.version = 11 : i64} {
  func.func @textbiattn_kernel(%arg0: i32, %arg1: memref<1x16x128xf32, #tpu.memory_space<vmem>>, %arg2: memref<128x768xf32, #tpu.memory_space<vmem>>, %arg3: memref<2x128x384xf32, #tpu.memory_space<vmem>>, %arg4: memref<2x128xf32, #tpu.memory_space<vmem>>, %arg5: memref<2x128xf32, #tpu.memory_space<vmem>>, %arg6: memref<1x2x256xf32, #tpu.memory_space<vmem>>, %arg7: memref<8x2x128xf32, #tpu.memory_space<vmem>>) attributes {dimension_semantics = [#tpu.dimension_semantics<parallel>], iteration_bounds = array<i64: 1>, scalar_prefetch = 0 : i64, scratch_operands = 1 : i64, tpu.core_type = #tpu.core_type<tc>, window_params = [{transform_indices = @transform_0, window_bounds = array<i64: 1, 16, 128>}, {pipeline_mode = #tpu.pipeline_mode<synchronous>, transform_indices = @transform_1, window_bounds = array<i64: 128, 768>}, {pipeline_mode = #tpu.pipeline_mode<synchronous>, transform_indices = @transform_2, window_bounds = array<i64: 2, 128, 384>}, {pipeline_mode = #tpu.pipeline_mode<synchronous>, transform_indices = @transform_3, window_bounds = array<i64: 2, 128>}, {pipeline_mode = #tpu.pipeline_mode<synchronous>, transform_indices = @transform_4, window_bounds = array<i64: 2, 128>}, {transform_indices = @transform_5, window_bounds = array<i64: 1, 2, 256>}]} {
    %c0 = arith.constant 0 : index
    %c0_0 = arith.constant 0 : index
    %c0_1 = arith.constant 0 : index
    %0 = vector.load %arg1[%c0, %c0_0, %c0_1] : memref<1x16x128xf32, #tpu.memory_space<vmem>>, vector<1x16x128xf32>
    %1 = vector.shape_cast %0 : vector<1x16x128xf32> to vector<16x128xf32>
    %c0_2 = arith.constant 0 : index
    %c0_3 = arith.constant 0 : index
    %2 = vector.load %arg2[%c0_2, %c0_3] : memref<128x768xf32, #tpu.memory_space<vmem>>, vector<128x768xf32>
    %cst = arith.constant dense<0.000000e+00> : vector<16x768xf32>
    %3 = tpu.matmul %1, %2, %cst {dimension_numbers = #tpu.dot_dimension_numbers<[1], [0], [0], [1], [0, 0, 1, 1], [], []>} : vector<16x128xf32>, vector<128x768xf32>, vector<16x768xf32> -> vector<16x768xf32>
    %c0_4 = arith.constant 0 : index
    %c0_5 = arith.constant 0 : index
    %c0_6 = arith.constant 0 : index
    %4 = vector.load %arg3[%c0_4, %c0_5, %c0_6] : memref<2x128x384xf32, #tpu.memory_space<vmem>>, vector<1x128x384xf32>
    %5 = vector.shape_cast %4 : vector<1x128x384xf32> to vector<128x384xf32>
    %c1 = arith.constant 1 : index
    %c0_7 = arith.constant 0 : index
    %c0_8 = arith.constant 0 : index
    %6 = vector.load %arg3[%c1, %c0_7, %c0_8] : memref<2x128x384xf32, #tpu.memory_space<vmem>>, vector<1x128x384xf32>
    %7 = vector.shape_cast %6 : vector<1x128x384xf32> to vector<128x384xf32>
    %c0_9 = arith.constant 0 : index
    %c0_10 = arith.constant 0 : index
    %8 = vector.load %arg4[%c0_9, %c0_10] : memref<2x128xf32, #tpu.memory_space<vmem>>, vector<1x128xf32>
    %9 = vector.shape_cast %8 : vector<1x128xf32> to vector<1x128xf32>
    %10 = vector.broadcast %9 : vector<1x128xf32> to vector<2x128xf32>
    %c1_11 = arith.constant 1 : index
    %c0_12 = arith.constant 0 : index
    %11 = vector.load %arg4[%c1_11, %c0_12] : memref<2x128xf32, #tpu.memory_space<vmem>>, vector<1x128xf32>
    %12 = vector.shape_cast %11 : vector<1x128xf32> to vector<1x128xf32>
    %13 = vector.broadcast %12 : vector<1x128xf32> to vector<2x128xf32>
    %c0_13 = arith.constant 0 : index
    %c0_14 = arith.constant 0 : index
    %14 = vector.load %arg5[%c0_13, %c0_14] : memref<2x128xf32, #tpu.memory_space<vmem>>, vector<1x128xf32>
    %15 = vector.shape_cast %14 : vector<1x128xf32> to vector<1x128xf32>
    %16 = vector.broadcast %15 : vector<1x128xf32> to vector<2x128xf32>
    %c1_15 = arith.constant 1 : index
    %c0_16 = arith.constant 0 : index
    %17 = vector.load %arg5[%c1_15, %c0_16] : memref<2x128xf32, #tpu.memory_space<vmem>>, vector<1x128xf32>
    %18 = vector.shape_cast %17 : vector<1x128xf32> to vector<1x128xf32>
    %19 = vector.broadcast %18 : vector<1x128xf32> to vector<2x128xf32>
    %cst_17 = arith.constant 0.000000e+00 : f32
    %20 = vector.broadcast %cst_17 : f32 to vector<2x128xf32>
    %cst_18 = arith.constant 0.000000e+00 : f32
    %21 = vector.broadcast %cst_18 : f32 to vector<2x128xf32>
    %cst_19 = arith.constant 0xFF800000 : f32
    %22 = vector.broadcast %cst_19 : f32 to vector<2x1xf32>
    %cst_20 = arith.constant 0.000000e+00 : f32
    %23 = vector.broadcast %cst_20 : f32 to vector<2x1xf32>
    %cst_21 = arith.constant 0.000000e+00 : f32
    %24 = vector.broadcast %cst_21 : f32 to vector<2x128xf32>
    %cst_22 = arith.constant 0.000000e+00 : f32
    %25 = vector.broadcast %cst_22 : f32 to vector<2x128xf32>
    %26 = vector.extract_strided_slice %3 {offsets = [0, 0], sizes = [2, 384], strides = [1, 1]} : vector<16x768xf32> to vector<2x384xf32>
    %cst_23 = arith.constant dense<0.000000e+00> : vector<2x384xf32>
    %27 = tpu.matmul %20, %5, %cst_23 {dimension_numbers = #tpu.dot_dimension_numbers<[1], [0], [0], [1], [0, 0, 1, 1], [], []>} : vector<2x128xf32>, vector<128x384xf32>, vector<2x384xf32> -> vector<2x384xf32>
    %28 = vector.extract_strided_slice %26 {offsets = [0, 0], sizes = [2, 128], strides = [1, 1]} : vector<2x384xf32> to vector<2x128xf32>
    %29 = vector.extract_strided_slice %27 {offsets = [0, 0], sizes = [2, 128], strides = [1, 1]} : vector<2x384xf32> to vector<2x128xf32>
    %30 = arith.addf %28, %29 : vector<2x128xf32>
    %31 = arith.negf %30 : vector<2x128xf32>
    %32 = math.exp %31 : vector<2x128xf32>
    %cst_24 = arith.constant 1.000000e+00 : f32
    %33 = vector.broadcast %cst_24 : f32 to vector<2x128xf32>
    %34 = arith.addf %33, %32 : vector<2x128xf32>
    %35 = arith.divf %33, %34 : vector<2x128xf32>
    %36 = vector.extract_strided_slice %26 {offsets = [0, 128], sizes = [2, 128], strides = [1, 1]} : vector<2x384xf32> to vector<2x128xf32>
    %37 = vector.extract_strided_slice %27 {offsets = [0, 128], sizes = [2, 128], strides = [1, 1]} : vector<2x384xf32> to vector<2x128xf32>
    %38 = arith.addf %36, %37 : vector<2x128xf32>
    %39 = arith.negf %38 : vector<2x128xf32>
    %40 = math.exp %39 : vector<2x128xf32>
    %cst_25 = arith.constant 1.000000e+00 : f32
    %41 = vector.broadcast %cst_25 : f32 to vector<2x128xf32>
    %42 = arith.addf %41, %40 : vector<2x128xf32>
    %43 = arith.divf %41, %42 : vector<2x128xf32>
    %44 = vector.extract_strided_slice %26 {offsets = [0, 256], sizes = [2, 128], strides = [1, 1]} : vector<2x384xf32> to vector<2x128xf32>
    %45 = vector.extract_strided_slice %27 {offsets = [0, 256], sizes = [2, 128], strides = [1, 1]} : vector<2x384xf32> to vector<2x128xf32>
    %46 = arith.addf %45, %10 : vector<2x128xf32>
    %47 = arith.mulf %35, %46 : vector<2x128xf32>
    %48 = arith.addf %44, %47 : vector<2x128xf32>
    %49 = math.tanh %48 : vector<2x128xf32>
    %cst_26 = arith.constant 1.000000e+00 : f32
    %50 = vector.broadcast %cst_26 : f32 to vector<2x128xf32>
    %51 = arith.subf %50, %43 : vector<2x128xf32>
    %52 = arith.mulf %51, %49 : vector<2x128xf32>
    %53 = arith.mulf %43, %20 : vector<2x128xf32>
    %54 = arith.addf %52, %53 : vector<2x128xf32>
    %55 = vector.extract_strided_slice %3 {offsets = [14, 384], sizes = [2, 384], strides = [1, 1]} : vector<16x768xf32> to vector<2x384xf32>
    %cst_27 = arith.constant dense<0.000000e+00> : vector<2x384xf32>
    %56 = tpu.matmul %21, %7, %cst_27 {dimension_numbers = #tpu.dot_dimension_numbers<[1], [0], [0], [1], [0, 0, 1, 1], [], []>} : vector<2x128xf32>, vector<128x384xf32>, vector<2x384xf32> -> vector<2x384xf32>
    %57 = vector.extract_strided_slice %55 {offsets = [0, 0], sizes = [2, 128], strides = [1, 1]} : vector<2x384xf32> to vector<2x128xf32>
    %58 = vector.extract_strided_slice %56 {offsets = [0, 0], sizes = [2, 128], strides = [1, 1]} : vector<2x384xf32> to vector<2x128xf32>
    %59 = arith.addf %57, %58 : vector<2x128xf32>
    %60 = arith.negf %59 : vector<2x128xf32>
    %61 = math.exp %60 : vector<2x128xf32>
    %cst_28 = arith.constant 1.000000e+00 : f32
    %62 = vector.broadcast %cst_28 : f32 to vector<2x128xf32>
    %63 = arith.addf %62, %61 : vector<2x128xf32>
    %64 = arith.divf %62, %63 : vector<2x128xf32>
    %65 = vector.extract_strided_slice %55 {offsets = [0, 128], sizes = [2, 128], strides = [1, 1]} : vector<2x384xf32> to vector<2x128xf32>
    %66 = vector.extract_strided_slice %56 {offsets = [0, 128], sizes = [2, 128], strides = [1, 1]} : vector<2x384xf32> to vector<2x128xf32>
    %67 = arith.addf %65, %66 : vector<2x128xf32>
    %68 = arith.negf %67 : vector<2x128xf32>
    %69 = math.exp %68 : vector<2x128xf32>
    %cst_29 = arith.constant 1.000000e+00 : f32
    %70 = vector.broadcast %cst_29 : f32 to vector<2x128xf32>
    %71 = arith.addf %70, %69 : vector<2x128xf32>
    %72 = arith.divf %70, %71 : vector<2x128xf32>
    %73 = vector.extract_strided_slice %55 {offsets = [0, 256], sizes = [2, 128], strides = [1, 1]} : vector<2x384xf32> to vector<2x128xf32>
    %74 = vector.extract_strided_slice %56 {offsets = [0, 256], sizes = [2, 128], strides = [1, 1]} : vector<2x384xf32> to vector<2x128xf32>
    %75 = arith.addf %74, %13 : vector<2x128xf32>
    %76 = arith.mulf %64, %75 : vector<2x128xf32>
    %77 = arith.addf %73, %76 : vector<2x128xf32>
    %78 = math.tanh %77 : vector<2x128xf32>
    %cst_30 = arith.constant 1.000000e+00 : f32
    %79 = vector.broadcast %cst_30 : f32 to vector<2x128xf32>
    %80 = arith.subf %79, %72 : vector<2x128xf32>
    %81 = arith.mulf %80, %78 : vector<2x128xf32>
    %82 = arith.mulf %72, %21 : vector<2x128xf32>
    %83 = arith.addf %81, %82 : vector<2x128xf32>
    %c0_31 = arith.constant 0 : index
    %c0_32 = arith.constant 0 : index
    %c0_33 = arith.constant 0 : index
    %84 = vector.load %arg7[%c0_31, %c0_32, %c0_33] : memref<8x2x128xf32, #tpu.memory_space<vmem>>, vector<1x2x128xf32>
    %85 = vector.shape_cast %84 : vector<1x2x128xf32> to vector<2x128xf32>
    %86 = vector.shape_cast %54 : vector<2x128xf32> to vector<1x2x128xf32>
    tpu.vector_store %arg7[%c0_31, %c0_32, %c0_33], %86 {strides = array<i32>} : memref<8x2x128xf32, #tpu.memory_space<vmem>>, vector<1x2x128xf32>,
    %c7 = arith.constant 7 : index
    %c0_34 = arith.constant 0 : index
    %c0_35 = arith.constant 0 : index
    %87 = vector.load %arg7[%c7, %c0_34, %c0_35] : memref<8x2x128xf32, #tpu.memory_space<vmem>>, vector<1x2x128xf32>
    %88 = vector.shape_cast %87 : vector<1x2x128xf32> to vector<2x128xf32>
    %89 = vector.shape_cast %83 : vector<2x128xf32> to vector<1x2x128xf32>
    tpu.vector_store %arg7[%c7, %c0_34, %c0_35], %89 {strides = array<i32>} : memref<8x2x128xf32, #tpu.memory_space<vmem>>, vector<1x2x128xf32>,
    %90 = vector.extract_strided_slice %3 {offsets = [2, 0], sizes = [2, 384], strides = [1, 1]} : vector<16x768xf32> to vector<2x384xf32>
    %cst_36 = arith.constant dense<0.000000e+00> : vector<2x384xf32>
    %91 = tpu.matmul %54, %5, %cst_36 {dimension_numbers = #tpu.dot_dimension_numbers<[1], [0], [0], [1], [0, 0, 1, 1], [], []>} : vector<2x128xf32>, vector<128x384xf32>, vector<2x384xf32> -> vector<2x384xf32>
    %92 = vector.extract_strided_slice %90 {offsets = [0, 0], sizes = [2, 128], strides = [1, 1]} : vector<2x384xf32> to vector<2x128xf32>
    %93 = vector.extract_strided_slice %91 {offsets = [0, 0], sizes = [2, 128], strides = [1, 1]} : vector<2x384xf32> to vector<2x128xf32>
    %94 = arith.addf %92, %93 : vector<2x128xf32>
    %95 = arith.negf %94 : vector<2x128xf32>
    %96 = math.exp %95 : vector<2x128xf32>
    %cst_37 = arith.constant 1.000000e+00 : f32
    %97 = vector.broadcast %cst_37 : f32 to vector<2x128xf32>
    %98 = arith.addf %97, %96 : vector<2x128xf32>
    %99 = arith.divf %97, %98 : vector<2x128xf32>
    %100 = vector.extract_strided_slice %90 {offsets = [0, 128], sizes = [2, 128], strides = [1, 1]} : vector<2x384xf32> to vector<2x128xf32>
    %101 = vector.extract_strided_slice %91 {offsets = [0, 128], sizes = [2, 128], strides = [1, 1]} : vector<2x384xf32> to vector<2x128xf32>
    %102 = arith.addf %100, %101 : vector<2x128xf32>
    %103 = arith.negf %102 : vector<2x128xf32>
    %104 = math.exp %103 : vector<2x128xf32>
    %cst_38 = arith.constant 1.000000e+00 : f32
    %105 = vector.broadcast %cst_38 : f32 to vector<2x128xf32>
    %106 = arith.addf %105, %104 : vector<2x128xf32>
    %107 = arith.divf %105, %106 : vector<2x128xf32>
    %108 = vector.extract_strided_slice %90 {offsets = [0, 256], sizes = [2, 128], strides = [1, 1]} : vector<2x384xf32> to vector<2x128xf32>
    %109 = vector.extract_strided_slice %91 {offsets = [0, 256], sizes = [2, 128], strides = [1, 1]} : vector<2x384xf32> to vector<2x128xf32>
    %110 = arith.addf %109, %10 : vector<2x128xf32>
    %111 = arith.mulf %99, %110 : vector<2x128xf32>
    %112 = arith.addf %108, %111 : vector<2x128xf32>
    %113 = math.tanh %112 : vector<2x128xf32>
    %cst_39 = arith.constant 1.000000e+00 : f32
    %114 = vector.broadcast %cst_39 : f32 to vector<2x128xf32>
    %115 = arith.subf %114, %107 : vector<2x128xf32>
    %116 = arith.mulf %115, %113 : vector<2x128xf32>
    %117 = arith.mulf %107, %54 : vector<2x128xf32>
    %118 = arith.addf %116, %117 : vector<2x128xf32>
    %119 = vector.extract_strided_slice %3 {offsets = [12, 384], sizes = [2, 384], strides = [1, 1]} : vector<16x768xf32> to vector<2x384xf32>
    %cst_40 = arith.constant dense<0.000000e+00> : vector<2x384xf32>
    %120 = tpu.matmul %83, %7, %cst_40 {dimension_numbers = #tpu.dot_dimension_numbers<[1], [0], [0], [1], [0, 0, 1, 1], [], []>} : vector<2x128xf32>, vector<128x384xf32>, vector<2x384xf32> -> vector<2x384xf32>
    %121 = vector.extract_strided_slice %119 {offsets = [0, 0], sizes = [2, 128], strides = [1, 1]} : vector<2x384xf32> to vector<2x128xf32>
    %122 = vector.extract_strided_slice %120 {offsets = [0, 0], sizes = [2, 128], strides = [1, 1]} : vector<2x384xf32> to vector<2x128xf32>
    %123 = arith.addf %121, %122 : vector<2x128xf32>
    %124 = arith.negf %123 : vector<2x128xf32>
    %125 = math.exp %124 : vector<2x128xf32>
    %cst_41 = arith.constant 1.000000e+00 : f32
    %126 = vector.broadcast %cst_41 : f32 to vector<2x128xf32>
    %127 = arith.addf %126, %125 : vector<2x128xf32>
    %128 = arith.divf %126, %127 : vector<2x128xf32>
    %129 = vector.extract_strided_slice %119 {offsets = [0, 128], sizes = [2, 128], strides = [1, 1]} : vector<2x384xf32> to vector<2x128xf32>
    %130 = vector.extract_strided_slice %120 {offsets = [0, 128], sizes = [2, 128], strides = [1, 1]} : vector<2x384xf32> to vector<2x128xf32>
    %131 = arith.addf %129, %130 : vector<2x128xf32>
    %132 = arith.negf %131 : vector<2x128xf32>
    %133 = math.exp %132 : vector<2x128xf32>
    %cst_42 = arith.constant 1.000000e+00 : f32
    %134 = vector.broadcast %cst_42 : f32 to vector<2x128xf32>
    %135 = arith.addf %134, %133 : vector<2x128xf32>
    %136 = arith.divf %134, %135 : vector<2x128xf32>
    %137 = vector.extract_strided_slice %119 {offsets = [0, 256], sizes = [2, 128], strides = [1, 1]} : vector<2x384xf32> to vector<2x128xf32>
    %138 = vector.extract_strided_slice %120 {offsets = [0, 256], sizes = [2, 128], strides = [1, 1]} : vector<2x384xf32> to vector<2x128xf32>
    %139 = arith.addf %138, %13 : vector<2x128xf32>
    %140 = arith.mulf %128, %139 : vector<2x128xf32>
    %141 = arith.addf %137, %140 : vector<2x128xf32>
    %142 = math.tanh %141 : vector<2x128xf32>
    %cst_43 = arith.constant 1.000000e+00 : f32
    %143 = vector.broadcast %cst_43 : f32 to vector<2x128xf32>
    %144 = arith.subf %143, %136 : vector<2x128xf32>
    %145 = arith.mulf %144, %142 : vector<2x128xf32>
    %146 = arith.mulf %136, %83 : vector<2x128xf32>
    %147 = arith.addf %145, %146 : vector<2x128xf32>
    %c1_44 = arith.constant 1 : index
    %c0_45 = arith.constant 0 : index
    %c0_46 = arith.constant 0 : index
    %148 = vector.load %arg7[%c1_44, %c0_45, %c0_46] : memref<8x2x128xf32, #tpu.memory_space<vmem>>, vector<1x2x128xf32>
    %149 = vector.shape_cast %148 : vector<1x2x128xf32> to vector<2x128xf32>
    %150 = vector.shape_cast %118 : vector<2x128xf32> to vector<1x2x128xf32>
    tpu.vector_store %arg7[%c1_44, %c0_45, %c0_46], %150 {strides = array<i32>} : memref<8x2x128xf32, #tpu.memory_space<vmem>>, vector<1x2x128xf32>,
    %c6 = arith.constant 6 : index
    %c0_47 = arith.constant 0 : index
    %c0_48 = arith.constant 0 : index
    %151 = vector.load %arg7[%c6, %c0_47, %c0_48] : memref<8x2x128xf32, #tpu.memory_space<vmem>>, vector<1x2x128xf32>
    %152 = vector.shape_cast %151 : vector<1x2x128xf32> to vector<2x128xf32>
    %153 = vector.shape_cast %147 : vector<2x128xf32> to vector<1x2x128xf32>
    tpu.vector_store %arg7[%c6, %c0_47, %c0_48], %153 {strides = array<i32>} : memref<8x2x128xf32, #tpu.memory_space<vmem>>, vector<1x2x128xf32>,
    %154 = vector.extract_strided_slice %3 {offsets = [4, 0], sizes = [2, 384], strides = [1, 1]} : vector<16x768xf32> to vector<2x384xf32>
    %cst_49 = arith.constant dense<0.000000e+00> : vector<2x384xf32>
    %155 = tpu.matmul %118, %5, %cst_49 {dimension_numbers = #tpu.dot_dimension_numbers<[1], [0], [0], [1], [0, 0, 1, 1], [], []>} : vector<2x128xf32>, vector<128x384xf32>, vector<2x384xf32> -> vector<2x384xf32>
    %156 = vector.extract_strided_slice %154 {offsets = [0, 0], sizes = [2, 128], strides = [1, 1]} : vector<2x384xf32> to vector<2x128xf32>
    %157 = vector.extract_strided_slice %155 {offsets = [0, 0], sizes = [2, 128], strides = [1, 1]} : vector<2x384xf32> to vector<2x128xf32>
    %158 = arith.addf %156, %157 : vector<2x128xf32>
    %159 = arith.negf %158 : vector<2x128xf32>
    %160 = math.exp %159 : vector<2x128xf32>
    %cst_50 = arith.constant 1.000000e+00 : f32
    %161 = vector.broadcast %cst_50 : f32 to vector<2x128xf32>
    %162 = arith.addf %161, %160 : vector<2x128xf32>
    %163 = arith.divf %161, %162 : vector<2x128xf32>
    %164 = vector.extract_strided_slice %154 {offsets = [0, 128], sizes = [2, 128], strides = [1, 1]} : vector<2x384xf32> to vector<2x128xf32>
    %165 = vector.extract_strided_slice %155 {offsets = [0, 128], sizes = [2, 128], strides = [1, 1]} : vector<2x384xf32> to vector<2x128xf32>
    %166 = arith.addf %164, %165 : vector<2x128xf32>
    %167 = arith.negf %166 : vector<2x128xf32>
    %168 = math.exp %167 : vector<2x128xf32>
    %cst_51 = arith.constant 1.000000e+00 : f32
    %169 = vector.broadcast %cst_51 : f32 to vector<2x128xf32>
    %170 = arith.addf %169, %168 : vector<2x128xf32>
    %171 = arith.divf %169, %170 : vector<2x128xf32>
    %172 = vector.extract_strided_slice %154 {offsets = [0, 256], sizes = [2, 128], strides = [1, 1]} : vector<2x384xf32> to vector<2x128xf32>
    %173 = vector.extract_strided_slice %155 {offsets = [0, 256], sizes = [2, 128], strides = [1, 1]} : vector<2x384xf32> to vector<2x128xf32>
    %174 = arith.addf %173, %10 : vector<2x128xf32>
    %175 = arith.mulf %163, %174 : vector<2x128xf32>
    %176 = arith.addf %172, %175 : vector<2x128xf32>
    %177 = math.tanh %176 : vector<2x128xf32>
    %cst_52 = arith.constant 1.000000e+00 : f32
    %178 = vector.broadcast %cst_52 : f32 to vector<2x128xf32>
    %179 = arith.subf %178, %171 : vector<2x128xf32>
    %180 = arith.mulf %179, %177 : vector<2x128xf32>
    %181 = arith.mulf %171, %118 : vector<2x128xf32>
    %182 = arith.addf %180, %181 : vector<2x128xf32>
    %183 = vector.extract_strided_slice %3 {offsets = [10, 384], sizes = [2, 384], strides = [1, 1]} : vector<16x768xf32> to vector<2x384xf32>
    %cst_53 = arith.constant dense<0.000000e+00> : vector<2x384xf32>
    %184 = tpu.matmul %147, %7, %cst_53 {dimension_numbers = #tpu.dot_dimension_numbers<[1], [0], [0], [1], [0, 0, 1, 1], [], []>} : vector<2x128xf32>, vector<128x384xf32>, vector<2x384xf32> -> vector<2x384xf32>
    %185 = vector.extract_strided_slice %183 {offsets = [0, 0], sizes = [2, 128], strides = [1, 1]} : vector<2x384xf32> to vector<2x128xf32>
    %186 = vector.extract_strided_slice %184 {offsets = [0, 0], sizes = [2, 128], strides = [1, 1]} : vector<2x384xf32> to vector<2x128xf32>
    %187 = arith.addf %185, %186 : vector<2x128xf32>
    %188 = arith.negf %187 : vector<2x128xf32>
    %189 = math.exp %188 : vector<2x128xf32>
    %cst_54 = arith.constant 1.000000e+00 : f32
    %190 = vector.broadcast %cst_54 : f32 to vector<2x128xf32>
    %191 = arith.addf %190, %189 : vector<2x128xf32>
    %192 = arith.divf %190, %191 : vector<2x128xf32>
    %193 = vector.extract_strided_slice %183 {offsets = [0, 128], sizes = [2, 128], strides = [1, 1]} : vector<2x384xf32> to vector<2x128xf32>
    %194 = vector.extract_strided_slice %184 {offsets = [0, 128], sizes = [2, 128], strides = [1, 1]} : vector<2x384xf32> to vector<2x128xf32>
    %195 = arith.addf %193, %194 : vector<2x128xf32>
    %196 = arith.negf %195 : vector<2x128xf32>
    %197 = math.exp %196 : vector<2x128xf32>
    %cst_55 = arith.constant 1.000000e+00 : f32
    %198 = vector.broadcast %cst_55 : f32 to vector<2x128xf32>
    %199 = arith.addf %198, %197 : vector<2x128xf32>
    %200 = arith.divf %198, %199 : vector<2x128xf32>
    %201 = vector.extract_strided_slice %183 {offsets = [0, 256], sizes = [2, 128], strides = [1, 1]} : vector<2x384xf32> to vector<2x128xf32>
    %202 = vector.extract_strided_slice %184 {offsets = [0, 256], sizes = [2, 128], strides = [1, 1]} : vector<2x384xf32> to vector<2x128xf32>
    %203 = arith.addf %202, %13 : vector<2x128xf32>
    %204 = arith.mulf %192, %203 : vector<2x128xf32>
    %205 = arith.addf %201, %204 : vector<2x128xf32>
    %206 = math.tanh %205 : vector<2x128xf32>
    %cst_56 = arith.constant 1.000000e+00 : f32
    %207 = vector.broadcast %cst_56 : f32 to vector<2x128xf32>
    %208 = arith.subf %207, %200 : vector<2x128xf32>
    %209 = arith.mulf %208, %206 : vector<2x128xf32>
    %210 = arith.mulf %200, %147 : vector<2x128xf32>
    %211 = arith.addf %209, %210 : vector<2x128xf32>
    %c2 = arith.constant 2 : index
    %c0_57 = arith.constant 0 : index
    %c0_58 = arith.constant 0 : index
    %212 = vector.load %arg7[%c2, %c0_57, %c0_58] : memref<8x2x128xf32, #tpu.memory_space<vmem>>, vector<1x2x128xf32>
    %213 = vector.shape_cast %212 : vector<1x2x128xf32> to vector<2x128xf32>
    %214 = vector.shape_cast %182 : vector<2x128xf32> to vector<1x2x128xf32>
    tpu.vector_store %arg7[%c2, %c0_57, %c0_58], %214 {strides = array<i32>} : memref<8x2x128xf32, #tpu.memory_space<vmem>>, vector<1x2x128xf32>,
    %c5 = arith.constant 5 : index
    %c0_59 = arith.constant 0 : index
    %c0_60 = arith.constant 0 : index
    %215 = vector.load %arg7[%c5, %c0_59, %c0_60] : memref<8x2x128xf32, #tpu.memory_space<vmem>>, vector<1x2x128xf32>
    %216 = vector.shape_cast %215 : vector<1x2x128xf32> to vector<2x128xf32>
    %217 = vector.shape_cast %211 : vector<2x128xf32> to vector<1x2x128xf32>
    tpu.vector_store %arg7[%c5, %c0_59, %c0_60], %217 {strides = array<i32>} : memref<8x2x128xf32, #tpu.memory_space<vmem>>, vector<1x2x128xf32>,
    %218 = vector.extract_strided_slice %3 {offsets = [6, 0], sizes = [2, 384], strides = [1, 1]} : vector<16x768xf32> to vector<2x384xf32>
    %cst_61 = arith.constant dense<0.000000e+00> : vector<2x384xf32>
    %219 = tpu.matmul %182, %5, %cst_61 {dimension_numbers = #tpu.dot_dimension_numbers<[1], [0], [0], [1], [0, 0, 1, 1], [], []>} : vector<2x128xf32>, vector<128x384xf32>, vector<2x384xf32> -> vector<2x384xf32>
    %220 = vector.extract_strided_slice %218 {offsets = [0, 0], sizes = [2, 128], strides = [1, 1]} : vector<2x384xf32> to vector<2x128xf32>
    %221 = vector.extract_strided_slice %219 {offsets = [0, 0], sizes = [2, 128], strides = [1, 1]} : vector<2x384xf32> to vector<2x128xf32>
    %222 = arith.addf %220, %221 : vector<2x128xf32>
    %223 = arith.negf %222 : vector<2x128xf32>
    %224 = math.exp %223 : vector<2x128xf32>
    %cst_62 = arith.constant 1.000000e+00 : f32
    %225 = vector.broadcast %cst_62 : f32 to vector<2x128xf32>
    %226 = arith.addf %225, %224 : vector<2x128xf32>
    %227 = arith.divf %225, %226 : vector<2x128xf32>
    %228 = vector.extract_strided_slice %218 {offsets = [0, 128], sizes = [2, 128], strides = [1, 1]} : vector<2x384xf32> to vector<2x128xf32>
    %229 = vector.extract_strided_slice %219 {offsets = [0, 128], sizes = [2, 128], strides = [1, 1]} : vector<2x384xf32> to vector<2x128xf32>
    %230 = arith.addf %228, %229 : vector<2x128xf32>
    %231 = arith.negf %230 : vector<2x128xf32>
    %232 = math.exp %231 : vector<2x128xf32>
    %cst_63 = arith.constant 1.000000e+00 : f32
    %233 = vector.broadcast %cst_63 : f32 to vector<2x128xf32>
    %234 = arith.addf %233, %232 : vector<2x128xf32>
    %235 = arith.divf %233, %234 : vector<2x128xf32>
    %236 = vector.extract_strided_slice %218 {offsets = [0, 256], sizes = [2, 128], strides = [1, 1]} : vector<2x384xf32> to vector<2x128xf32>
    %237 = vector.extract_strided_slice %219 {offsets = [0, 256], sizes = [2, 128], strides = [1, 1]} : vector<2x384xf32> to vector<2x128xf32>
    %238 = arith.addf %237, %10 : vector<2x128xf32>
    %239 = arith.mulf %227, %238 : vector<2x128xf32>
    %240 = arith.addf %236, %239 : vector<2x128xf32>
    %241 = math.tanh %240 : vector<2x128xf32>
    %cst_64 = arith.constant 1.000000e+00 : f32
    %242 = vector.broadcast %cst_64 : f32 to vector<2x128xf32>
    %243 = arith.subf %242, %235 : vector<2x128xf32>
    %244 = arith.mulf %243, %241 : vector<2x128xf32>
    %245 = arith.mulf %235, %182 : vector<2x128xf32>
    %246 = arith.addf %244, %245 : vector<2x128xf32>
    %247 = vector.extract_strided_slice %3 {offsets = [8, 384], sizes = [2, 384], strides = [1, 1]} : vector<16x768xf32> to vector<2x384xf32>
    %cst_65 = arith.constant dense<0.000000e+00> : vector<2x384xf32>
    %248 = tpu.matmul %211, %7, %cst_65 {dimension_numbers = #tpu.dot_dimension_numbers<[1], [0], [0], [1], [0, 0, 1, 1], [], []>} : vector<2x128xf32>, vector<128x384xf32>, vector<2x384xf32> -> vector<2x384xf32>
    %249 = vector.extract_strided_slice %247 {offsets = [0, 0], sizes = [2, 128], strides = [1, 1]} : vector<2x384xf32> to vector<2x128xf32>
    %250 = vector.extract_strided_slice %248 {offsets = [0, 0], sizes = [2, 128], strides = [1, 1]} : vector<2x384xf32> to vector<2x128xf32>
    %251 = arith.addf %249, %250 : vector<2x128xf32>
    %252 = arith.negf %251 : vector<2x128xf32>
    %253 = math.exp %252 : vector<2x128xf32>
    %cst_66 = arith.constant 1.000000e+00 : f32
    %254 = vector.broadcast %cst_66 : f32 to vector<2x128xf32>
    %255 = arith.addf %254, %253 : vector<2x128xf32>
    %256 = arith.divf %254, %255 : vector<2x128xf32>
    %257 = vector.extract_strided_slice %247 {offsets = [0, 128], sizes = [2, 128], strides = [1, 1]} : vector<2x384xf32> to vector<2x128xf32>
    %258 = vector.extract_strided_slice %248 {offsets = [0, 128], sizes = [2, 128], strides = [1, 1]} : vector<2x384xf32> to vector<2x128xf32>
    %259 = arith.addf %257, %258 : vector<2x128xf32>
    %260 = arith.negf %259 : vector<2x128xf32>
    %261 = math.exp %260 : vector<2x128xf32>
    %cst_67 = arith.constant 1.000000e+00 : f32
    %262 = vector.broadcast %cst_67 : f32 to vector<2x128xf32>
    %263 = arith.addf %262, %261 : vector<2x128xf32>
    %264 = arith.divf %262, %263 : vector<2x128xf32>
    %265 = vector.extract_strided_slice %247 {offsets = [0, 256], sizes = [2, 128], strides = [1, 1]} : vector<2x384xf32> to vector<2x128xf32>
    %266 = vector.extract_strided_slice %248 {offsets = [0, 256], sizes = [2, 128], strides = [1, 1]} : vector<2x384xf32> to vector<2x128xf32>
    %267 = arith.addf %266, %13 : vector<2x128xf32>
    %268 = arith.mulf %256, %267 : vector<2x128xf32>
    %269 = arith.addf %265, %268 : vector<2x128xf32>
    %270 = math.tanh %269 : vector<2x128xf32>
    %cst_68 = arith.constant 1.000000e+00 : f32
    %271 = vector.broadcast %cst_68 : f32 to vector<2x128xf32>
    %272 = arith.subf %271, %264 : vector<2x128xf32>
    %273 = arith.mulf %272, %270 : vector<2x128xf32>
    %274 = arith.mulf %264, %211 : vector<2x128xf32>
    %275 = arith.addf %273, %274 : vector<2x128xf32>
    %c3 = arith.constant 3 : index
    %c0_69 = arith.constant 0 : index
    %c0_70 = arith.constant 0 : index
    %276 = vector.load %arg7[%c3, %c0_69, %c0_70] : memref<8x2x128xf32, #tpu.memory_space<vmem>>, vector<1x2x128xf32>
    %277 = vector.shape_cast %276 : vector<1x2x128xf32> to vector<2x128xf32>
    %278 = vector.shape_cast %246 : vector<2x128xf32> to vector<1x2x128xf32>
    tpu.vector_store %arg7[%c3, %c0_69, %c0_70], %278 {strides = array<i32>} : memref<8x2x128xf32, #tpu.memory_space<vmem>>, vector<1x2x128xf32>,
    %c4 = arith.constant 4 : index
    %c0_71 = arith.constant 0 : index
    %c0_72 = arith.constant 0 : index
    %279 = vector.load %arg7[%c4, %c0_71, %c0_72] : memref<8x2x128xf32, #tpu.memory_space<vmem>>, vector<1x2x128xf32>
    %280 = vector.shape_cast %279 : vector<1x2x128xf32> to vector<2x128xf32>
    %281 = vector.shape_cast %275 : vector<2x128xf32> to vector<1x2x128xf32>
    tpu.vector_store %arg7[%c4, %c0_71, %c0_72], %281 {strides = array<i32>} : memref<8x2x128xf32, #tpu.memory_space<vmem>>, vector<1x2x128xf32>,
    %282 = vector.extract_strided_slice %3 {offsets = [8, 0], sizes = [2, 384], strides = [1, 1]} : vector<16x768xf32> to vector<2x384xf32>
    %cst_73 = arith.constant dense<0.000000e+00> : vector<2x384xf32>
    %283 = tpu.matmul %246, %5, %cst_73 {dimension_numbers = #tpu.dot_dimension_numbers<[1], [0], [0], [1], [0, 0, 1, 1], [], []>} : vector<2x128xf32>, vector<128x384xf32>, vector<2x384xf32> -> vector<2x384xf32>
    %284 = vector.extract_strided_slice %282 {offsets = [0, 0], sizes = [2, 128], strides = [1, 1]} : vector<2x384xf32> to vector<2x128xf32>
    %285 = vector.extract_strided_slice %283 {offsets = [0, 0], sizes = [2, 128], strides = [1, 1]} : vector<2x384xf32> to vector<2x128xf32>
    %286 = arith.addf %284, %285 : vector<2x128xf32>
    %287 = arith.negf %286 : vector<2x128xf32>
    %288 = math.exp %287 : vector<2x128xf32>
    %cst_74 = arith.constant 1.000000e+00 : f32
    %289 = vector.broadcast %cst_74 : f32 to vector<2x128xf32>
    %290 = arith.addf %289, %288 : vector<2x128xf32>
    %291 = arith.divf %289, %290 : vector<2x128xf32>
    %292 = vector.extract_strided_slice %282 {offsets = [0, 128], sizes = [2, 128], strides = [1, 1]} : vector<2x384xf32> to vector<2x128xf32>
    %293 = vector.extract_strided_slice %283 {offsets = [0, 128], sizes = [2, 128], strides = [1, 1]} : vector<2x384xf32> to vector<2x128xf32>
    %294 = arith.addf %292, %293 : vector<2x128xf32>
    %295 = arith.negf %294 : vector<2x128xf32>
    %296 = math.exp %295 : vector<2x128xf32>
    %cst_75 = arith.constant 1.000000e+00 : f32
    %297 = vector.broadcast %cst_75 : f32 to vector<2x128xf32>
    %298 = arith.addf %297, %296 : vector<2x128xf32>
    %299 = arith.divf %297, %298 : vector<2x128xf32>
    %300 = vector.extract_strided_slice %282 {offsets = [0, 256], sizes = [2, 128], strides = [1, 1]} : vector<2x384xf32> to vector<2x128xf32>
    %301 = vector.extract_strided_slice %283 {offsets = [0, 256], sizes = [2, 128], strides = [1, 1]} : vector<2x384xf32> to vector<2x128xf32>
    %302 = arith.addf %301, %10 : vector<2x128xf32>
    %303 = arith.mulf %291, %302 : vector<2x128xf32>
    %304 = arith.addf %300, %303 : vector<2x128xf32>
    %305 = math.tanh %304 : vector<2x128xf32>
    %cst_76 = arith.constant 1.000000e+00 : f32
    %306 = vector.broadcast %cst_76 : f32 to vector<2x128xf32>
    %307 = arith.subf %306, %299 : vector<2x128xf32>
    %308 = arith.mulf %307, %305 : vector<2x128xf32>
    %309 = arith.mulf %299, %246 : vector<2x128xf32>
    %310 = arith.addf %308, %309 : vector<2x128xf32>
    %311 = vector.extract_strided_slice %3 {offsets = [6, 384], sizes = [2, 384], strides = [1, 1]} : vector<16x768xf32> to vector<2x384xf32>
    %cst_77 = arith.constant dense<0.000000e+00> : vector<2x384xf32>
    %312 = tpu.matmul %275, %7, %cst_77 {dimension_numbers = #tpu.dot_dimension_numbers<[1], [0], [0], [1], [0, 0, 1, 1], [], []>} : vector<2x128xf32>, vector<128x384xf32>, vector<2x384xf32> -> vector<2x384xf32>
    %313 = vector.extract_strided_slice %311 {offsets = [0, 0], sizes = [2, 128], strides = [1, 1]} : vector<2x384xf32> to vector<2x128xf32>
    %314 = vector.extract_strided_slice %312 {offsets = [0, 0], sizes = [2, 128], strides = [1, 1]} : vector<2x384xf32> to vector<2x128xf32>
    %315 = arith.addf %313, %314 : vector<2x128xf32>
    %316 = arith.negf %315 : vector<2x128xf32>
    %317 = math.exp %316 : vector<2x128xf32>
    %cst_78 = arith.constant 1.000000e+00 : f32
    %318 = vector.broadcast %cst_78 : f32 to vector<2x128xf32>
    %319 = arith.addf %318, %317 : vector<2x128xf32>
    %320 = arith.divf %318, %319 : vector<2x128xf32>
    %321 = vector.extract_strided_slice %311 {offsets = [0, 128], sizes = [2, 128], strides = [1, 1]} : vector<2x384xf32> to vector<2x128xf32>
    %322 = vector.extract_strided_slice %312 {offsets = [0, 128], sizes = [2, 128], strides = [1, 1]} : vector<2x384xf32> to vector<2x128xf32>
    %323 = arith.addf %321, %322 : vector<2x128xf32>
    %324 = arith.negf %323 : vector<2x128xf32>
    %325 = math.exp %324 : vector<2x128xf32>
    %cst_79 = arith.constant 1.000000e+00 : f32
    %326 = vector.broadcast %cst_79 : f32 to vector<2x128xf32>
    %327 = arith.addf %326, %325 : vector<2x128xf32>
    %328 = arith.divf %326, %327 : vector<2x128xf32>
    %329 = vector.extract_strided_slice %311 {offsets = [0, 256], sizes = [2, 128], strides = [1, 1]} : vector<2x384xf32> to vector<2x128xf32>
    %330 = vector.extract_strided_slice %312 {offsets = [0, 256], sizes = [2, 128], strides = [1, 1]} : vector<2x384xf32> to vector<2x128xf32>
    %331 = arith.addf %330, %13 : vector<2x128xf32>
    %332 = arith.mulf %320, %331 : vector<2x128xf32>
    %333 = arith.addf %329, %332 : vector<2x128xf32>
    %334 = math.tanh %333 : vector<2x128xf32>
    %cst_80 = arith.constant 1.000000e+00 : f32
    %335 = vector.broadcast %cst_80 : f32 to vector<2x128xf32>
    %336 = arith.subf %335, %328 : vector<2x128xf32>
    %337 = arith.mulf %336, %334 : vector<2x128xf32>
    %338 = arith.mulf %328, %275 : vector<2x128xf32>
    %339 = arith.addf %337, %338 : vector<2x128xf32>
    %c4_81 = arith.constant 4 : index
    %c0_82 = arith.constant 0 : index
    %c0_83 = arith.constant 0 : index
    %340 = vector.load %arg7[%c4_81, %c0_82, %c0_83] : memref<8x2x128xf32, #tpu.memory_space<vmem>>, vector<1x2x128xf32>
    %341 = vector.shape_cast %340 : vector<1x2x128xf32> to vector<2x128xf32>
    %342 = arith.mulf %310, %16 : vector<2x128xf32>
    %343 = arith.mulf %341, %19 : vector<2x128xf32>
    %344 = arith.addf %342, %343 : vector<2x128xf32>
    %cst_84 = arith.constant dense<0.000000e+00> : vector<2xf32>
    %345 = vector.multi_reduction <add>, %344, %cst_84 [1] : vector<2x128xf32> to vector<2xf32>
    %346 = vector.shape_cast %345 : vector<2xf32> to vector<2x1xf32>
    %347 = arith.maximumf %22, %346 : vector<2x1xf32>
    %348 = arith.subf %22, %347 : vector<2x1xf32>
    %349 = math.exp %348 : vector<2x1xf32>
    %350 = arith.subf %346, %347 : vector<2x1xf32>
    %351 = math.exp %350 : vector<2x1xf32>
    %352 = arith.mulf %349, %23 : vector<2x1xf32>
    %353 = arith.addf %352, %351 : vector<2x1xf32>
    %354 = vector.broadcast %349 : vector<2x1xf32> to vector<2x128xf32>
    %355 = arith.mulf %354, %24 : vector<2x128xf32>
    %356 = vector.broadcast %351 : vector<2x1xf32> to vector<2x128xf32>
    %357 = arith.mulf %356, %310 : vector<2x128xf32>
    %358 = arith.addf %355, %357 : vector<2x128xf32>
    %359 = vector.broadcast %349 : vector<2x1xf32> to vector<2x128xf32>
    %360 = arith.mulf %359, %25 : vector<2x128xf32>
    %361 = vector.broadcast %351 : vector<2x1xf32> to vector<2x128xf32>
    %362 = arith.mulf %361, %341 : vector<2x128xf32>
    %363 = arith.addf %360, %362 : vector<2x128xf32>
    %c3_85 = arith.constant 3 : index
    %c0_86 = arith.constant 0 : index
    %c0_87 = arith.constant 0 : index
    %364 = vector.load %arg7[%c3_85, %c0_86, %c0_87] : memref<8x2x128xf32, #tpu.memory_space<vmem>>, vector<1x2x128xf32>
    %365 = vector.shape_cast %364 : vector<1x2x128xf32> to vector<2x128xf32>
    %366 = arith.mulf %365, %16 : vector<2x128xf32>
    %367 = arith.mulf %339, %19 : vector<2x128xf32>
    %368 = arith.addf %366, %367 : vector<2x128xf32>
    %cst_88 = arith.constant dense<0.000000e+00> : vector<2xf32>
    %369 = vector.multi_reduction <add>, %368, %cst_88 [1] : vector<2x128xf32> to vector<2xf32>
    %370 = vector.shape_cast %369 : vector<2xf32> to vector<2x1xf32>
    %371 = arith.maximumf %347, %370 : vector<2x1xf32>
    %372 = arith.subf %347, %371 : vector<2x1xf32>
    %373 = math.exp %372 : vector<2x1xf32>
    %374 = arith.subf %370, %371 : vector<2x1xf32>
    %375 = math.exp %374 : vector<2x1xf32>
    %376 = arith.mulf %373, %353 : vector<2x1xf32>
    %377 = arith.addf %376, %375 : vector<2x1xf32>
    %378 = vector.broadcast %373 : vector<2x1xf32> to vector<2x128xf32>
    %379 = arith.mulf %378, %358 : vector<2x128xf32>
    %380 = vector.broadcast %375 : vector<2x1xf32> to vector<2x128xf32>
    %381 = arith.mulf %380, %365 : vector<2x128xf32>
    %382 = arith.addf %379, %381 : vector<2x128xf32>
    %383 = vector.broadcast %373 : vector<2x1xf32> to vector<2x128xf32>
    %384 = arith.mulf %383, %363 : vector<2x128xf32>
    %385 = vector.broadcast %375 : vector<2x1xf32> to vector<2x128xf32>
    %386 = arith.mulf %385, %339 : vector<2x128xf32>
    %387 = arith.addf %384, %386 : vector<2x128xf32>
    %388 = vector.extract_strided_slice %3 {offsets = [10, 0], sizes = [2, 384], strides = [1, 1]} : vector<16x768xf32> to vector<2x384xf32>
    %cst_89 = arith.constant dense<0.000000e+00> : vector<2x384xf32>
    %389 = tpu.matmul %310, %5, %cst_89 {dimension_numbers = #tpu.dot_dimension_numbers<[1], [0], [0], [1], [0, 0, 1, 1], [], []>} : vector<2x128xf32>, vector<128x384xf32>, vector<2x384xf32> -> vector<2x384xf32>
    %390 = vector.extract_strided_slice %388 {offsets = [0, 0], sizes = [2, 128], strides = [1, 1]} : vector<2x384xf32> to vector<2x128xf32>
    %391 = vector.extract_strided_slice %389 {offsets = [0, 0], sizes = [2, 128], strides = [1, 1]} : vector<2x384xf32> to vector<2x128xf32>
    %392 = arith.addf %390, %391 : vector<2x128xf32>
    %393 = arith.negf %392 : vector<2x128xf32>
    %394 = math.exp %393 : vector<2x128xf32>
    %cst_90 = arith.constant 1.000000e+00 : f32
    %395 = vector.broadcast %cst_90 : f32 to vector<2x128xf32>
    %396 = arith.addf %395, %394 : vector<2x128xf32>
    %397 = arith.divf %395, %396 : vector<2x128xf32>
    %398 = vector.extract_strided_slice %388 {offsets = [0, 128], sizes = [2, 128], strides = [1, 1]} : vector<2x384xf32> to vector<2x128xf32>
    %399 = vector.extract_strided_slice %389 {offsets = [0, 128], sizes = [2, 128], strides = [1, 1]} : vector<2x384xf32> to vector<2x128xf32>
    %400 = arith.addf %398, %399 : vector<2x128xf32>
    %401 = arith.negf %400 : vector<2x128xf32>
    %402 = math.exp %401 : vector<2x128xf32>
    %cst_91 = arith.constant 1.000000e+00 : f32
    %403 = vector.broadcast %cst_91 : f32 to vector<2x128xf32>
    %404 = arith.addf %403, %402 : vector<2x128xf32>
    %405 = arith.divf %403, %404 : vector<2x128xf32>
    %406 = vector.extract_strided_slice %388 {offsets = [0, 256], sizes = [2, 128], strides = [1, 1]} : vector<2x384xf32> to vector<2x128xf32>
    %407 = vector.extract_strided_slice %389 {offsets = [0, 256], sizes = [2, 128], strides = [1, 1]} : vector<2x384xf32> to vector<2x128xf32>
    %408 = arith.addf %407, %10 : vector<2x128xf32>
    %409 = arith.mulf %397, %408 : vector<2x128xf32>
    %410 = arith.addf %406, %409 : vector<2x128xf32>
    %411 = math.tanh %410 : vector<2x128xf32>
    %cst_92 = arith.constant 1.000000e+00 : f32
    %412 = vector.broadcast %cst_92 : f32 to vector<2x128xf32>
    %413 = arith.subf %412, %405 : vector<2x128xf32>
    %414 = arith.mulf %413, %411 : vector<2x128xf32>
    %415 = arith.mulf %405, %310 : vector<2x128xf32>
    %416 = arith.addf %414, %415 : vector<2x128xf32>
    %417 = vector.extract_strided_slice %3 {offsets = [4, 384], sizes = [2, 384], strides = [1, 1]} : vector<16x768xf32> to vector<2x384xf32>
    %cst_93 = arith.constant dense<0.000000e+00> : vector<2x384xf32>
    %418 = tpu.matmul %339, %7, %cst_93 {dimension_numbers = #tpu.dot_dimension_numbers<[1], [0], [0], [1], [0, 0, 1, 1], [], []>} : vector<2x128xf32>, vector<128x384xf32>, vector<2x384xf32> -> vector<2x384xf32>
    %419 = vector.extract_strided_slice %417 {offsets = [0, 0], sizes = [2, 128], strides = [1, 1]} : vector<2x384xf32> to vector<2x128xf32>
    %420 = vector.extract_strided_slice %418 {offsets = [0, 0], sizes = [2, 128], strides = [1, 1]} : vector<2x384xf32> to vector<2x128xf32>
    %421 = arith.addf %419, %420 : vector<2x128xf32>
    %422 = arith.negf %421 : vector<2x128xf32>
    %423 = math.exp %422 : vector<2x128xf32>
    %cst_94 = arith.constant 1.000000e+00 : f32
    %424 = vector.broadcast %cst_94 : f32 to vector<2x128xf32>
    %425 = arith.addf %424, %423 : vector<2x128xf32>
    %426 = arith.divf %424, %425 : vector<2x128xf32>
    %427 = vector.extract_strided_slice %417 {offsets = [0, 128], sizes = [2, 128], strides = [1, 1]} : vector<2x384xf32> to vector<2x128xf32>
    %428 = vector.extract_strided_slice %418 {offsets = [0, 128], sizes = [2, 128], strides = [1, 1]} : vector<2x384xf32> to vector<2x128xf32>
    %429 = arith.addf %427, %428 : vector<2x128xf32>
    %430 = arith.negf %429 : vector<2x128xf32>
    %431 = math.exp %430 : vector<2x128xf32>
    %cst_95 = arith.constant 1.000000e+00 : f32
    %432 = vector.broadcast %cst_95 : f32 to vector<2x128xf32>
    %433 = arith.addf %432, %431 : vector<2x128xf32>
    %434 = arith.divf %432, %433 : vector<2x128xf32>
    %435 = vector.extract_strided_slice %417 {offsets = [0, 256], sizes = [2, 128], strides = [1, 1]} : vector<2x384xf32> to vector<2x128xf32>
    %436 = vector.extract_strided_slice %418 {offsets = [0, 256], sizes = [2, 128], strides = [1, 1]} : vector<2x384xf32> to vector<2x128xf32>
    %437 = arith.addf %436, %13 : vector<2x128xf32>
    %438 = arith.mulf %426, %437 : vector<2x128xf32>
    %439 = arith.addf %435, %438 : vector<2x128xf32>
    %440 = math.tanh %439 : vector<2x128xf32>
    %cst_96 = arith.constant 1.000000e+00 : f32
    %441 = vector.broadcast %cst_96 : f32 to vector<2x128xf32>
    %442 = arith.subf %441, %434 : vector<2x128xf32>
    %443 = arith.mulf %442, %440 : vector<2x128xf32>
    %444 = arith.mulf %434, %339 : vector<2x128xf32>
    %445 = arith.addf %443, %444 : vector<2x128xf32>
    %c5_97 = arith.constant 5 : index
    %c0_98 = arith.constant 0 : index
    %c0_99 = arith.constant 0 : index
    %446 = vector.load %arg7[%c5_97, %c0_98, %c0_99] : memref<8x2x128xf32, #tpu.memory_space<vmem>>, vector<1x2x128xf32>
    %447 = vector.shape_cast %446 : vector<1x2x128xf32> to vector<2x128xf32>
    %448 = arith.mulf %416, %16 : vector<2x128xf32>
    %449 = arith.mulf %447, %19 : vector<2x128xf32>
    %450 = arith.addf %448, %449 : vector<2x128xf32>
    %cst_100 = arith.constant dense<0.000000e+00> : vector<2xf32>
    %451 = vector.multi_reduction <add>, %450, %cst_100 [1] : vector<2x128xf32> to vector<2xf32>
    %452 = vector.shape_cast %451 : vector<2xf32> to vector<2x1xf32>
    %453 = arith.maximumf %371, %452 : vector<2x1xf32>
    %454 = arith.subf %371, %453 : vector<2x1xf32>
    %455 = math.exp %454 : vector<2x1xf32>
    %456 = arith.subf %452, %453 : vector<2x1xf32>
    %457 = math.exp %456 : vector<2x1xf32>
    %458 = arith.mulf %455, %377 : vector<2x1xf32>
    %459 = arith.addf %458, %457 : vector<2x1xf32>
    %460 = vector.broadcast %455 : vector<2x1xf32> to vector<2x128xf32>
    %461 = arith.mulf %460, %382 : vector<2x128xf32>
    %462 = vector.broadcast %457 : vector<2x1xf32> to vector<2x128xf32>
    %463 = arith.mulf %462, %416 : vector<2x128xf32>
    %464 = arith.addf %461, %463 : vector<2x128xf32>
    %465 = vector.broadcast %455 : vector<2x1xf32> to vector<2x128xf32>
    %466 = arith.mulf %465, %387 : vector<2x128xf32>
    %467 = vector.broadcast %457 : vector<2x1xf32> to vector<2x128xf32>
    %468 = arith.mulf %467, %447 : vector<2x128xf32>
    %469 = arith.addf %466, %468 : vector<2x128xf32>
    %c2_101 = arith.constant 2 : index
    %c0_102 = arith.constant 0 : index
    %c0_103 = arith.constant 0 : index
    %470 = vector.load %arg7[%c2_101, %c0_102, %c0_103] : memref<8x2x128xf32, #tpu.memory_space<vmem>>, vector<1x2x128xf32>
    %471 = vector.shape_cast %470 : vector<1x2x128xf32> to vector<2x128xf32>
    %472 = arith.mulf %471, %16 : vector<2x128xf32>
    %473 = arith.mulf %445, %19 : vector<2x128xf32>
    %474 = arith.addf %472, %473 : vector<2x128xf32>
    %cst_104 = arith.constant dense<0.000000e+00> : vector<2xf32>
    %475 = vector.multi_reduction <add>, %474, %cst_104 [1] : vector<2x128xf32> to vector<2xf32>
    %476 = vector.shape_cast %475 : vector<2xf32> to vector<2x1xf32>
    %477 = arith.maximumf %453, %476 : vector<2x1xf32>
    %478 = arith.subf %453, %477 : vector<2x1xf32>
    %479 = math.exp %478 : vector<2x1xf32>
    %480 = arith.subf %476, %477 : vector<2x1xf32>
    %481 = math.exp %480 : vector<2x1xf32>
    %482 = arith.mulf %479, %459 : vector<2x1xf32>
    %483 = arith.addf %482, %481 : vector<2x1xf32>
    %484 = vector.broadcast %479 : vector<2x1xf32> to vector<2x128xf32>
    %485 = arith.mulf %484, %464 : vector<2x128xf32>
    %486 = vector.broadcast %481 : vector<2x1xf32> to vector<2x128xf32>
    %487 = arith.mulf %486, %471 : vector<2x128xf32>
    %488 = arith.addf %485, %487 : vector<2x128xf32>
    %489 = vector.broadcast %479 : vector<2x1xf32> to vector<2x128xf32>
    %490 = arith.mulf %489, %469 : vector<2x128xf32>
    %491 = vector.broadcast %481 : vector<2x1xf32> to vector<2x128xf32>
    %492 = arith.mulf %491, %445 : vector<2x128xf32>
    %493 = arith.addf %490, %492 : vector<2x128xf32>
    %494 = vector.extract_strided_slice %3 {offsets = [12, 0], sizes = [2, 384], strides = [1, 1]} : vector<16x768xf32> to vector<2x384xf32>
    %cst_105 = arith.constant dense<0.000000e+00> : vector<2x384xf32>
    %495 = tpu.matmul %416, %5, %cst_105 {dimension_numbers = #tpu.dot_dimension_numbers<[1], [0], [0], [1], [0, 0, 1, 1], [], []>} : vector<2x128xf32>, vector<128x384xf32>, vector<2x384xf32> -> vector<2x384xf32>
    %496 = vector.extract_strided_slice %494 {offsets = [0, 0], sizes = [2, 128], strides = [1, 1]} : vector<2x384xf32> to vector<2x128xf32>
    %497 = vector.extract_strided_slice %495 {offsets = [0, 0], sizes = [2, 128], strides = [1, 1]} : vector<2x384xf32> to vector<2x128xf32>
    %498 = arith.addf %496, %497 : vector<2x128xf32>
    %499 = arith.negf %498 : vector<2x128xf32>
    %500 = math.exp %499 : vector<2x128xf32>
    %cst_106 = arith.constant 1.000000e+00 : f32
    %501 = vector.broadcast %cst_106 : f32 to vector<2x128xf32>
    %502 = arith.addf %501, %500 : vector<2x128xf32>
    %503 = arith.divf %501, %502 : vector<2x128xf32>
    %504 = vector.extract_strided_slice %494 {offsets = [0, 128], sizes = [2, 128], strides = [1, 1]} : vector<2x384xf32> to vector<2x128xf32>
    %505 = vector.extract_strided_slice %495 {offsets = [0, 128], sizes = [2, 128], strides = [1, 1]} : vector<2x384xf32> to vector<2x128xf32>
    %506 = arith.addf %504, %505 : vector<2x128xf32>
    %507 = arith.negf %506 : vector<2x128xf32>
    %508 = math.exp %507 : vector<2x128xf32>
    %cst_107 = arith.constant 1.000000e+00 : f32
    %509 = vector.broadcast %cst_107 : f32 to vector<2x128xf32>
    %510 = arith.addf %509, %508 : vector<2x128xf32>
    %511 = arith.divf %509, %510 : vector<2x128xf32>
    %512 = vector.extract_strided_slice %494 {offsets = [0, 256], sizes = [2, 128], strides = [1, 1]} : vector<2x384xf32> to vector<2x128xf32>
    %513 = vector.extract_strided_slice %495 {offsets = [0, 256], sizes = [2, 128], strides = [1, 1]} : vector<2x384xf32> to vector<2x128xf32>
    %514 = arith.addf %513, %10 : vector<2x128xf32>
    %515 = arith.mulf %503, %514 : vector<2x128xf32>
    %516 = arith.addf %512, %515 : vector<2x128xf32>
    %517 = math.tanh %516 : vector<2x128xf32>
    %cst_108 = arith.constant 1.000000e+00 : f32
    %518 = vector.broadcast %cst_108 : f32 to vector<2x128xf32>
    %519 = arith.subf %518, %511 : vector<2x128xf32>
    %520 = arith.mulf %519, %517 : vector<2x128xf32>
    %521 = arith.mulf %511, %416 : vector<2x128xf32>
    %522 = arith.addf %520, %521 : vector<2x128xf32>
    %523 = vector.extract_strided_slice %3 {offsets = [2, 384], sizes = [2, 384], strides = [1, 1]} : vector<16x768xf32> to vector<2x384xf32>
    %cst_109 = arith.constant dense<0.000000e+00> : vector<2x384xf32>
    %524 = tpu.matmul %445, %7, %cst_109 {dimension_numbers = #tpu.dot_dimension_numbers<[1], [0], [0], [1], [0, 0, 1, 1], [], []>} : vector<2x128xf32>, vector<128x384xf32>, vector<2x384xf32> -> vector<2x384xf32>
    %525 = vector.extract_strided_slice %523 {offsets = [0, 0], sizes = [2, 128], strides = [1, 1]} : vector<2x384xf32> to vector<2x128xf32>
    %526 = vector.extract_strided_slice %524 {offsets = [0, 0], sizes = [2, 128], strides = [1, 1]} : vector<2x384xf32> to vector<2x128xf32>
    %527 = arith.addf %525, %526 : vector<2x128xf32>
    %528 = arith.negf %527 : vector<2x128xf32>
    %529 = math.exp %528 : vector<2x128xf32>
    %cst_110 = arith.constant 1.000000e+00 : f32
    %530 = vector.broadcast %cst_110 : f32 to vector<2x128xf32>
    %531 = arith.addf %530, %529 : vector<2x128xf32>
    %532 = arith.divf %530, %531 : vector<2x128xf32>
    %533 = vector.extract_strided_slice %523 {offsets = [0, 128], sizes = [2, 128], strides = [1, 1]} : vector<2x384xf32> to vector<2x128xf32>
    %534 = vector.extract_strided_slice %524 {offsets = [0, 128], sizes = [2, 128], strides = [1, 1]} : vector<2x384xf32> to vector<2x128xf32>
    %535 = arith.addf %533, %534 : vector<2x128xf32>
    %536 = arith.negf %535 : vector<2x128xf32>
    %537 = math.exp %536 : vector<2x128xf32>
    %cst_111 = arith.constant 1.000000e+00 : f32
    %538 = vector.broadcast %cst_111 : f32 to vector<2x128xf32>
    %539 = arith.addf %538, %537 : vector<2x128xf32>
    %540 = arith.divf %538, %539 : vector<2x128xf32>
    %541 = vector.extract_strided_slice %523 {offsets = [0, 256], sizes = [2, 128], strides = [1, 1]} : vector<2x384xf32> to vector<2x128xf32>
    %542 = vector.extract_strided_slice %524 {offsets = [0, 256], sizes = [2, 128], strides = [1, 1]} : vector<2x384xf32> to vector<2x128xf32>
    %543 = arith.addf %542, %13 : vector<2x128xf32>
    %544 = arith.mulf %532, %543 : vector<2x128xf32>
    %545 = arith.addf %541, %544 : vector<2x128xf32>
    %546 = math.tanh %545 : vector<2x128xf32>
    %cst_112 = arith.constant 1.000000e+00 : f32
    %547 = vector.broadcast %cst_112 : f32 to vector<2x128xf32>
    %548 = arith.subf %547, %540 : vector<2x128xf32>
    %549 = arith.mulf %548, %546 : vector<2x128xf32>
    %550 = arith.mulf %540, %445 : vector<2x128xf32>
    %551 = arith.addf %549, %550 : vector<2x128xf32>
    %c6_113 = arith.constant 6 : index
    %c0_114 = arith.constant 0 : index
    %c0_115 = arith.constant 0 : index
    %552 = vector.load %arg7[%c6_113, %c0_114, %c0_115] : memref<8x2x128xf32, #tpu.memory_space<vmem>>, vector<1x2x128xf32>
    %553 = vector.shape_cast %552 : vector<1x2x128xf32> to vector<2x128xf32>
    %554 = arith.mulf %522, %16 : vector<2x128xf32>
    %555 = arith.mulf %553, %19 : vector<2x128xf32>
    %556 = arith.addf %554, %555 : vector<2x128xf32>
    %cst_116 = arith.constant dense<0.000000e+00> : vector<2xf32>
    %557 = vector.multi_reduction <add>, %556, %cst_116 [1] : vector<2x128xf32> to vector<2xf32>
    %558 = vector.shape_cast %557 : vector<2xf32> to vector<2x1xf32>
    %559 = arith.maximumf %477, %558 : vector<2x1xf32>
    %560 = arith.subf %477, %559 : vector<2x1xf32>
    %561 = math.exp %560 : vector<2x1xf32>
    %562 = arith.subf %558, %559 : vector<2x1xf32>
    %563 = math.exp %562 : vector<2x1xf32>
    %564 = arith.mulf %561, %483 : vector<2x1xf32>
    %565 = arith.addf %564, %563 : vector<2x1xf32>
    %566 = vector.broadcast %561 : vector<2x1xf32> to vector<2x128xf32>
    %567 = arith.mulf %566, %488 : vector<2x128xf32>
    %568 = vector.broadcast %563 : vector<2x1xf32> to vector<2x128xf32>
    %569 = arith.mulf %568, %522 : vector<2x128xf32>
    %570 = arith.addf %567, %569 : vector<2x128xf32>
    %571 = vector.broadcast %561 : vector<2x1xf32> to vector<2x128xf32>
    %572 = arith.mulf %571, %493 : vector<2x128xf32>
    %573 = vector.broadcast %563 : vector<2x1xf32> to vector<2x128xf32>
    %574 = arith.mulf %573, %553 : vector<2x128xf32>
    %575 = arith.addf %572, %574 : vector<2x128xf32>
    %c1_117 = arith.constant 1 : index
    %c0_118 = arith.constant 0 : index
    %c0_119 = arith.constant 0 : index
    %576 = vector.load %arg7[%c1_117, %c0_118, %c0_119] : memref<8x2x128xf32, #tpu.memory_space<vmem>>, vector<1x2x128xf32>
    %577 = vector.shape_cast %576 : vector<1x2x128xf32> to vector<2x128xf32>
    %578 = arith.mulf %577, %16 : vector<2x128xf32>
    %579 = arith.mulf %551, %19 : vector<2x128xf32>
    %580 = arith.addf %578, %579 : vector<2x128xf32>
    %cst_120 = arith.constant dense<0.000000e+00> : vector<2xf32>
    %581 = vector.multi_reduction <add>, %580, %cst_120 [1] : vector<2x128xf32> to vector<2xf32>
    %582 = vector.shape_cast %581 : vector<2xf32> to vector<2x1xf32>
    %583 = arith.maximumf %559, %582 : vector<2x1xf32>
    %584 = arith.subf %559, %583 : vector<2x1xf32>
    %585 = math.exp %584 : vector<2x1xf32>
    %586 = arith.subf %582, %583 : vector<2x1xf32>
    %587 = math.exp %586 : vector<2x1xf32>
    %588 = arith.mulf %585, %565 : vector<2x1xf32>
    %589 = arith.addf %588, %587 : vector<2x1xf32>
    %590 = vector.broadcast %585 : vector<2x1xf32> to vector<2x128xf32>
    %591 = arith.mulf %590, %570 : vector<2x128xf32>
    %592 = vector.broadcast %587 : vector<2x1xf32> to vector<2x128xf32>
    %593 = arith.mulf %592, %577 : vector<2x128xf32>
    %594 = arith.addf %591, %593 : vector<2x128xf32>
    %595 = vector.broadcast %585 : vector<2x1xf32> to vector<2x128xf32>
    %596 = arith.mulf %595, %575 : vector<2x128xf32>
    %597 = vector.broadcast %587 : vector<2x1xf32> to vector<2x128xf32>
    %598 = arith.mulf %597, %551 : vector<2x128xf32>
    %599 = arith.addf %596, %598 : vector<2x128xf32>
    %600 = vector.extract_strided_slice %3 {offsets = [14, 0], sizes = [2, 384], strides = [1, 1]} : vector<16x768xf32> to vector<2x384xf32>
    %cst_121 = arith.constant dense<0.000000e+00> : vector<2x384xf32>
    %601 = tpu.matmul %522, %5, %cst_121 {dimension_numbers = #tpu.dot_dimension_numbers<[1], [0], [0], [1], [0, 0, 1, 1], [], []>} : vector<2x128xf32>, vector<128x384xf32>, vector<2x384xf32> -> vector<2x384xf32>
    %602 = vector.extract_strided_slice %600 {offsets = [0, 0], sizes = [2, 128], strides = [1, 1]} : vector<2x384xf32> to vector<2x128xf32>
    %603 = vector.extract_strided_slice %601 {offsets = [0, 0], sizes = [2, 128], strides = [1, 1]} : vector<2x384xf32> to vector<2x128xf32>
    %604 = arith.addf %602, %603 : vector<2x128xf32>
    %605 = arith.negf %604 : vector<2x128xf32>
    %606 = math.exp %605 : vector<2x128xf32>
    %cst_122 = arith.constant 1.000000e+00 : f32
    %607 = vector.broadcast %cst_122 : f32 to vector<2x128xf32>
    %608 = arith.addf %607, %606 : vector<2x128xf32>
    %609 = arith.divf %607, %608 : vector<2x128xf32>
    %610 = vector.extract_strided_slice %600 {offsets = [0, 128], sizes = [2, 128], strides = [1, 1]} : vector<2x384xf32> to vector<2x128xf32>
    %611 = vector.extract_strided_slice %601 {offsets = [0, 128], sizes = [2, 128], strides = [1, 1]} : vector<2x384xf32> to vector<2x128xf32>
    %612 = arith.addf %610, %611 : vector<2x128xf32>
    %613 = arith.negf %612 : vector<2x128xf32>
    %614 = math.exp %613 : vector<2x128xf32>
    %cst_123 = arith.constant 1.000000e+00 : f32
    %615 = vector.broadcast %cst_123 : f32 to vector<2x128xf32>
    %616 = arith.addf %615, %614 : vector<2x128xf32>
    %617 = arith.divf %615, %616 : vector<2x128xf32>
    %618 = vector.extract_strided_slice %600 {offsets = [0, 256], sizes = [2, 128], strides = [1, 1]} : vector<2x384xf32> to vector<2x128xf32>
    %619 = vector.extract_strided_slice %601 {offsets = [0, 256], sizes = [2, 128], strides = [1, 1]} : vector<2x384xf32> to vector<2x128xf32>
    %620 = arith.addf %619, %10 : vector<2x128xf32>
    %621 = arith.mulf %609, %620 : vector<2x128xf32>
    %622 = arith.addf %618, %621 : vector<2x128xf32>
    %623 = math.tanh %622 : vector<2x128xf32>
    %cst_124 = arith.constant 1.000000e+00 : f32
    %624 = vector.broadcast %cst_124 : f32 to vector<2x128xf32>
    %625 = arith.subf %624, %617 : vector<2x128xf32>
    %626 = arith.mulf %625, %623 : vector<2x128xf32>
    %627 = arith.mulf %617, %522 : vector<2x128xf32>
    %628 = arith.addf %626, %627 : vector<2x128xf32>
    %629 = vector.extract_strided_slice %3 {offsets = [0, 384], sizes = [2, 384], strides = [1, 1]} : vector<16x768xf32> to vector<2x384xf32>
    %cst_125 = arith.constant dense<0.000000e+00> : vector<2x384xf32>
    %630 = tpu.matmul %551, %7, %cst_125 {dimension_numbers = #tpu.dot_dimension_numbers<[1], [0], [0], [1], [0, 0, 1, 1], [], []>} : vector<2x128xf32>, vector<128x384xf32>, vector<2x384xf32> -> vector<2x384xf32>
    %631 = vector.extract_strided_slice %629 {offsets = [0, 0], sizes = [2, 128], strides = [1, 1]} : vector<2x384xf32> to vector<2x128xf32>
    %632 = vector.extract_strided_slice %630 {offsets = [0, 0], sizes = [2, 128], strides = [1, 1]} : vector<2x384xf32> to vector<2x128xf32>
    %633 = arith.addf %631, %632 : vector<2x128xf32>
    %634 = arith.negf %633 : vector<2x128xf32>
    %635 = math.exp %634 : vector<2x128xf32>
    %cst_126 = arith.constant 1.000000e+00 : f32
    %636 = vector.broadcast %cst_126 : f32 to vector<2x128xf32>
    %637 = arith.addf %636, %635 : vector<2x128xf32>
    %638 = arith.divf %636, %637 : vector<2x128xf32>
    %639 = vector.extract_strided_slice %629 {offsets = [0, 128], sizes = [2, 128], strides = [1, 1]} : vector<2x384xf32> to vector<2x128xf32>
    %640 = vector.extract_strided_slice %630 {offsets = [0, 128], sizes = [2, 128], strides = [1, 1]} : vector<2x384xf32> to vector<2x128xf32>
    %641 = arith.addf %639, %640 : vector<2x128xf32>
    %642 = arith.negf %641 : vector<2x128xf32>
    %643 = math.exp %642 : vector<2x128xf32>
    %cst_127 = arith.constant 1.000000e+00 : f32
    %644 = vector.broadcast %cst_127 : f32 to vector<2x128xf32>
    %645 = arith.addf %644, %643 : vector<2x128xf32>
    %646 = arith.divf %644, %645 : vector<2x128xf32>
    %647 = vector.extract_strided_slice %629 {offsets = [0, 256], sizes = [2, 128], strides = [1, 1]} : vector<2x384xf32> to vector<2x128xf32>
    %648 = vector.extract_strided_slice %630 {offsets = [0, 256], sizes = [2, 128], strides = [1, 1]} : vector<2x384xf32> to vector<2x128xf32>
    %649 = arith.addf %648, %13 : vector<2x128xf32>
    %650 = arith.mulf %638, %649 : vector<2x128xf32>
    %651 = arith.addf %647, %650 : vector<2x128xf32>
    %652 = math.tanh %651 : vector<2x128xf32>
    %cst_128 = arith.constant 1.000000e+00 : f32
    %653 = vector.broadcast %cst_128 : f32 to vector<2x128xf32>
    %654 = arith.subf %653, %646 : vector<2x128xf32>
    %655 = arith.mulf %654, %652 : vector<2x128xf32>
    %656 = arith.mulf %646, %551 : vector<2x128xf32>
    %657 = arith.addf %655, %656 : vector<2x128xf32>
    %c7_129 = arith.constant 7 : index
    %c0_130 = arith.constant 0 : index
    %c0_131 = arith.constant 0 : index
    %658 = vector.load %arg7[%c7_129, %c0_130, %c0_131] : memref<8x2x128xf32, #tpu.memory_space<vmem>>, vector<1x2x128xf32>
    %659 = vector.shape_cast %658 : vector<1x2x128xf32> to vector<2x128xf32>
    %660 = arith.mulf %628, %16 : vector<2x128xf32>
    %661 = arith.mulf %659, %19 : vector<2x128xf32>
    %662 = arith.addf %660, %661 : vector<2x128xf32>
    %cst_132 = arith.constant dense<0.000000e+00> : vector<2xf32>
    %663 = vector.multi_reduction <add>, %662, %cst_132 [1] : vector<2x128xf32> to vector<2xf32>
    %664 = vector.shape_cast %663 : vector<2xf32> to vector<2x1xf32>
    %665 = arith.maximumf %583, %664 : vector<2x1xf32>
    %666 = arith.subf %583, %665 : vector<2x1xf32>
    %667 = math.exp %666 : vector<2x1xf32>
    %668 = arith.subf %664, %665 : vector<2x1xf32>
    %669 = math.exp %668 : vector<2x1xf32>
    %670 = arith.mulf %667, %589 : vector<2x1xf32>
    %671 = arith.addf %670, %669 : vector<2x1xf32>
    %672 = vector.broadcast %667 : vector<2x1xf32> to vector<2x128xf32>
    %673 = arith.mulf %672, %594 : vector<2x128xf32>
    %674 = vector.broadcast %669 : vector<2x1xf32> to vector<2x128xf32>
    %675 = arith.mulf %674, %628 : vector<2x128xf32>
    %676 = arith.addf %673, %675 : vector<2x128xf32>
    %677 = vector.broadcast %667 : vector<2x1xf32> to vector<2x128xf32>
    %678 = arith.mulf %677, %599 : vector<2x128xf32>
    %679 = vector.broadcast %669 : vector<2x1xf32> to vector<2x128xf32>
    %680 = arith.mulf %679, %659 : vector<2x128xf32>
    %681 = arith.addf %678, %680 : vector<2x128xf32>
    %c0_133 = arith.constant 0 : index
    %c0_134 = arith.constant 0 : index
    %c0_135 = arith.constant 0 : index
    %682 = vector.load %arg7[%c0_133, %c0_134, %c0_135] : memref<8x2x128xf32, #tpu.memory_space<vmem>>, vector<1x2x128xf32>
    %683 = vector.shape_cast %682 : vector<1x2x128xf32> to vector<2x128xf32>
    %684 = arith.mulf %683, %16 : vector<2x128xf32>
    %685 = arith.mulf %657, %19 : vector<2x128xf32>
    %686 = arith.addf %684, %685 : vector<2x128xf32>
    %cst_136 = arith.constant dense<0.000000e+00> : vector<2xf32>
    %687 = vector.multi_reduction <add>, %686, %cst_136 [1] : vector<2x128xf32> to vector<2xf32>
    %688 = vector.shape_cast %687 : vector<2xf32> to vector<2x1xf32>
    %689 = arith.maximumf %665, %688 : vector<2x1xf32>
    %690 = arith.subf %665, %689 : vector<2x1xf32>
    %691 = math.exp %690 : vector<2x1xf32>
    %692 = arith.subf %688, %689 : vector<2x1xf32>
    %693 = math.exp %692 : vector<2x1xf32>
    %694 = arith.mulf %691, %671 : vector<2x1xf32>
    %695 = arith.addf %694, %693 : vector<2x1xf32>
    %696 = vector.broadcast %691 : vector<2x1xf32> to vector<2x128xf32>
    %697 = arith.mulf %696, %676 : vector<2x128xf32>
    %698 = vector.broadcast %693 : vector<2x1xf32> to vector<2x128xf32>
    %699 = arith.mulf %698, %683 : vector<2x128xf32>
    %700 = arith.addf %697, %699 : vector<2x128xf32>
    %701 = vector.broadcast %691 : vector<2x1xf32> to vector<2x128xf32>
    %702 = arith.mulf %701, %681 : vector<2x128xf32>
    %703 = vector.broadcast %693 : vector<2x1xf32> to vector<2x128xf32>
    %704 = arith.mulf %703, %657 : vector<2x128xf32>
    %705 = arith.addf %702, %704 : vector<2x128xf32>
    %cst_137 = arith.constant 1.000000e+00 : f32
    %706 = vector.broadcast %cst_137 : f32 to vector<2x1xf32>
    %707 = arith.divf %706, %695 : vector<2x1xf32>
    %708 = vector.broadcast %707 : vector<2x1xf32> to vector<2x128xf32>
    %709 = arith.mulf %700, %708 : vector<2x128xf32>
    %c0_138 = arith.constant 0 : index
    %c0_139 = arith.constant 0 : index
    %c0_140 = arith.constant 0 : index
    %710 = vector.load %arg6[%c0_138, %c0_139, %c0_140] : memref<1x2x256xf32, #tpu.memory_space<vmem>>, vector<1x2x128xf32>
    %711 = vector.shape_cast %710 : vector<1x2x128xf32> to vector<2x128xf32>
    %712 = vector.shape_cast %709 : vector<2x128xf32> to vector<1x2x128xf32>
    tpu.vector_store %arg6[%c0_138, %c0_139, %c0_140], %712 {strides = array<i32>} : memref<1x2x256xf32, #tpu.memory_space<vmem>>, vector<1x2x128xf32>,
    %713 = vector.broadcast %707 : vector<2x1xf32> to vector<2x128xf32>
    %714 = arith.mulf %705, %713 : vector<2x128xf32>
    %c0_141 = arith.constant 0 : index
    %c0_142 = arith.constant 0 : index
    %c128 = arith.constant 128 : index
    %715 = vector.load %arg6[%c0_141, %c0_142, %c128] : memref<1x2x256xf32, #tpu.memory_space<vmem>>, vector<1x2x128xf32>
    %716 = vector.shape_cast %715 : vector<1x2x128xf32> to vector<2x128xf32>
    %717 = vector.shape_cast %714 : vector<2x128xf32> to vector<1x2x128xf32>
    tpu.vector_store %arg6[%c0_141, %c0_142, %c128], %717 {strides = array<i32>} : memref<1x2x256xf32, #tpu.memory_space<vmem>>, vector<1x2x128xf32>,
    return
  }
  func.func @transform_0(%arg0: i32) -> (i32, i32, i32) {
    %c0_i32 = arith.constant 0 : i32
    %c0_i32_0 = arith.constant 0 : i32
    %c0_i32_1 = arith.constant 0 : i32
    return %arg0, %c0_i32, %c0_i32_0 : i32, i32, i32
  }
  func.func @transform_1(%arg0: i32) -> (i32, i32) {
    %c0_i32 = arith.constant 0 : i32
    %c0_i32_0 = arith.constant 0 : i32
    %c0_i32_1 = arith.constant 0 : i32
    return %c0_i32, %c0_i32_0 : i32, i32
  }
  func.func @transform_2(%arg0: i32) -> (i32, i32, i32) {
    %c0_i32 = arith.constant 0 : i32
    %c0_i32_0 = arith.constant 0 : i32
    %c0_i32_1 = arith.constant 0 : i32
    %c0_i32_2 = arith.constant 0 : i32
    return %c0_i32, %c0_i32_0, %c0_i32_1 : i32, i32, i32
  }
  func.func @transform_3(%arg0: i32) -> (i32, i32) {
    %c0_i32 = arith.constant 0 : i32
    %c0_i32_0 = arith.constant 0 : i32
    %c0_i32_1 = arith.constant 0 : i32
    return %c0_i32, %c0_i32_0 : i32, i32
  }
  func.func @transform_4(%arg0: i32) -> (i32, i32) {
    %c0_i32 = arith.constant 0 : i32
    %c0_i32_0 = arith.constant 0 : i32
    %c0_i32_1 = arith.constant 0 : i32
    return %c0_i32, %c0_i32_0 : i32, i32
  }
  func.func @transform_5(%arg0: i32) -> (i32, i32, i32) {
    %c0_i32 = arith.constant 0 : i32
    %c0_i32_0 = arith.constant 0 : i32
    %c0_i32_1 = arith.constant 0 : i32
    return %arg0, %c0_i32, %c0_i32_0 : i32, i32, i32
  }
}

</mosaic_0001>

<llo_original>
// kernel: tpu_custom_call.1
$region0: #{tpu_custom_call.1}
  #allocation0 [shape = 'u32[]', space=smem, size = 0x4, offset = 0x4, fixed_abs, tag = 'smem constant byte address 0x4 - core index']
  #allocation1 [shape = 'u32[144,128]{1,0:T(1,128)}', space=vmem, size = 0x12000, scoped, tag = 'internal scratch']
  #allocation2 [shape = 'f32[8,2,128]{2,1,0:T(2,128)}', space=vmem, size = 0x2000, scoped, tag = 'scratch operand']
  %s0 = inlined_call_operand.hbm [shape: f32[1,16,128], index: 0, kind: input, shape index: {}]
  %s1 = inlined_call_operand.hbm [shape: f32[128,768], index: 1, kind: input, shape index: {}]
  %s2 = inlined_call_operand.hbm [shape: f32[2,128,384], index: 2, kind: input, shape index: {}]
  %s3 = inlined_call_operand.vmem [shape: f32[2,128], index: 3, kind: input, shape index: {}]
  %s4 = inlined_call_operand.vmem [shape: f32[2,128], index: 4, kind: input, shape index: {}]
  %s5 = inlined_call_operand.hbm [shape: f32[1,2,256], index: 5, kind: output, shape index: {}]
  %s6 = sld [smem:[#allocation0]]
  $region42: #{tpu_custom_call.1} parent=0
    _
  %s8 = ssub.s32 1, %s6
  %s9 = scalar_select 0, %s8, %s6
  $region1: #{tpu_custom_call.1} parent=0
    #allocation3 [shape = 'u8[8192]{0}', space=vmem, size = 0x2000, scoped, tag = 'input window, operand 0, single buffered']
    #allocation4 [shape = 's32[1]{0}', space=sflag, size = 0x4, scoped, tag = 'scoped memory for tpu_custom_call.1']
    #allocation5 [shape = 's32[1]{0}', space=sflag, size = 0x4, scoped, tag = 'scoped memory for tpu_custom_call.1']
    #allocation6 [shape = 'u8[393216]{0}', space=vmem, size = 0x60000, scoped, tag = 'input window, operand 1, single buffered']
    #allocation7 [shape = 's32[1]{0}', space=sflag, size = 0x4, scoped, tag = 'scoped memory for tpu_custom_call.1']
    #allocation8 [shape = 'u8[393216]{0}', space=vmem, size = 0x60000, scoped, tag = 'input window, operand 2, single buffered']
    #allocation9 [shape = 'u8[2048]{0}', space=vmem, size = 0x800, scoped, tag = 'output window, operand 0, single buffered']
    %10 = vsyncpa [#allocation4], 0
    %11 = vsyncpa [#allocation7], 0
    %12 = vsyncpa [#allocation5], 0
    // Predicated region
    $region2: #{tpu_custom_call.1} parent=1 // pred_check
      _
    $region3: #{tpu_custom_call.1} parent=1 // pred_check_branch
      %14 = sbr.rel (0) target = $region5
    $region4: #{tpu_custom_call.1} parent=1 // pred_region
      %s16 = ssub.s32 256, 256
      %17 = vsyncadd [#allocation4], %s16
      %s18 = sshll.u32 [#allocation3], 4
      %s19 = int_to_ptr.vmem [resolvable:$true] %s18
      %24 = dma.hbm_to_vmem [thread:$0]  %s0, 256, %s19, [#allocation4], 128, 128, 8
    $region5: #{tpu_custom_call.1} parent=1 // pred_fallthru
      _
    // Predicated region
    $region6: #{tpu_custom_call.1} parent=1 // pred_check
      _
    $region7: #{tpu_custom_call.1} parent=1 // pred_check_branch
      %26 = sbr.rel (0) target = $region9
    $region8: #{tpu_custom_call.1} parent=1 // pred_region
      %s28 = ssub.s32 12288, 12288
      %29 = vsyncadd [#allocation7], %s28
      %s30 = sshll.u32 [#allocation6], 4
      %s31 = int_to_ptr.vmem [resolvable:$true] %s30
      %36 = dma.hbm_to_vmem [thread:$0]  %s1, 12288, %s31, [#allocation7], 768, 768, 48
    $region9: #{tpu_custom_call.1} parent=1 // pred_fallthru
      _
    // Predicated region
    $region10: #{tpu_custom_call.1} parent=1 // pred_check
      _
    $region11: #{tpu_custom_call.1} parent=1 // pred_check_branch
      %38 = sbr.rel (0) target = $region13
    $region12: #{tpu_custom_call.1} parent=1 // pred_region
      %s40 = ssub.s32 12288, 12288
      %41 = vsyncadd [#allocation7], %s40
      %s42 = sshll.u32 [#allocation8], 4
      %s43 = int_to_ptr.vmem [resolvable:$true] %s42
      %48 = dma.hbm_to_vmem [thread:$0]  %s2, 12288, %s43, [#allocation7], 384, 384, 24
    $region13: #{tpu_custom_call.1} parent=1 // pred_fallthru
      _
    // Predicated region
    $region14: #{tpu_custom_call.1} parent=1 // pred_check
      _
    $region15: #{tpu_custom_call.1} parent=1 // pred_check_branch
      %50 = sbr.rel (0) target = $region17
    $region16: #{tpu_custom_call.1} parent=1 // pred_region
      _
    $region17: #{tpu_custom_call.1} parent=1 // pred_fallthru
      _
    // Predicated region
    $region18: #{tpu_custom_call.1} parent=1 // pred_check
      _
    $region19: #{tpu_custom_call.1} parent=1 // pred_check_branch
      %52 = sbr.rel (0) target = $region21
    $region20: #{tpu_custom_call.1} parent=1 // pred_region
      _
    $region21: #{tpu_custom_call.1} parent=1 // pred_fallthru
      _
    // Predicated region
    $region22: #{tpu_custom_call.1} parent=1 // pred_check
      _
    $region23: #{tpu_custom_call.1} parent=1 // pred_check_branch
      %54 = sbr.rel (0) target = $region25
    $region24: #{tpu_custom_call.1} parent=1 // pred_region
      %55 = dma.done [#allocation4], 256
    $region25: #{tpu_custom_call.1} parent=1 // pred_fallthru
      _
    // Predicated region
    $region26: #{tpu_custom_call.1} parent=1 // pred_check
      _
    $region27: #{tpu_custom_call.1} parent=1 // pred_check_branch
      %57 = sbr.rel (0) target = $region29
    $region28: #{tpu_custom_call.1} parent=1 // pred_region
      %58 = dma.done [#allocation7], 12288
    $region29: #{tpu_custom_call.1} parent=1 // pred_fallthru
      _
    // Predicated region
    $region30: #{tpu_custom_call.1} parent=1 // pred_check
      _
    $region31: #{tpu_custom_call.1} parent=1 // pred_check_branch
      %60 = sbr.rel (0) target = $region33
    $region32: #{tpu_custom_call.1} parent=1 // pred_region
      %61 = dma.done [#allocation7], 12288
    $region33: #{tpu_custom_call.1} parent=1 // pred_fallthru
      _
    %v62 = vld [vmem:[#allocation3] sm:$0xff]
    %v63 = vld [vmem:[#allocation3 + $0x8] sm:$0xff]
    %v64 = vld [vmem:[#allocation6] sm:$0xff]
    %v65 = vld [vmem:[#allocation6 + $0x8] sm:$0xff]
    %v66 = vld [vmem:[#allocation6 + $0x10] sm:$0xff]
    %v67 = vld [vmem:[#allocation6 + $0x18] sm:$0xff]
    %v68 = vld [vmem:[#allocation6 + $0x20] sm:$0xff]
    %v69 = vld [vmem:[#allocation6 + $0x28] sm:$0xff]
    %v70 = vld [vmem:[#allocation6 + $0x30] sm:$0xff]
    %v71 = vld [vmem:[#allocation6 + $0x38] sm:$0xff]
    %v72 = vld [vmem:[#allocation6 + $0x40] sm:$0xff]
    %v73 = vld [vmem:[#allocation6 + $0x48] sm:$0xff]
    %v74 = vld [vmem:[#allocation6 + $0x50] sm:$0xff]
    %v75 = vld [vmem:[#allocation6 + $0x58] sm:$0xff]
    %v76 = vld [vmem:[#allocation6 + $0x60] sm:$0xff]
    %v77 = vld [vmem:[#allocation6 + $0x68] sm:$0xff]
    %v78 = vld [vmem:[#allocation6 + $0x70] sm:$0xff]
    %v79 = vld [vmem:[#allocation6 + $0x78] sm:$0xff]
    %v80 = vld [vmem:[#allocation6 + $0x80] sm:$0xff]
    %v81 = vld [vmem:[#allocation6 + $0x88] sm:$0xff]
    %v82 = vld [vmem:[#allocation6 + $0x90] sm:$0xff]
    %v83 = vld [vmem:[#allocation6 + $0x98] sm:$0xff]
    %v84 = vld [vmem:[#allocation6 + $0xa0] sm:$0xff]
    %v85 = vld [vmem:[#allocation6 + $0xa8] sm:$0xff]
    %v86 = vld [vmem:[#allocation6 + $0xb0] sm:$0xff]
    %v87 = vld [vmem:[#allocation6 + $0xb8] sm:$0xff]
    %v88 = vld [vmem:[#allocation6 + $0xc0] sm:$0xff]
    %v89 = vld [vmem:[#allocation6 + $0xc8] sm:$0xff]
    %v90 = vld [vmem:[#allocation6 + $0xd0] sm:$0xff]
    %v91 = vld [vmem:[#allocation6 + $0xd8] sm:$0xff]
    %v92 = vld [vmem:[#allocation6 + $0xe0] sm:$0xff]
    %v93 = vld [vmem:[#allocation6 + $0xe8] sm:$0xff]
    %v94 = vld [vmem:[#allocation6 + $0xf0] sm:$0xff]
    %v95 = vld [vmem:[#allocation6 + $0xf8] sm:$0xff]
    %v96 = vld [vmem:[#allocation6 + $0x100] sm:$0xff]
    %v97 = vld [vmem:[#allocation6 + $0x108] sm:$0xff]
    %v98 = vld [vmem:[#allocation6 + $0x110] sm:$0xff]
    %v99 = vld [vmem:[#allocation6 + $0x118] sm:$0xff]
    %v100 = vld [vmem:[#allocation6 + $0x120] sm:$0xff]
    %v101 = vld [vmem:[#allocation6 + $0x128] sm:$0xff]
    %v102 = vld [vmem:[#allocation6 + $0x130] sm:$0xff]
    %v103 = vld [vmem:[#allocation6 + $0x138] sm:$0xff]
    %v104 = vld [vmem:[#allocation6 + $0x140] sm:$0xff]
    %v105 = vld [vmem:[#allocation6 + $0x148] sm:$0xff]
    %v106 = vld [vmem:[#allocation6 + $0x150] sm:$0xff]
    %v107 = vld [vmem:[#allocation6 + $0x158] sm:$0xff]
    %v108 = vld [vmem:[#allocation6 + $0x160] sm:$0xff]
    %v109 = vld [vmem:[#allocation6 + $0x168] sm:$0xff]
    %v110 = vld [vmem:[#allocation6 + $0x170] sm:$0xff]
    %v111 = vld [vmem:[#allocation6 + $0x178] sm:$0xff]
    %v112 = vld [vmem:[#allocation6 + $0x180] sm:$0xff]
    %v113 = vld [vmem:[#allocation6 + $0x188] sm:$0xff]
    %v114 = vld [vmem:[#allocation6 + $0x190] sm:$0xff]
    %v115 = vld [vmem:[#allocation6 + $0x198] sm:$0xff]
    %v116 = vld [vmem:[#allocation6 + $0x1a0] sm:$0xff]
    %v117 = vld [vmem:[#allocation6 + $0x1a8] sm:$0xff]
    %v118 = vld [vmem:[#allocation6 + $0x1b0] sm:$0xff]
    %v119 = vld [vmem:[#allocation6 + $0x1b8] sm:$0xff]
    %v120 = vld [vmem:[#allocation6 + $0x1c0] sm:$0xff]
    %v121 = vld [vmem:[#allocation6 + $0x1c8] sm:$0xff]
    %v122 = vld [vmem:[#allocation6 + $0x1d0] sm:$0xff]
    %v123 = vld [vmem:[#allocation6 + $0x1d8] sm:$0xff]
    %v124 = vld [vmem:[#allocation6 + $0x1e0] sm:$0xff]
    %v125 = vld [vmem:[#allocation6 + $0x1e8] sm:$0xff]
    %v126 = vld [vmem:[#allocation6 + $0x1f0] sm:$0xff]
    %v127 = vld [vmem:[#allocation6 + $0x1f8] sm:$0xff]
    %v128 = vld [vmem:[#allocation6 + $0x200] sm:$0xff]
    %v129 = vld [vmem:[#allocation6 + $0x208] sm:$0xff]
    %v130 = vld [vmem:[#allocation6 + $0x210] sm:$0xff]
    %v131 = vld [vmem:[#allocation6 + $0x218] sm:$0xff]
    %v132 = vld [vmem:[#allocation6 + $0x220] sm:$0xff]
    %v133 = vld [vmem:[#allocation6 + $0x228] sm:$0xff]
    %v134 = vld [vmem:[#allocation6 + $0x230] sm:$0xff]
    %v135 = vld [vmem:[#allocation6 + $0x238] sm:$0xff]
    %v136 = vld [vmem:[#allocation6 + $0x240] sm:$0xff]
    %v137 = vld [vmem:[#allocation6 + $0x248] sm:$0xff]
    %v138 = vld [vmem:[#allocation6 + $0x250] sm:$0xff]
    %v139 = vld [vmem:[#allocation6 + $0x258] sm:$0xff]
    %v140 = vld [vmem:[#allocation6 + $0x260] sm:$0xff]
    %v141 = vld [vmem:[#allocation6 + $0x268] sm:$0xff]
    %v142 = vld [vmem:[#allocation6 + $0x270] sm:$0xff]
    %v143 = vld [vmem:[#allocation6 + $0x278] sm:$0xff]
    %v144 = vld [vmem:[#allocation6 + $0x280] sm:$0xff]
    %v145 = vld [vmem:[#allocation6 + $0x288] sm:$0xff]
    %v146 = vld [vmem:[#allocation6 + $0x290] sm:$0xff]
    %v147 = vld [vmem:[#allocation6 + $0x298] sm:$0xff]
    %v148 = vld [vmem:[#allocation6 + $0x2a0] sm:$0xff]
    %v149 = vld [vmem:[#allocation6 + $0x2a8] sm:$0xff]
    %v150 = vld [vmem:[#allocation6 + $0x2b0] sm:$0xff]
    %v151 = vld [vmem:[#allocation6 + $0x2b8] sm:$0xff]
    %v152 = vld [vmem:[#allocation6 + $0x2c0] sm:$0xff]
    %v153 = vld [vmem:[#allocation6 + $0x2c8] sm:$0xff]
    %v154 = vld [vmem:[#allocation6 + $0x2d0] sm:$0xff]
    %v155 = vld [vmem:[#allocation6 + $0x2d8] sm:$0xff]
    %v156 = vld [vmem:[#allocation6 + $0x2e0] sm:$0xff]
    %v157 = vld [vmem:[#allocation6 + $0x2e8] sm:$0xff]
    %v158 = vld [vmem:[#allocation6 + $0x2f0] sm:$0xff]
    %v159 = vld [vmem:[#allocation6 + $0x2f8] sm:$0xff]
    %160 = vmatprep.subr.mxu0 %v65
    %161 = vmatpush1.msra.mxu0 %v64
    %162 = vmatprep.subr.mxu0 %v71
    %163 = vmatpush1.msra.mxu0 %v70
    %164 = vmatprep.subr.mxu0 %v77
    %165 = vmatpush1.msra.mxu0 %v76
    %166 = vmatprep.subr.mxu0 %v83
    %167 = vmatpush1.msra.mxu0 %v82
    %168 = vmatprep.subr.mxu0 %v89
    %169 = vmatpush1.msra.mxu0 %v88
    %170 = vmatprep.subr.mxu0 %v95
    %171 = vmatpush1.msra.mxu0 %v94
    %172 = vmatprep.subr.mxu0 %v101
    %173 = vmatpush1.msra.mxu0 %v100
    %174 = vmatprep.subr.mxu0 %v107
    %175 = vmatpush1.msra.mxu0 %v106
    %176 = vmatprep.subr.mxu0 %v113
    %177 = vmatpush1.msra.mxu0 %v112
    %178 = vmatprep.subr.mxu0 %v119
    %179 = vmatpush1.msra.mxu0 %v118
    %180 = vmatprep.subr.mxu0 %v125
    %181 = vmatpush1.msra.mxu0 %v124
    %182 = vmatprep.subr.mxu0 %v131
    %183 = vmatpush1.msra.mxu0 %v130
    %184 = vmatprep.subr.mxu0 %v137
    %185 = vmatpush1.msra.mxu0 %v136
    %186 = vmatprep.subr.mxu0 %v143
    %187 = vmatpush1.msra.mxu0 %v142
    %188 = vmatprep.subr.mxu0 %v149
    %189 = vmatpush1.msra.mxu0 %v148
    %190 = vmatprep.subr.mxu0 %v155
    %191 = vmatpush1.msra.mxu0 %v154
    %192 = vmatprep.subr.mxu0 0.0
    %193 = vmatpush1.msra.mxu0 0.0
    %194 = vmatprep.subr.mxu0 0.0
    %195 = vmatpush1.msra.mxu0 0.0
    %196 = vmatprep.subr.mxu0 0.0
    %197 = vmatpush1.msra.mxu0 0.0
    %198 = vmatprep.subr.mxu0 0.0
    %199 = vmatpush1.msra.mxu0 0.0
    %200 = vmatprep.subr.mxu0 0.0
    %201 = vmatpush1.msra.mxu0 0.0
    %202 = vmatprep.subr.mxu0 0.0
    %203 = vmatpush1.msra.mxu0 0.0
    %204 = vmatprep.subr.mxu0 0.0
    %205 = vmatpush1.msra.mxu0 0.0
    %206 = vmatprep.subr.mxu0 0.0
    %207 = vmatpush1.msra.mxu0 0.0
    %208 = vmatprep.subr.mxu0 0.0
    %209 = vmatpush1.msra.mxu0 0.0
    %210 = vmatprep.subr.mxu0 0.0
    %211 = vmatpush1.msra.mxu0 0.0
    %212 = vmatprep.subr.mxu0 0.0
    %213 = vmatpush1.msra.mxu0 0.0
    %214 = vmatprep.subr.mxu0 0.0
    %215 = vmatpush1.msra.mxu0 0.0
    %216 = vmatprep.subr.mxu0 0.0
    %217 = vmatpush1.msra.mxu0 0.0
    %218 = vmatprep.subr.mxu0 0.0
    %219 = vmatpush1.msra.mxu0 0.0
    %220 = vmatprep.subr.mxu0 0.0
    %221 = vmatpush1.msra.mxu0 0.0
    %222 = vmatprep.subr.mxu0 0.0
    %223 = vmatpush1.msra.mxu0 0.0
    %224 = vmatprep.mubr.f32.mxu0 0.0
    %225 = vmatmul.mubr.f32.gmra.mrb[0].mxu0 %v62
    %v226 = vpop.f32.mrb[0].mxu0
    %v227 = vadd.f32 0.0, %v226
    %v228 = vpop.f32.mrb[0].mxu0
    %v229 = vadd.f32 0.0, %v228
    %230 = vmatprep.mubr.f32.mxu0 0.0
    %231 = vmatmul.mubr.f32.gmra.mrb[0].mxu0 %v63
    %v232 = vpop.f32.mrb[0].mxu0
    %v233 = vadd.f32 0.0, %v232
    %v234 = vpop.f32.mrb[0].mxu0
    %v235 = vadd.f32 0.0, %v234
    %236 = vdwg.mxu0
    %237 = vmatprep.subr.mxu0 %v67
    %238 = vmatpush1.msra.mxu0 %v66
    %239 = vmatprep.subr.mxu0 %v73
    %240 = vmatpush1.msra.mxu0 %v72
    %241 = vmatprep.subr.mxu0 %v79
    %242 = vmatpush1.msra.mxu0 %v78
    %243 = vmatprep.subr.mxu0 %v85
    %244 = vmatpush1.msra.mxu0 %v84
    %245 = vmatprep.subr.mxu0 %v91
    %246 = vmatpush1.msra.mxu0 %v90
    %247 = vmatprep.subr.mxu0 %v97
    %248 = vmatpush1.msra.mxu0 %v96
    %249 = vmatprep.subr.mxu0 %v103
    %250 = vmatpush1.msra.mxu0 %v102
    %251 = vmatprep.subr.mxu0 %v109
    %252 = vmatpush1.msra.mxu0 %v108
    %253 = vmatprep.subr.mxu0 %v115
    %254 = vmatpush1.msra.mxu0 %v114
    %255 = vmatprep.subr.mxu0 %v121
    %256 = vmatpush1.msra.mxu0 %v120
    %257 = vmatprep.subr.mxu0 %v127
    %258 = vmatpush1.msra.mxu0 %v126
    %259 = vmatprep.subr.mxu0 %v133
    %260 = vmatpush1.msra.mxu0 %v132
    %261 = vmatprep.subr.mxu0 %v139
    %262 = vmatpush1.msra.mxu0 %v138
    %263 = vmatprep.subr.mxu0 %v145
    %264 = vmatpush1.msra.mxu0 %v144
    %265 = vmatprep.subr.mxu0 %v151
    %266 = vmatpush1.msra.mxu0 %v150
    %267 = vmatprep.subr.mxu0 %v157
    %268 = vmatpush1.msra.mxu0 %v156
    %269 = vmatprep.subr.mxu0 0.0
    %270 = vmatpush1.msra.mxu0 0.0
    %271 = vmatprep.subr.mxu0 0.0
    %272 = vmatpush1.msra.mxu0 0.0
    %273 = vmatprep.subr.mxu0 0.0
    %274 = vmatpush1.msra.mxu0 0.0
    %275 = vmatprep.subr.mxu0 0.0
    %276 = vmatpush1.msra.mxu0 0.0
    %277 = vmatprep.subr.mxu0 0.0
    %278 = vmatpush1.msra.mxu0 0.0
    %279 = vmatprep.subr.mxu0 0.0
    %280 = vmatpush1.msra.mxu0 0.0
    %281 = vmatprep.subr.mxu0 0.0
    %282 = vmatpush1.msra.mxu0 0.0
    %283 = vmatprep.subr.mxu0 0.0
    %284 = vmatpush1.msra.mxu0 0.0
    %285 = vmatprep.subr.mxu0 0.0
    %286 = vmatpush1.msra.mxu0 0.0
    %287 = vmatprep.subr.mxu0 0.0
    %288 = vmatpush1.msra.mxu0 0.0
    %289 = vmatprep.subr.mxu0 0.0
    %290 = vmatpush1.msra.mxu0 0.0
    %291 = vmatprep.subr.mxu0 0.0
    %292 = vmatpush1.msra.mxu0 0.0
    %293 = vmatprep.subr.mxu0 0.0
    %294 = vmatpush1.msra.mxu0 0.0
    %295 = vmatprep.subr.mxu0 0.0
    %296 = vmatpush1.msra.mxu0 0.0
    %297 = vmatprep.subr.mxu0 0.0
    %298 = vmatpush1.msra.mxu0 0.0
    %299 = vmatprep.subr.mxu0 0.0
    %300 = vmatpush1.msra.mxu0 0.0
    %301 = vmatprep.mubr.f32.mxu0 0.0
    %302 = vmatmul.mubr.f32.gmra.mrb[0].mxu0 %v62
    %v303 = vpop.f32.mrb[0].mxu0
    %v304 = vadd.f32 0.0, %v303
    %v305 = vpop.f32.mrb[0].mxu0
    %v306 = vadd.f32 0.0, %v305
    %307 = vmatprep.mubr.f32.mxu0 0.0
    %308 = vmatmul.mubr.f32.gmra.mrb[0].mxu0 %v63
    %v309 = vpop.f32.mrb[0].mxu0
    %v310 = vadd.f32 0.0, %v309
    %v311 = vpop.f32.mrb[0].mxu0
    %v312 = vadd.f32 0.0, %v311
    %313 = vdwg.mxu0
    %314 = vmatprep.subr.mxu0 %v69
    %315 = vmatpush1.msra.mxu0 %v68
    %316 = vmatprep.subr.mxu0 %v75
    %317 = vmatpush1.msra.mxu0 %v74
    %318 = vmatprep.subr.mxu0 %v81
    %319 = vmatpush1.msra.mxu0 %v80
    %320 = vmatprep.subr.mxu0 %v87
    %321 = vmatpush1.msra.mxu0 %v86
    %322 = vmatprep.subr.mxu0 %v93
    %323 = vmatpush1.msra.mxu0 %v92
    %324 = vmatprep.subr.mxu0 %v99
    %325 = vmatpush1.msra.mxu0 %v98
    %326 = vmatprep.subr.mxu0 %v105
    %327 = vmatpush1.msra.mxu0 %v104
    %328 = vmatprep.subr.mxu0 %v111
    %329 = vmatpush1.msra.mxu0 %v110
    %330 = vmatprep.subr.mxu0 %v117
    %331 = vmatpush1.msra.mxu0 %v116
    %332 = vmatprep.subr.mxu0 %v123
    %333 = vmatpush1.msra.mxu0 %v122
    %334 = vmatprep.subr.mxu0 %v129
    %335 = vmatpush1.msra.mxu0 %v128
    %336 = vmatprep.subr.mxu0 %v135
    %337 = vmatpush1.msra.mxu0 %v134
    %338 = vmatprep.subr.mxu0 %v141
    %339 = vmatpush1.msra.mxu0 %v140
    %340 = vmatprep.subr.mxu0 %v147
    %341 = vmatpush1.msra.mxu0 %v146
    %342 = vmatprep.subr.mxu0 %v153
    %343 = vmatpush1.msra.mxu0 %v152
    %344 = vmatprep.subr.mxu0 %v159
    %345 = vmatpush1.msra.mxu0 %v158
    %346 = vmatprep.subr.mxu0 0.0
    %347 = vmatpush1.msra.mxu0 0.0
    %348 = vmatprep.subr.mxu0 0.0
    %349 = vmatpush1.msra.mxu0 0.0
    %350 = vmatprep.subr.mxu0 0.0
    %351 = vmatpush1.msra.mxu0 0.0
    %352 = vmatprep.subr.mxu0 0.0
    %353 = vmatpush1.msra.mxu0 0.0
    %354 = vmatprep.subr.mxu0 0.0
    %355 = vmatpush1.msra.mxu0 0.0
    %356 = vmatprep.subr.mxu0 0.0
    %357 = vmatpush1.msra.mxu0 0.0
    %358 = vmatprep.subr.mxu0 0.0
    %359 = vmatpush1.msra.mxu0 0.0
    %360 = vmatprep.subr.mxu0 0.0
    %361 = vmatpush1.msra.mxu0 0.0
    %362 = vmatprep.subr.mxu0 0.0
    %363 = vmatpush1.msra.mxu0 0.0
    %364 = vmatprep.subr.mxu0 0.0
    %365 = vmatpush1.msra.mxu0 0.0
    %366 = vmatprep.subr.mxu0 0.0
    %367 = vmatpush1.msra.mxu0 0.0
    %368 = vmatprep.subr.mxu0 0.0
    %369 = vmatpush1.msra.mxu0 0.0
    %370 = vmatprep.subr.mxu0 0.0
    %371 = vmatpush1.msra.mxu0 0.0
    %372 = vmatprep.subr.mxu0 0.0
    %373 = vmatpush1.msra.mxu0 0.0
    %374 = vmatprep.subr.mxu0 0.0
    %375 = vmatpush1.msra.mxu0 0.0
    %376 = vmatprep.subr.mxu0 0.0
    %377 = vmatpush1.msra.mxu0 0.0
    %378 = vmatprep.mubr.f32.mxu0 0.0
    %379 = vmatmul.mubr.f32.gmra.mrb[0].mxu0 %v62
    %v380 = vpop.f32.mrb[0].mxu0
    %v381 = vadd.f32 0.0, %v380
    %v382 = vpop.f32.mrb[0].mxu0
    %v383 = vadd.f32 0.0, %v382
    %384 = vmatprep.mubr.f32.mxu0 0.0
    %385 = vmatmul.mubr.f32.gmra.mrb[0].mxu0 %v63
    %v386 = vpop.f32.mrb[0].mxu0
    %v387 = vadd.f32 0.0, %v386
    %v388 = vpop.f32.mrb[0].mxu0
    %v389 = vadd.f32 0.0, %v388
    %390 = vdwg.mxu0
    %v391 = vld [vmem:[#allocation8] sm:$0xff]
    %v392 = vld [vmem:[#allocation8 + $0x8] sm:$0xff]
    %v393 = vld [vmem:[#allocation8 + $0x10] sm:$0xff]
    %v394 = vld [vmem:[#allocation8 + $0x18] sm:$0xff]
    %v395 = vld [vmem:[#allocation8 + $0x20] sm:$0xff]
    %v396 = vld [vmem:[#allocation8 + $0x28] sm:$0xff]
    %v397 = vld [vmem:[#allocation8 + $0x30] sm:$0xff]
    %v398 = vld [vmem:[#allocation8 + $0x38] sm:$0xff]
    %v399 = vld [vmem:[#allocation8 + $0x40] sm:$0xff]
    %v400 = vld [vmem:[#allocation8 + $0x48] sm:$0xff]
    %v401 = vld [vmem:[#allocation8 + $0x50] sm:$0xff]
    %v402 = vld [vmem:[#allocation8 + $0x58] sm:$0xff]
    %v403 = vld [vmem:[#allocation8 + $0x60] sm:$0xff]
    %v404 = vld [vmem:[#allocation8 + $0x68] sm:$0xff]
    %v405 = vld [vmem:[#allocation8 + $0x70] sm:$0xff]
    %v406 = vld [vmem:[#allocation8 + $0x78] sm:$0xff]
    %v407 = vld [vmem:[#allocation8 + $0x80] sm:$0xff]
    %v408 = vld [vmem:[#allocation8 + $0x88] sm:$0xff]
    %v409 = vld [vmem:[#allocation8 + $0x90] sm:$0xff]
    %v410 = vld [vmem:[#allocation8 + $0x98] sm:$0xff]
    %v411 = vld [vmem:[#allocation8 + $0xa0] sm:$0xff]
    %v412 = vld [vmem:[#allocation8 + $0xa8] sm:$0xff]
    %v413 = vld [vmem:[#allocation8 + $0xb0] sm:$0xff]
    %v414 = vld [vmem:[#allocation8 + $0xb8] sm:$0xff]
    %v415 = vld [vmem:[#allocation8 + $0xc0] sm:$0xff]
    %v416 = vld [vmem:[#allocation8 + $0xc8] sm:$0xff]
    %v417 = vld [vmem:[#allocation8 + $0xd0] sm:$0xff]
    %v418 = vld [vmem:[#allocation8 + $0xd8] sm:$0xff]
    %v419 = vld [vmem:[#allocation8 + $0xe0] sm:$0xff]
    %v420 = vld [vmem:[#allocation8 + $0xe8] sm:$0xff]
    %v421 = vld [vmem:[#allocation8 + $0xf0] sm:$0xff]
    %v422 = vld [vmem:[#allocation8 + $0xf8] sm:$0xff]
    %v423 = vld [vmem:[#allocation8 + $0x100] sm:$0xff]
    %v424 = vld [vmem:[#allocation8 + $0x108] sm:$0xff]
    %v425 = vld [vmem:[#allocation8 + $0x110] sm:$0xff]
    %v426 = vld [vmem:[#allocation8 + $0x118] sm:$0xff]
    %v427 = vld [vmem:[#allocation8 + $0x120] sm:$0xff]
    %v428 = vld [vmem:[#allocation8 + $0x128] sm:$0xff]
    %v429 = vld [vmem:[#allocation8 + $0x130] sm:$0xff]
    %v430 = vld [vmem:[#allocation8 + $0x138] sm:$0xff]
    %v431 = vld [vmem:[#allocation8 + $0x140] sm:$0xff]
    %v432 = vld [vmem:[#allocation8 + $0x148] sm:$0xff]
    %v433 = vld [vmem:[#allocation8 + $0x150] sm:$0xff]
    %v434 = vld [vmem:[#allocation8 + $0x158] sm:$0xff]
    %v435 = vld [vmem:[#allocation8 + $0x160] sm:$0xff]
    %v436 = vld [vmem:[#allocation8 + $0x168] sm:$0xff]
    %v437 = vld [vmem:[#allocation8 + $0x170] sm:$0xff]
    %v438 = vld [vmem:[#allocation8 + $0x178] sm:$0xff]
    %s439 = scalar_lea.vmem [#allocation8], 384
    %v440 = vld [vmem:[%s439] sm:$0xff]
    %v441 = vld [vmem:[%s439 + $0x8] sm:$0xff]
    %v442 = vld [vmem:[%s439 + $0x10] sm:$0xff]
    %v443 = vld [vmem:[%s439 + $0x18] sm:$0xff]
    %v444 = vld [vmem:[%s439 + $0x20] sm:$0xff]
    %v445 = vld [vmem:[%s439 + $0x28] sm:$0xff]
    %v446 = vld [vmem:[%s439 + $0x30] sm:$0xff]
    %v447 = vld [vmem:[%s439 + $0x38] sm:$0xff]
    %v448 = vld [vmem:[%s439 + $0x40] sm:$0xff]
    %v449 = vld [vmem:[%s439 + $0x48] sm:$0xff]
    %v450 = vld [vmem:[%s439 + $0x50] sm:$0xff]
    %v451 = vld [vmem:[%s439 + $0x58] sm:$0xff]
    %v452 = vld [vmem:[%s439 + $0x60] sm:$0xff]
    %v453 = vld [vmem:[%s439 + $0x68] sm:$0xff]
    %v454 = vld [vmem:[%s439 + $0x70] sm:$0xff]
    %v455 = vld [vmem:[%s439 + $0x78] sm:$0xff]
    %v456 = vld [vmem:[%s439 + $0x80] sm:$0xff]
    %v457 = vld [vmem:[%s439 + $0x88] sm:$0xff]
    %v458 = vld [vmem:[%s439 + $0x90] sm:$0xff]
    %v459 = vld [vmem:[%s439 + $0x98] sm:$0xff]
    %v460 = vld [vmem:[%s439 + $0xa0] sm:$0xff]
    %v461 = vld [vmem:[%s439 + $0xa8] sm:$0xff]
    %v462 = vld [vmem:[%s439 + $0xb0] sm:$0xff]
    %v463 = vld [vmem:[%s439 + $0xb8] sm:$0xff]
    %v464 = vld [vmem:[%s439 + $0xc0] sm:$0xff]
    %v465 = vld [vmem:[%s439 + $0xc8] sm:$0xff]
    %v466 = vld [vmem:[%s439 + $0xd0] sm:$0xff]
    %v467 = vld [vmem:[%s439 + $0xd8] sm:$0xff]
    %v468 = vld [vmem:[%s439 + $0xe0] sm:$0xff]
    %v469 = vld [vmem:[%s439 + $0xe8] sm:$0xff]
    %v470 = vld [vmem:[%s439 + $0xf0] sm:$0xff]
    %v471 = vld [vmem:[%s439 + $0xf8] sm:$0xff]
    %v472 = vld [vmem:[%s439 + $0x100] sm:$0xff]
    %v473 = vld [vmem:[%s439 + $0x108] sm:$0xff]
    %v474 = vld [vmem:[%s439 + $0x110] sm:$0xff]
    %v475 = vld [vmem:[%s439 + $0x118] sm:$0xff]
    %v476 = vld [vmem:[%s439 + $0x120] sm:$0xff]
    %v477 = vld [vmem:[%s439 + $0x128] sm:$0xff]
    %v478 = vld [vmem:[%s439 + $0x130] sm:$0xff]
    %v479 = vld [vmem:[%s439 + $0x138] sm:$0xff]
    %v480 = vld [vmem:[%s439 + $0x140] sm:$0xff]
    %v481 = vld [vmem:[%s439 + $0x148] sm:$0xff]
    %v482 = vld [vmem:[%s439 + $0x150] sm:$0xff]
    %v483 = vld [vmem:[%s439 + $0x158] sm:$0xff]
    %v484 = vld [vmem:[%s439 + $0x160] sm:$0xff]
    %v485 = vld [vmem:[%s439 + $0x168] sm:$0xff]
    %v486 = vld [vmem:[%s439 + $0x170] sm:$0xff]
    %v487 = vld [vmem:[%s439 + $0x178] sm:$0xff]
    %v488 = vld [vmem:[%s3] sm:$0x1]
    %v489 = vlaneseq
    %v490 = vshrl.u32 %v489, 7
    %v491 = vsub.s32 0, %v490
    %v492 = vrot.slane %v488, %v491
    %v493 = vld [vmem:[%s3 + $0x1] sm:$0x1]
    %v494 = vlaneseq
    %v495 = vshrl.u32 %v494, 7
    %v496 = vsub.s32 0, %v495
    %v497 = vrot.slane %v493, %v496
    %v498 = vld [vmem:[%s4] sm:$0x1]
    %v499 = vlaneseq
    %v500 = vshrl.u32 %v499, 7
    %v501 = vsub.s32 0, %v500
    %v502 = vrot.slane %v498, %v501
    %v503 = vld [vmem:[%s4 + $0x1] sm:$0x1]
    %v504 = vlaneseq
    %v505 = vshrl.u32 %v504, 7
    %v506 = vsub.s32 0, %v505
    %v507 = vrot.slane %v503, %v506
    %508 = vmatprep.subr.mxu0 %v392
    %509 = vmatpush1.msra.mxu0 %v391
    %510 = vmatprep.subr.mxu0 %v395
    %511 = vmatpush1.msra.mxu0 %v394
    %512 = vmatprep.subr.mxu0 %v398
    %513 = vmatpush1.msra.mxu0 %v397
    %514 = vmatprep.subr.mxu0 %v401
    %515 = vmatpush1.msra.mxu0 %v400
    %516 = vmatprep.subr.mxu0 %v404
    %517 = vmatpush1.msra.mxu0 %v403
    %518 = vmatprep.subr.mxu0 %v407
    %519 = vmatpush1.msra.mxu0 %v406
    %520 = vmatprep.subr.mxu0 %v410
    %521 = vmatpush1.msra.mxu0 %v409
    %522 = vmatprep.subr.mxu0 %v413
    %523 = vmatpush1.msra.mxu0 %v412
    %524 = vmatprep.subr.mxu0 %v416
    %525 = vmatpush1.msra.mxu0 %v415
    %526 = vmatprep.subr.mxu0 %v419
    %527 = vmatpush1.msra.mxu0 %v418
    %528 = vmatprep.subr.mxu0 %v422
    %529 = vmatpush1.msra.mxu0 %v421
    %530 = vmatprep.subr.mxu0 %v425
    %531 = vmatpush1.msra.mxu0 %v424
    %532 = vmatprep.subr.mxu0 %v428
    %533 = vmatpush1.msra.mxu0 %v427
    %534 = vmatprep.subr.mxu0 %v431
    %535 = vmatpush1.msra.mxu0 %v430
    %536 = vmatprep.subr.mxu0 %v434
    %537 = vmatpush1.msra.mxu0 %v433
    %538 = vmatprep.subr.mxu0 %v437
    %539 = vmatpush1.msra.mxu0 %v436
    %540 = vmatprep.subr.mxu0 0.0
    %541 = vmatpush1.msra.mxu0 0.0
    %542 = vmatprep.subr.mxu0 0.0
    %543 = vmatpush1.msra.mxu0 0.0
    %544 = vmatprep.subr.mxu0 0.0
    %545 = vmatpush1.msra.mxu0 0.0
    %546 = vmatprep.subr.mxu0 0.0
    %547 = vmatpush1.msra.mxu0 0.0
    %548 = vmatprep.subr.mxu0 0.0
    %549 = vmatpush1.msra.mxu0 0.0
    %550 = vmatprep.subr.mxu0 0.0
    %551 = vmatpush1.msra.mxu0 0.0
    %552 = vmatprep.subr.mxu0 0.0
    %553 = vmatpush1.msra.mxu0 0.0
    %554 = vmatprep.subr.mxu0 0.0
    %555 = vmatpush1.msra.mxu0 0.0
    %556 = vmatprep.subr.mxu0 0.0
    %557 = vmatpush1.msra.mxu0 0.0
    %558 = vmatprep.subr.mxu0 0.0
    %559 = vmatpush1.msra.mxu0 0.0
    %560 = vmatprep.subr.mxu0 0.0
    %561 = vmatpush1.msra.mxu0 0.0
    %562 = vmatprep.subr.mxu0 0.0
    %563 = vmatpush1.msra.mxu0 0.0
    %564 = vmatprep.subr.mxu0 0.0
    %565 = vmatpush1.msra.mxu0 0.0
    %566 = vmatprep.subr.mxu0 0.0
    %567 = vmatpush1.msra.mxu0 0.0
    %568 = vmatprep.subr.mxu0 0.0
    %569 = vmatpush1.msra.mxu0 0.0
    %570 = vmatprep.subr.mxu0 0.0
    %571 = vmatpush1.msra.mxu0 0.0
    %572 = vmatprep.mubr.f32.mxu0 0.0
    %573 = vmatmul.mubr.f32.gmra.mrb[0].mxu0 0.0
    %v574 = vpop.f32.mrb[0].mxu0
    %v575 = vadd.f32 0.0, %v574
    %v576 = vpop.f32.mrb[0].mxu0
    %v577 = vadd.f32 0.0, %v576
    %578 = vdwg.mxu0
    %579 = vmatprep.subr.mxu0 0.0
    %580 = vmatpush1.msra.mxu0 %v393
    %581 = vmatprep.subr.mxu0 0.0
    %582 = vmatpush1.msra.mxu0 %v396
    %583 = vmatprep.subr.mxu0 0.0
    %584 = vmatpush1.msra.mxu0 %v399
    %585 = vmatprep.subr.mxu0 0.0
    %586 = vmatpush1.msra.mxu0 %v402
    %587 = vmatprep.subr.mxu0 0.0
    %588 = vmatpush1.msra.mxu0 %v405
    %589 = vmatprep.subr.mxu0 0.0
    %590 = vmatpush1.msra.mxu0 %v408
    %591 = vmatprep.subr.mxu0 0.0
    %592 = vmatpush1.msra.mxu0 %v411
    %593 = vmatprep.subr.mxu0 0.0
    %594 = vmatpush1.msra.mxu0 %v414
    %595 = vmatprep.subr.mxu0 0.0
    %596 = vmatpush1.msra.mxu0 %v417
    %597 = vmatprep.subr.mxu0 0.0
    %598 = vmatpush1.msra.mxu0 %v420
    %599 = vmatprep.subr.mxu0 0.0
    %600 = vmatpush1.msra.mxu0 %v423
    %601 = vmatprep.subr.mxu0 0.0
    %602 = vmatpush1.msra.mxu0 %v426
    %603 = vmatprep.subr.mxu0 0.0
    %604 = vmatpush1.msra.mxu0 %v429
    %605 = vmatprep.subr.mxu0 0.0
    %606 = vmatpush1.msra.mxu0 %v432
    %607 = vmatprep.subr.mxu0 0.0
    %608 = vmatpush1.msra.mxu0 %v435
    %609 = vmatprep.subr.mxu0 0.0
    %610 = vmatpush1.msra.mxu0 %v438
    %611 = vmatprep.subr.mxu0 0.0
    %612 = vmatpush1.msra.mxu0 0.0
    %613 = vmatprep.subr.mxu0 0.0
    %614 = vmatpush1.msra.mxu0 0.0
    %615 = vmatprep.subr.mxu0 0.0
    %616 = vmatpush1.msra.mxu0 0.0
    %617 = vmatprep.subr.mxu0 0.0
    %618 = vmatpush1.msra.mxu0 0.0
    %619 = vmatprep.subr.mxu0 0.0
    %620 = vmatpush1.msra.mxu0 0.0
    %621 = vmatprep.subr.mxu0 0.0
    %622 = vmatpush1.msra.mxu0 0.0
    %623 = vmatprep.subr.mxu0 0.0
    %624 = vmatpush1.msra.mxu0 0.0
    %625 = vmatprep.subr.mxu0 0.0
    %626 = vmatpush1.msra.mxu0 0.0
    %627 = vmatprep.subr.mxu0 0.0
    %628 = vmatpush1.msra.mxu0 0.0
    %629 = vmatprep.subr.mxu0 0.0
    %630 = vmatpush1.msra.mxu0 0.0
    %631 = vmatprep.subr.mxu0 0.0
    %632 = vmatpush1.msra.mxu0 0.0
    %633 = vmatprep.subr.mxu0 0.0
    %634 = vmatpush1.msra.mxu0 0.0
    %635 = vmatprep.subr.mxu0 0.0
    %636 = vmatpush1.msra.mxu0 0.0
    %637 = vmatprep.subr.mxu0 0.0
    %638 = vmatpush1.msra.mxu0 0.0
    %639 = vmatprep.subr.mxu0 0.0
    %640 = vmatpush1.msra.mxu0 0.0
    %641 = vmatprep.subr.mxu0 0.0
    %642 = vmatpush1.msra.mxu0 0.0
    %643 = vmatprep.mubr.f32.mxu0 0.0
    %644 = vmatmul.mubr.f32.gmra.mrb[0].mxu0 0.0
    %v645 = vpop.f32.mrb[0].mxu0
    %v646 = vadd.f32 0.0, %v645
    %v647 = vpop.f32.mrb[0].mxu0
    %648 = vdwg.mxu0
    %v649 = vadd.f32 %v227, %v575
    %v650 = vxor.u32 %v649, 2147483648
    %v651 = vmul.f32 %v650, 1.442695
    %v652 = vpow.pop %v651
    %v653 = vadd.f32 %v652, 1.0
    %v654 = vrcp.pop %v653
    %v655 = vmul.f32 1.0, %v654
    %v656 = vadd.f32 %v229, %v577
    %v657 = vxor.u32 %v656, 2147483648
    %v658 = vmul.f32 %v657, 1.442695
    %v659 = vpow.pop %v658
    %v660 = vadd.f32 %v659, 1.0
    %v661 = vrcp.pop %v660
    %v662 = vmul.f32 1.0, %v661
    %v663 = vadd.f32 %v646, %v492
    %v664 = vmul.f32 %v655, %v663
    %v665 = vadd.f32 %v304, %v664
    %v666 = vtanh.pop %v665
    %v667 = vsub.f32 1.0, %v662
    %v668 = vmul.f32 %v667, %v666
    %v669 = vmul.f32 %v662, 0.0
    %v670 = vadd.f32 %v668, %v669
    %671 = vmatprep.subr.mxu0 %v441
    %672 = vmatpush1.msra.mxu0 %v440
    %673 = vmatprep.subr.mxu0 %v444
    %674 = vmatpush1.msra.mxu0 %v443
    %675 = vmatprep.subr.mxu0 %v447
    %676 = vmatpush1.msra.mxu0 %v446
    %677 = vmatprep.subr.mxu0 %v450
    %678 = vmatpush1.msra.mxu0 %v449
    %679 = vmatprep.subr.mxu0 %v453
    %680 = vmatpush1.msra.mxu0 %v452
    %681 = vmatprep.subr.mxu0 %v456
    %682 = vmatpush1.msra.mxu0 %v455
    %683 = vmatprep.subr.mxu0 %v459
    %684 = vmatpush1.msra.mxu0 %v458
    %685 = vmatprep.subr.mxu0 %v462
    %686 = vmatpush1.msra.mxu0 %v461
    %687 = vmatprep.subr.mxu0 %v465
    %688 = vmatpush1.msra.mxu0 %v464
    %689 = vmatprep.subr.mxu0 %v468
    %690 = vmatpush1.msra.mxu0 %v467
    %691 = vmatprep.subr.mxu0 %v471
    %692 = vmatpush1.msra.mxu0 %v470
    %693 = vmatprep.subr.mxu0 %v474
    %694 = vmatpush1.msra.mxu0 %v473
    %695 = vmatprep.subr.mxu0 %v477
    %696 = vmatpush1.msra.mxu0 %v476
    %697 = vmatprep.subr.mxu0 %v480
    %698 = vmatpush1.msra.mxu0 %v479
    %699 = vmatprep.subr.mxu0 %v483
    %700 = vmatpush1.msra.mxu0 %v482
    %701 = vmatprep.subr.mxu0 %v486
    %702 = vmatpush1.msra.mxu0 %v485
    %703 = vmatprep.subr.mxu0 0.0
    %704 = vmatpush1.msra.mxu0 0.0
    %705 = vmatprep.subr.mxu0 0.0
    %706 = vmatpush1.msra.mxu0 0.0
    %707 = vmatprep.subr.mxu0 0.0
    %708 = vmatpush1.msra.mxu0 0.0
    %709 = vmatprep.subr.mxu0 0.0
    %710 = vmatpush1.msra.mxu0 0.0
    %711 = vmatprep.subr.mxu0 0.0
    %712 = vmatpush1.msra.mxu0 0.0
    %713 = vmatprep.subr.mxu0 0.0
    %714 = vmatpush1.msra.mxu0 0.0
    %715 = vmatprep.subr.mxu0 0.0
    %716 = vmatpush1.msra.mxu0 0.0
    %717 = vmatprep.subr.mxu0 0.0
    %718 = vmatpush1.msra.mxu0 0.0
    %719 = vmatprep.subr.mxu0 0.0
    %720 = vmatpush1.msra.mxu0 0.0
    %721 = vmatprep.subr.mxu0 0.0
    %722 = vmatpush1.msra.mxu0 0.0
    %723 = vmatprep.subr.mxu0 0.0
    %724 = vmatpush1.msra.mxu0 0.0
    %725 = vmatprep.subr.mxu0 0.0
    %726 = vmatpush1.msra.mxu0 0.0
    %727 = vmatprep.subr.mxu0 0.0
    %728 = vmatpush1.msra.mxu0 0.0
    %729 = vmatprep.subr.mxu0 0.0
    %730 = vmatpush1.msra.mxu0 0.0
    %731 = vmatprep.subr.mxu0 0.0
    %732 = vmatpush1.msra.mxu0 0.0
    %733 = vmatprep.subr.mxu0 0.0
    %734 = vmatpush1.msra.mxu0 0.0
    %735 = vmatprep.mubr.f32.mxu0 0.0
    %736 = vmatmul.mubr.f32.gmra.mrb[0].mxu0 0.0
    %v737 = vpop.f32.mrb[0].mxu0
    %v738 = vadd.f32 0.0, %v737
    %v739 = vpop.f32.mrb[0].mxu0
    %v740 = vadd.f32 0.0, %v739
    %741 = vdwg.mxu0
    %742 = vmatprep.subr.mxu0 0.0
    %743 = vmatpush1.msra.mxu0 %v442
    %744 = vmatprep.subr.mxu0 0.0
    %745 = vmatpush1.msra.mxu0 %v445
    %746 = vmatprep.subr.mxu0 0.0
    %747 = vmatpush1.msra.mxu0 %v448
    %748 = vmatprep.subr.mxu0 0.0
    %749 = vmatpush1.msra.mxu0 %v451
    %750 = vmatprep.subr.mxu0 0.0
    %751 = vmatpush1.msra.mxu0 %v454
    %752 = vmatprep.subr.mxu0 0.0
    %753 = vmatpush1.msra.mxu0 %v457
    %754 = vmatprep.subr.mxu0 0.0
    %755 = vmatpush1.msra.mxu0 %v460
    %756 = vmatprep.subr.mxu0 0.0
    %757 = vmatpush1.msra.mxu0 %v463
    %758 = vmatprep.subr.mxu0 0.0
    %759 = vmatpush1.msra.mxu0 %v466
    %760 = vmatprep.subr.mxu0 0.0
    %761 = vmatpush1.msra.mxu0 %v469
    %762 = vmatprep.subr.mxu0 0.0
    %763 = vmatpush1.msra.mxu0 %v472
    %764 = vmatprep.subr.mxu0 0.0
    %765 = vmatpush1.msra.mxu0 %v475
    %766 = vmatprep.subr.mxu0 0.0
    %767 = vmatpush1.msra.mxu0 %v478
    %768 = vmatprep.subr.mxu0 0.0
    %769 = vmatpush1.msra.mxu0 %v481
    %770 = vmatprep.subr.mxu0 0.0
    %771 = vmatpush1.msra.mxu0 %v484
    %772 = vmatprep.subr.mxu0 0.0
    %773 = vmatpush1.msra.mxu0 %v487
    %774 = vmatprep.subr.mxu0 0.0
    %775 = vmatpush1.msra.mxu0 0.0
    %776 = vmatprep.subr.mxu0 0.0
    %777 = vmatpush1.msra.mxu0 0.0
    %778 = vmatprep.subr.mxu0 0.0
    %779 = vmatpush1.msra.mxu0 0.0
    %780 = vmatprep.subr.mxu0 0.0
    %781 = vmatpush1.msra.mxu0 0.0
    %782 = vmatprep.subr.mxu0 0.0
    %783 = vmatpush1.msra.mxu0 0.0
    %784 = vmatprep.subr.mxu0 0.0
    %785 = vmatpush1.msra.mxu0 0.0
    %786 = vmatprep.subr.mxu0 0.0
    %787 = vmatpush1.msra.mxu0 0.0
    %788 = vmatprep.subr.mxu0 0.0
    %789 = vmatpush1.msra.mxu0 0.0
    %790 = vmatprep.subr.mxu0 0.0
    %791 = vmatpush1.msra.mxu0 0.0
    %792 = vmatprep.subr.mxu0 0.0
    %793 = vmatpush1.msra.mxu0 0.0
    %794 = vmatprep.subr.mxu0 0.0
    %795 = vmatpush1.msra.mxu0 0.0
    %796 = vmatprep.subr.mxu0 0.0
    %797 = vmatpush1.msra.mxu0 0.0
    %798 = vmatprep.subr.mxu0 0.0
    %799 = vmatpush1.msra.mxu0 0.0
    %800 = vmatprep.subr.mxu0 0.0
    %801 = vmatpush1.msra.mxu0 0.0
    %802 = vmatprep.subr.mxu0 0.0
    %803 = vmatpush1.msra.mxu0 0.0
    %804 = vmatprep.subr.mxu0 0.0
    %805 = vmatpush1.msra.mxu0 0.0
    %806 = vmatprep.mubr.f32.mxu0 0.0
    %807 = vmatmul.mubr.f32.gmra.mrb[0].mxu0 0.0
    %v808 = vpop.f32.mrb[0].mxu0
    %v809 = vadd.f32 0.0, %v808
    %v810 = vpop.f32.mrb[0].mxu0
    %811 = vdwg.mxu0
    %v813 = vrot.slane %v738, 2
    %v815 = vadd.f32 %v312, %v813
    %v816 = vxor.u32 %v815, 2147483648
    %v817 = vmul.f32 %v816, 1.442695
    %v818 = vpow.pop %v817
    %v819 = vadd.f32 %v818, 1.0
    %v820 = vrcp.pop %v819
    %v821 = vmul.f32 1.0, %v820
    %v823 = vrot.slane %v740, 2
    %v825 = vadd.f32 %v387, %v823
    %v826 = vxor.u32 %v825, 2147483648
    %v827 = vmul.f32 %v826, 1.442695
    %v828 = vpow.pop %v827
    %v829 = vadd.f32 %v828, 1.0
    %v830 = vrcp.pop %v829
    %v831 = vmul.f32 1.0, %v830
    %v832 = vadd.f32 %v809, %v497
    %v834 = vrot.slane %v832, 2
    %v836 = vmul.f32 %v821, %v834
    %v837 = vadd.f32 %v389, %v836
    %v838 = vtanh.pop %v837
    %v839 = vsub.f32 1.0, %v831
    %v840 = vmul.f32 %v839, %v838
    %v841 = vmul.f32 %v831, 0.0
    %v842 = vadd.f32 %v840, %v841
    %843 = vst [vmem:[#allocation2] sm:$0x3] %v670
    %s844 = scalar_lea.vmem [#allocation2], 14
    %845 = vst [vmem:[%s844 - $0x6] sm:$0xc0] %v842
    %846 = vmatprep.subr.mxu0 %v392
    %847 = vmatpush1.msra.mxu0 %v391
    %848 = vmatprep.subr.mxu0 %v395
    %849 = vmatpush1.msra.mxu0 %v394
    %850 = vmatprep.subr.mxu0 %v398
    %851 = vmatpush1.msra.mxu0 %v397
    %852 = vmatprep.subr.mxu0 %v401
    %853 = vmatpush1.msra.mxu0 %v400
    %854 = vmatprep.subr.mxu0 %v404
    %855 = vmatpush1.msra.mxu0 %v403
    %856 = vmatprep.subr.mxu0 %v407
    %857 = vmatpush1.msra.mxu0 %v406
    %858 = vmatprep.subr.mxu0 %v410
    %859 = vmatpush1.msra.mxu0 %v409
    %860 = vmatprep.subr.mxu0 %v413
    %861 = vmatpush1.msra.mxu0 %v412
    %862 = vmatprep.subr.mxu0 %v416
    %863 = vmatpush1.msra.mxu0 %v415
    %864 = vmatprep.subr.mxu0 %v419
    %865 = vmatpush1.msra.mxu0 %v418
    %866 = vmatprep.subr.mxu0 %v422
    %867 = vmatpush1.msra.mxu0 %v421
    %868 = vmatprep.subr.mxu0 %v425
    %869 = vmatpush1.msra.mxu0 %v424
    %870 = vmatprep.subr.mxu0 %v428
    %871 = vmatpush1.msra.mxu0 %v427
    %872 = vmatprep.subr.mxu0 %v431
    %873 = vmatpush1.msra.mxu0 %v430
    %874 = vmatprep.subr.mxu0 %v434
    %875 = vmatpush1.msra.mxu0 %v433
    %876 = vmatprep.subr.mxu0 %v437
    %877 = vmatpush1.msra.mxu0 %v436
    %878 = vmatprep.subr.mxu0 0.0
    %879 = vmatpush1.msra.mxu0 0.0
    %880 = vmatprep.subr.mxu0 0.0
    %881 = vmatpush1.msra.mxu0 0.0
    %882 = vmatprep.subr.mxu0 0.0
    %883 = vmatpush1.msra.mxu0 0.0
    %884 = vmatprep.subr.mxu0 0.0
    %885 = vmatpush1.msra.mxu0 0.0
    %886 = vmatprep.subr.mxu0 0.0
    %887 = vmatpush1.msra.mxu0 0.0
    %888 = vmatprep.subr.mxu0 0.0
    %889 = vmatpush1.msra.mxu0 0.0
    %890 = vmatprep.subr.mxu0 0.0
    %891 = vmatpush1.msra.mxu0 0.0
    %892 = vmatprep.subr.mxu0 0.0
    %893 = vmatpush1.msra.mxu0 0.0
    %894 = vmatprep.subr.mxu0 0.0
    %895 = vmatpush1.msra.mxu0 0.0
    %896 = vmatprep.subr.mxu0 0.0
    %897 = vmatpush1.msra.mxu0 0.0
    %898 = vmatprep.subr.mxu0 0.0
    %899 = vmatpush1.msra.mxu0 0.0
    %900 = vmatprep.subr.mxu0 0.0
    %901 = vmatpush1.msra.mxu0 0.0
    %902 = vmatprep.subr.mxu0 0.0
    %903 = vmatpush1.msra.mxu0 0.0
    %904 = vmatprep.subr.mxu0 0.0
    %905 = vmatpush1.msra.mxu0 0.0
    %906 = vmatprep.subr.mxu0 0.0
    %907 = vmatpush1.msra.mxu0 0.0
    %908 = vmatprep.subr.mxu0 0.0
    %909 = vmatpush1.msra.mxu0 0.0
    %910 = vmatprep.mubr.f32.mxu0 0.0
    %911 = vmatmul.mubr.f32.gmra.mrb[0].mxu0 %v670
    %v912 = vpop.f32.mrb[0].mxu0
    %v913 = vadd.f32 0.0, %v912
    %v914 = vpop.f32.mrb[0].mxu0
    %v915 = vadd.f32 0.0, %v914
    %916 = vdwg.mxu0
    %917 = vmatprep.subr.mxu0 0.0
    %918 = vmatpush1.msra.mxu0 %v393
    %919 = vmatprep.subr.mxu0 0.0
    %920 = vmatpush1.msra.mxu0 %v396
    %921 = vmatprep.subr.mxu0 0.0
    %922 = vmatpush1.msra.mxu0 %v399
    %923 = vmatprep.subr.mxu0 0.0
    %924 = vmatpush1.msra.mxu0 %v402
    %925 = vmatprep.subr.mxu0 0.0
    %926 = vmatpush1.msra.mxu0 %v405
    %927 = vmatprep.subr.mxu0 0.0
    %928 = vmatpush1.msra.mxu0 %v408
    %929 = vmatprep.subr.mxu0 0.0
    %930 = vmatpush1.msra.mxu0 %v411
    %931 = vmatprep.subr.mxu0 0.0
    %932 = vmatpush1.msra.mxu0 %v414
    %933 = vmatprep.subr.mxu0 0.0
    %934 = vmatpush1.msra.mxu0 %v417
    %935 = vmatprep.subr.mxu0 0.0
    %936 = vmatpush1.msra.mxu0 %v420
    %937 = vmatprep.subr.mxu0 0.0
    %938 = vmatpush1.msra.mxu0 %v423
    %939 = vmatprep.subr.mxu0 0.0
    %940 = vmatpush1.msra.mxu0 %v426
    %941 = vmatprep.subr.mxu0 0.0
    %942 = vmatpush1.msra.mxu0 %v429
    %943 = vmatprep.subr.mxu0 0.0
    %944 = vmatpush1.msra.mxu0 %v432
    %945 = vmatprep.subr.mxu0 0.0
    %946 = vmatpush1.msra.mxu0 %v435
    %947 = vmatprep.subr.mxu0 0.0
    %948 = vmatpush1.msra.mxu0 %v438
    %949 = vmatprep.subr.mxu0 0.0
    %950 = vmatpush1.msra.mxu0 0.0
    %951 = vmatprep.subr.mxu0 0.0
    %952 = vmatpush1.msra.mxu0 0.0
    %953 = vmatprep.subr.mxu0 0.0
    %954 = vmatpush1.msra.mxu0 0.0
    %955 = vmatprep.subr.mxu0 0.0
    %956 = vmatpush1.msra.mxu0 0.0
    %957 = vmatprep.subr.mxu0 0.0
    %958 = vmatpush1.msra.mxu0 0.0
    %959 = vmatprep.subr.mxu0 0.0
    %960 = vmatpush1.msra.mxu0 0.0
    %961 = vmatprep.subr.mxu0 0.0
    %962 = vmatpush1.msra.mxu0 0.0
    %963 = vmatprep.subr.mxu0 0.0
    %964 = vmatpush1.msra.mxu0 0.0
    %965 = vmatprep.subr.mxu0 0.0
    %966 = vmatpush1.msra.mxu0 0.0
    %967 = vmatprep.subr.mxu0 0.0
    %968 = vmatpush1.msra.mxu0 0.0
    %969 = vmatprep.subr.mxu0 0.0
    %970 = vmatpush1.msra.mxu0 0.0
    %971 = vmatprep.subr.mxu0 0.0
    %972 = vmatpush1.msra.mxu0 0.0
    %973 = vmatprep.subr.mxu0 0.0
    %974 = vmatpush1.msra.mxu0 0.0
    %975 = vmatprep.subr.mxu0 0.0
    %976 = vmatpush1.msra.mxu0 0.0
    %977 = vmatprep.subr.mxu0 0.0
    %978 = vmatpush1.msra.mxu0 0.0
    %979 = vmatprep.subr.mxu0 0.0
    %980 = vmatpush1.msra.mxu0 0.0
    %981 = vmatprep.mubr.f32.mxu0 0.0
    %982 = vmatmul.mubr.f32.gmra.mrb[0].mxu0 %v670
    %v983 = vpop.f32.mrb[0].mxu0
    %v984 = vadd.f32 0.0, %v983
    %v985 = vpop.f32.mrb[0].mxu0
    %986 = vdwg.mxu0
    %v988 = vrot.slane %v913, 6
    %v990 = vadd.f32 %v227, %v988
    %v991 = vxor.u32 %v990, 2147483648
    %v992 = vmul.f32 %v991, 1.442695
    %v993 = vpow.pop %v992
    %v994 = vadd.f32 %v993, 1.0
    %v995 = vrcp.pop %v994
    %v996 = vmul.f32 1.0, %v995
    %v998 = vrot.slane %v915, 6
    %v1000 = vadd.f32 %v229, %v998
    %v1001 = vxor.u32 %v1000, 2147483648
    %v1002 = vmul.f32 %v1001, 1.442695
    %v1003 = vpow.pop %v1002
    %v1004 = vadd.f32 %v1003, 1.0
    %v1005 = vrcp.pop %v1004
    %v1006 = vmul.f32 1.0, %v1005
    %v1007 = vadd.f32 %v984, %v492
    %v1009 = vrot.slane %v1007, 6
    %v1011 = vmul.f32 %v996, %v1009
    %v1012 = vadd.f32 %v304, %v1011
    %v1013 = vtanh.pop %v1012
    %v1014 = vsub.f32 1.0, %v1006
    %v1015 = vmul.f32 %v1014, %v1013
    %v1017 = vrot.slane %v670, 6
    %v1019 = vmul.f32 %v1006, %v1017
    %v1020 = vadd.f32 %v1015, %v1019
    %v1022 = vrot.slane %v842, 6
    %1024 = vmatprep.subr.mxu0 %v441
    %1025 = vmatpush1.msra.mxu0 %v440
    %1026 = vmatprep.subr.mxu0 %v444
    %1027 = vmatpush1.msra.mxu0 %v443
    %1028 = vmatprep.subr.mxu0 %v447
    %1029 = vmatpush1.msra.mxu0 %v446
    %1030 = vmatprep.subr.mxu0 %v450
    %1031 = vmatpush1.msra.mxu0 %v449
    %1032 = vmatprep.subr.mxu0 %v453
    %1033 = vmatpush1.msra.mxu0 %v452
    %1034 = vmatprep.subr.mxu0 %v456
    %1035 = vmatpush1.msra.mxu0 %v455
    %1036 = vmatprep.subr.mxu0 %v459
    %1037 = vmatpush1.msra.mxu0 %v458
    %1038 = vmatprep.subr.mxu0 %v462
    %1039 = vmatpush1.msra.mxu0 %v461
    %1040 = vmatprep.subr.mxu0 %v465
    %1041 = vmatpush1.msra.mxu0 %v464
    %1042 = vmatprep.subr.mxu0 %v468
    %1043 = vmatpush1.msra.mxu0 %v467
    %1044 = vmatprep.subr.mxu0 %v471
    %1045 = vmatpush1.msra.mxu0 %v470
    %1046 = vmatprep.subr.mxu0 %v474
    %1047 = vmatpush1.msra.mxu0 %v473
    %1048 = vmatprep.subr.mxu0 %v477
    %1049 = vmatpush1.msra.mxu0 %v476
    %1050 = vmatprep.subr.mxu0 %v480
    %1051 = vmatpush1.msra.mxu0 %v479
    %1052 = vmatprep.subr.mxu0 %v483
    %1053 = vmatpush1.msra.mxu0 %v482
    %1054 = vmatprep.subr.mxu0 %v486
    %1055 = vmatpush1.msra.mxu0 %v485
    %1056 = vmatprep.subr.mxu0 0.0
    %1057 = vmatpush1.msra.mxu0 0.0
    %1058 = vmatprep.subr.mxu0 0.0
    %1059 = vmatpush1.msra.mxu0 0.0
    %1060 = vmatprep.subr.mxu0 0.0
    %1061 = vmatpush1.msra.mxu0 0.0
    %1062 = vmatprep.subr.mxu0 0.0
    %1063 = vmatpush1.msra.mxu0 0.0
    %1064 = vmatprep.subr.mxu0 0.0
    %1065 = vmatpush1.msra.mxu0 0.0
    %1066 = vmatprep.subr.mxu0 0.0
    %1067 = vmatpush1.msra.mxu0 0.0
    %1068 = vmatprep.subr.mxu0 0.0
    %1069 = vmatpush1.msra.mxu0 0.0
    %1070 = vmatprep.subr.mxu0 0.0
    %1071 = vmatpush1.msra.mxu0 0.0
    %1072 = vmatprep.subr.mxu0 0.0
    %1073 = vmatpush1.msra.mxu0 0.0
    %1074 = vmatprep.subr.mxu0 0.0
    %1075 = vmatpush1.msra.mxu0 0.0
    %1076 = vmatprep.subr.mxu0 0.0
    %1077 = vmatpush1.msra.mxu0 0.0
    %1078 = vmatprep.subr.mxu0 0.0
    %1079 = vmatpush1.msra.mxu0 0.0
    %1080 = vmatprep.subr.mxu0 0.0
    %1081 = vmatpush1.msra.mxu0 0.0
    %1082 = vmatprep.subr.mxu0 0.0
    %1083 = vmatpush1.msra.mxu0 0.0
    %1084 = vmatprep.subr.mxu0 0.0
    %1085 = vmatpush1.msra.mxu0 0.0
    %1086 = vmatprep.subr.mxu0 0.0
    %1087 = vmatpush1.msra.mxu0 0.0
    %1088 = vmatprep.mubr.f32.mxu0 0.0
    %1089 = vmatmul.mubr.f32.gmra.mrb[0].mxu0 %v1022
    %v1090 = vpop.f32.mrb[0].mxu0
    %v1091 = vadd.f32 0.0, %v1090
    %v1092 = vpop.f32.mrb[0].mxu0
    %v1093 = vadd.f32 0.0, %v1092
    %1094 = vdwg.mxu0
    %1095 = vmatprep.subr.mxu0 0.0
    %1096 = vmatpush1.msra.mxu0 %v442
    %1097 = vmatprep.subr.mxu0 0.0
    %1098 = vmatpush1.msra.mxu0 %v445
    %1099 = vmatprep.subr.mxu0 0.0
    %1100 = vmatpush1.msra.mxu0 %v448
    %1101 = vmatprep.subr.mxu0 0.0
    %1102 = vmatpush1.msra.mxu0 %v451
    %1103 = vmatprep.subr.mxu0 0.0
    %1104 = vmatpush1.msra.mxu0 %v454
    %1105 = vmatprep.subr.mxu0 0.0
    %1106 = vmatpush1.msra.mxu0 %v457
    %1107 = vmatprep.subr.mxu0 0.0
    %1108 = vmatpush1.msra.mxu0 %v460
    %1109 = vmatprep.subr.mxu0 0.0
    %1110 = vmatpush1.msra.mxu0 %v463
    %1111 = vmatprep.subr.mxu0 0.0
    %1112 = vmatpush1.msra.mxu0 %v466
    %1113 = vmatprep.subr.mxu0 0.0
    %1114 = vmatpush1.msra.mxu0 %v469
    %1115 = vmatprep.subr.mxu0 0.0
    %1116 = vmatpush1.msra.mxu0 %v472
    %1117 = vmatprep.subr.mxu0 0.0
    %1118 = vmatpush1.msra.mxu0 %v475
    %1119 = vmatprep.subr.mxu0 0.0
    %1120 = vmatpush1.msra.mxu0 %v478
    %1121 = vmatprep.subr.mxu0 0.0
    %1122 = vmatpush1.msra.mxu0 %v481
    %1123 = vmatprep.subr.mxu0 0.0
    %1124 = vmatpush1.msra.mxu0 %v484
    %1125 = vmatprep.subr.mxu0 0.0
    %1126 = vmatpush1.msra.mxu0 %v487
    %1127 = vmatprep.subr.mxu0 0.0
    %1128 = vmatpush1.msra.mxu0 0.0
    %1129 = vmatprep.subr.mxu0 0.0
    %1130 = vmatpush1.msra.mxu0 0.0
    %1131 = vmatprep.subr.mxu0 0.0
    %1132 = vmatpush1.msra.mxu0 0.0
    %1133 = vmatprep.subr.mxu0 0.0
    %1134 = vmatpush1.msra.mxu0 0.0
    %1135 = vmatprep.subr.mxu0 0.0
    %1136 = vmatpush1.msra.mxu0 0.0
    %1137 = vmatprep.subr.mxu0 0.0
    %1138 = vmatpush1.msra.mxu0 0.0
    %1139 = vmatprep.subr.mxu0 0.0
    %1140 = vmatpush1.msra.mxu0 0.0
    %1141 = vmatprep.subr.mxu0 0.0
    %1142 = vmatpush1.msra.mxu0 0.0
    %1143 = vmatprep.subr.mxu0 0.0
    %1144 = vmatpush1.msra.mxu0 0.0
    %1145 = vmatprep.subr.mxu0 0.0
    %1146 = vmatpush1.msra.mxu0 0.0
    %1147 = vmatprep.subr.mxu0 0.0
    %1148 = vmatpush1.msra.mxu0 0.0
    %1149 = vmatprep.subr.mxu0 0.0
    %1150 = vmatpush1.msra.mxu0 0.0
    %1151 = vmatprep.subr.mxu0 0.0
    %1152 = vmatpush1.msra.mxu0 0.0
    %1153 = vmatprep.subr.mxu0 0.0
    %1154 = vmatpush1.msra.mxu0 0.0
    %1155 = vmatprep.subr.mxu0 0.0
    %1156 = vmatpush1.msra.mxu0 0.0
    %1157 = vmatprep.subr.mxu0 0.0
    %1158 = vmatpush1.msra.mxu0 0.0
    %1159 = vmatprep.mubr.f32.mxu0 0.0
    %1160 = vmatmul.mubr.f32.gmra.mrb[0].mxu0 %v1022
    %v1161 = vpop.f32.mrb[0].mxu0
    %v1162 = vadd.f32 0.0, %v1161
    %v1163 = vpop.f32.mrb[0].mxu0
    %1164 = vdwg.mxu0
    %v1166 = vrot.slane %v1091, 4
    %v1168 = vadd.f32 %v312, %v1166
    %v1169 = vxor.u32 %v1168, 2147483648
    %v1170 = vmul.f32 %v1169, 1.442695
    %v1171 = vpow.pop %v1170
    %v1172 = vadd.f32 %v1171, 1.0
    %v1173 = vrcp.pop %v1172
    %v1174 = vmul.f32 1.0, %v1173
    %v1176 = vrot.slane %v1093, 4
    %v1178 = vadd.f32 %v387, %v1176
    %v1179 = vxor.u32 %v1178, 2147483648
    %v1180 = vmul.f32 %v1179, 1.442695
    %v1181 = vpow.pop %v1180
    %v1182 = vadd.f32 %v1181, 1.0
    %v1183 = vrcp.pop %v1182
    %v1184 = vmul.f32 1.0, %v1183
    %v1185 = vadd.f32 %v1162, %v497
    %v1187 = vrot.slane %v1185, 4
    %v1189 = vmul.f32 %v1174, %v1187
    %v1190 = vadd.f32 %v389, %v1189
    %v1191 = vtanh.pop %v1190
    %v1192 = vsub.f32 1.0, %v1184
    %v1193 = vmul.f32 %v1192, %v1191
    %v1194 = vrot.slane %v842, 2
    %v1196 = vmul.f32 %v1184, %v1194
    %v1197 = vadd.f32 %v1193, %v1196
    %s1198 = scalar_lea.vmem [#allocation2], 2
    %1199 = vst [vmem:[%s1198 - $0x2] sm:$0xc] %v1020
    %s1200 = scalar_lea.vmem [#allocation2], 12
    %1201 = vst [vmem:[%s1200 - $0x4] sm:$0x30] %v1197
    %v1203 = vrot.slane %v1020, 2
    %1205 = vmatprep.subr.mxu0 %v392
    %1206 = vmatpush1.msra.mxu0 %v391
    %1207 = vmatprep.subr.mxu0 %v395
    %1208 = vmatpush1.msra.mxu0 %v394
    %1209 = vmatprep.subr.mxu0 %v398
    %1210 = vmatpush1.msra.mxu0 %v397
    %1211 = vmatprep.subr.mxu0 %v401
    %1212 = vmatpush1.msra.mxu0 %v400
    %1213 = vmatprep.subr.mxu0 %v404
    %1214 = vmatpush1.msra.mxu0 %v403
    %1215 = vmatprep.subr.mxu0 %v407
    %1216 = vmatpush1.msra.mxu0 %v406
    %1217 = vmatprep.subr.mxu0 %v410
    %1218 = vmatpush1.msra.mxu0 %v409
    %1219 = vmatprep.subr.mxu0 %v413
    %1220 = vmatpush1.msra.mxu0 %v412
    %1221 = vmatprep.subr.mxu0 %v416
    %1222 = vmatpush1.msra.mxu0 %v415
    %1223 = vmatprep.subr.mxu0 %v419
    %1224 = vmatpush1.msra.mxu0 %v418
    %1225 = vmatprep.subr.mxu0 %v422
    %1226 = vmatpush1.msra.mxu0 %v421
    %1227 = vmatprep.subr.mxu0 %v425
    %1228 = vmatpush1.msra.mxu0 %v424
    %1229 = vmatprep.subr.mxu0 %v428
    %1230 = vmatpush1.msra.mxu0 %v427
    %1231 = vmatprep.subr.mxu0 %v431
    %1232 = vmatpush1.msra.mxu0 %v430
    %1233 = vmatprep.subr.mxu0 %v434
    %1234 = vmatpush1.msra.mxu0 %v433
    %1235 = vmatprep.subr.mxu0 %v437
    %1236 = vmatpush1.msra.mxu0 %v436
    %1237 = vmatprep.subr.mxu0 0.0
    %1238 = vmatpush1.msra.mxu0 0.0
    %1239 = vmatprep.subr.mxu0 0.0
    %1240 = vmatpush1.msra.mxu0 0.0
    %1241 = vmatprep.subr.mxu0 0.0
    %1242 = vmatpush1.msra.mxu0 0.0
    %1243 = vmatprep.subr.mxu0 0.0
    %1244 = vmatpush1.msra.mxu0 0.0
    %1245 = vmatprep.subr.mxu0 0.0
    %1246 = vmatpush1.msra.mxu0 0.0
    %1247 = vmatprep.subr.mxu0 0.0
    %1248 = vmatpush1.msra.mxu0 0.0
    %1249 = vmatprep.subr.mxu0 0.0
    %1250 = vmatpush1.msra.mxu0 0.0
    %1251 = vmatprep.subr.mxu0 0.0
    %1252 = vmatpush1.msra.mxu0 0.0
    %1253 = vmatprep.subr.mxu0 0.0
    %1254 = vmatpush1.msra.mxu0 0.0
    %1255 = vmatprep.subr.mxu0 0.0
    %1256 = vmatpush1.msra.mxu0 0.0
    %1257 = vmatprep.subr.mxu0 0.0
    %1258 = vmatpush1.msra.mxu0 0.0
    %1259 = vmatprep.subr.mxu0 0.0
    %1260 = vmatpush1.msra.mxu0 0.0
    %1261 = vmatprep.subr.mxu0 0.0
    %1262 = vmatpush1.msra.mxu0 0.0
    %1263 = vmatprep.subr.mxu0 0.0
    %1264 = vmatpush1.msra.mxu0 0.0
    %1265 = vmatprep.subr.mxu0 0.0
    %1266 = vmatpush1.msra.mxu0 0.0
    %1267 = vmatprep.subr.mxu0 0.0
    %1268 = vmatpush1.msra.mxu0 0.0
    %1269 = vmatprep.mubr.f32.mxu0 0.0
    %1270 = vmatmul.mubr.f32.gmra.mrb[0].mxu0 %v1203
    %v1271 = vpop.f32.mrb[0].mxu0
    %v1272 = vadd.f32 0.0, %v1271
    %v1273 = vpop.f32.mrb[0].mxu0
    %v1274 = vadd.f32 0.0, %v1273
    %1275 = vdwg.mxu0
    %1276 = vmatprep.subr.mxu0 0.0
    %1277 = vmatpush1.msra.mxu0 %v393
    %1278 = vmatprep.subr.mxu0 0.0
    %1279 = vmatpush1.msra.mxu0 %v396
    %1280 = vmatprep.subr.mxu0 0.0
    %1281 = vmatpush1.msra.mxu0 %v399
    %1282 = vmatprep.subr.mxu0 0.0
    %1283 = vmatpush1.msra.mxu0 %v402
    %1284 = vmatprep.subr.mxu0 0.0
    %1285 = vmatpush1.msra.mxu0 %v405
    %1286 = vmatprep.subr.mxu0 0.0
    %1287 = vmatpush1.msra.mxu0 %v408
    %1288 = vmatprep.subr.mxu0 0.0
    %1289 = vmatpush1.msra.mxu0 %v411
    %1290 = vmatprep.subr.mxu0 0.0
    %1291 = vmatpush1.msra.mxu0 %v414
    %1292 = vmatprep.subr.mxu0 0.0
    %1293 = vmatpush1.msra.mxu0 %v417
    %1294 = vmatprep.subr.mxu0 0.0
    %1295 = vmatpush1.msra.mxu0 %v420
    %1296 = vmatprep.subr.mxu0 0.0
    %1297 = vmatpush1.msra.mxu0 %v423
    %1298 = vmatprep.subr.mxu0 0.0
    %1299 = vmatpush1.msra.mxu0 %v426
    %1300 = vmatprep.subr.mxu0 0.0
    %1301 = vmatpush1.msra.mxu0 %v429
    %1302 = vmatprep.subr.mxu0 0.0
    %1303 = vmatpush1.msra.mxu0 %v432
    %1304 = vmatprep.subr.mxu0 0.0
    %1305 = vmatpush1.msra.mxu0 %v435
    %1306 = vmatprep.subr.mxu0 0.0
    %1307 = vmatpush1.msra.mxu0 %v438
    %1308 = vmatprep.subr.mxu0 0.0
    %1309 = vmatpush1.msra.mxu0 0.0
    %1310 = vmatprep.subr.mxu0 0.0
    %1311 = vmatpush1.msra.mxu0 0.0
    %1312 = vmatprep.subr.mxu0 0.0
    %1313 = vmatpush1.msra.mxu0 0.0
    %1314 = vmatprep.subr.mxu0 0.0
    %1315 = vmatpush1.msra.mxu0 0.0
    %1316 = vmatprep.subr.mxu0 0.0
    %1317 = vmatpush1.msra.mxu0 0.0
    %1318 = vmatprep.subr.mxu0 0.0
    %1319 = vmatpush1.msra.mxu0 0.0
    %1320 = vmatprep.subr.mxu0 0.0
    %1321 = vmatpush1.msra.mxu0 0.0
    %1322 = vmatprep.subr.mxu0 0.0
    %1323 = vmatpush1.msra.mxu0 0.0
    %1324 = vmatprep.subr.mxu0 0.0
    %1325 = vmatpush1.msra.mxu0 0.0
    %1326 = vmatprep.subr.mxu0 0.0
    %1327 = vmatpush1.msra.mxu0 0.0
    %1328 = vmatprep.subr.mxu0 0.0
    %1329 = vmatpush1.msra.mxu0 0.0
    %1330 = vmatprep.subr.mxu0 0.0
    %1331 = vmatpush1.msra.mxu0 0.0
    %1332 = vmatprep.subr.mxu0 0.0
    %1333 = vmatpush1.msra.mxu0 0.0
    %1334 = vmatprep.subr.mxu0 0.0
    %1335 = vmatpush1.msra.mxu0 0.0
    %1336 = vmatprep.subr.mxu0 0.0
    %1337 = vmatpush1.msra.mxu0 0.0
    %1338 = vmatprep.subr.mxu0 0.0
    %1339 = vmatpush1.msra.mxu0 0.0
    %1340 = vmatprep.mubr.f32.mxu0 0.0
    %1341 = vmatmul.mubr.f32.gmra.mrb[0].mxu0 %v1203
    %v1342 = vpop.f32.mrb[0].mxu0
    %v1343 = vadd.f32 0.0, %v1342
    %v1344 = vpop.f32.mrb[0].mxu0
    %1345 = vdwg.mxu0
    %v1347 = vrot.slane %v1272, 4
    %v1349 = vadd.f32 %v227, %v1347
    %v1350 = vxor.u32 %v1349, 2147483648
    %v1351 = vmul.f32 %v1350, 1.442695
    %v1352 = vpow.pop %v1351
    %v1353 = vadd.f32 %v1352, 1.0
    %v1354 = vrcp.pop %v1353
    %v1355 = vmul.f32 1.0, %v1354
    %v1357 = vrot.slane %v1274, 4
    %v1359 = vadd.f32 %v229, %v1357
    %v1360 = vxor.u32 %v1359, 2147483648
    %v1361 = vmul.f32 %v1360, 1.442695
    %v1362 = vpow.pop %v1361
    %v1363 = vadd.f32 %v1362, 1.0
    %v1364 = vrcp.pop %v1363
    %v1365 = vmul.f32 1.0, %v1364
    %v1366 = vadd.f32 %v1343, %v492
    %v1368 = vrot.slane %v1366, 4
    %v1370 = vmul.f32 %v1355, %v1368
    %v1371 = vadd.f32 %v304, %v1370
    %v1372 = vtanh.pop %v1371
    %v1373 = vsub.f32 1.0, %v1365
    %v1374 = vmul.f32 %v1373, %v1372
    %v1375 = vrot.slane %v1020, 6
    %v1377 = vmul.f32 %v1365, %v1375
    %v1378 = vadd.f32 %v1374, %v1377
    %v1380 = vrot.slane %v1197, 4
    %1382 = vmatprep.subr.mxu0 %v441
    %1383 = vmatpush1.msra.mxu0 %v440
    %1384 = vmatprep.subr.mxu0 %v444
    %1385 = vmatpush1.msra.mxu0 %v443
    %1386 = vmatprep.subr.mxu0 %v447
    %1387 = vmatpush1.msra.mxu0 %v446
    %1388 = vmatprep.subr.mxu0 %v450
    %1389 = vmatpush1.msra.mxu0 %v449
    %1390 = vmatprep.subr.mxu0 %v453
    %1391 = vmatpush1.msra.mxu0 %v452
    %1392 = vmatprep.subr.mxu0 %v456
    %1393 = vmatpush1.msra.mxu0 %v455
    %1394 = vmatprep.subr.mxu0 %v459
    %1395 = vmatpush1.msra.mxu0 %v458
    %1396 = vmatprep.subr.mxu0 %v462
    %1397 = vmatpush1.msra.mxu0 %v461
    %1398 = vmatprep.subr.mxu0 %v465
    %1399 = vmatpush1.msra.mxu0 %v464
    %1400 = vmatprep.subr.mxu0 %v468
    %1401 = vmatpush1.msra.mxu0 %v467
    %1402 = vmatprep.subr.mxu0 %v471
    %1403 = vmatpush1.msra.mxu0 %v470
    %1404 = vmatprep.subr.mxu0 %v474
    %1405 = vmatpush1.msra.mxu0 %v473
    %1406 = vmatprep.subr.mxu0 %v477
    %1407 = vmatpush1.msra.mxu0 %v476
    %1408 = vmatprep.subr.mxu0 %v480
    %1409 = vmatpush1.msra.mxu0 %v479
    %1410 = vmatprep.subr.mxu0 %v483
    %1411 = vmatpush1.msra.mxu0 %v482
    %1412 = vmatprep.subr.mxu0 %v486
    %1413 = vmatpush1.msra.mxu0 %v485
    %1414 = vmatprep.subr.mxu0 0.0
    %1415 = vmatpush1.msra.mxu0 0.0
    %1416 = vmatprep.subr.mxu0 0.0
    %1417 = vmatpush1.msra.mxu0 0.0
    %1418 = vmatprep.subr.mxu0 0.0
    %1419 = vmatpush1.msra.mxu0 0.0
    %1420 = vmatprep.subr.mxu0 0.0
    %1421 = vmatpush1.msra.mxu0 0.0
    %1422 = vmatprep.subr.mxu0 0.0
    %1423 = vmatpush1.msra.mxu0 0.0
    %1424 = vmatprep.subr.mxu0 0.0
    %1425 = vmatpush1.msra.mxu0 0.0
    %1426 = vmatprep.subr.mxu0 0.0
    %1427 = vmatpush1.msra.mxu0 0.0
    %1428 = vmatprep.subr.mxu0 0.0
    %1429 = vmatpush1.msra.mxu0 0.0
    %1430 = vmatprep.subr.mxu0 0.0
    %1431 = vmatpush1.msra.mxu0 0.0
    %1432 = vmatprep.subr.mxu0 0.0
    %1433 = vmatpush1.msra.mxu0 0.0
    %1434 = vmatprep.subr.mxu0 0.0
    %1435 = vmatpush1.msra.mxu0 0.0
    %1436 = vmatprep.subr.mxu0 0.0
    %1437 = vmatpush1.msra.mxu0 0.0
    %1438 = vmatprep.subr.mxu0 0.0
    %1439 = vmatpush1.msra.mxu0 0.0
    %1440 = vmatprep.subr.mxu0 0.0
    %1441 = vmatpush1.msra.mxu0 0.0
    %1442 = vmatprep.subr.mxu0 0.0
    %1443 = vmatpush1.msra.mxu0 0.0
    %1444 = vmatprep.subr.mxu0 0.0
    %1445 = vmatpush1.msra.mxu0 0.0
    %1446 = vmatprep.mubr.f32.mxu0 0.0
    %1447 = vmatmul.mubr.f32.gmra.mrb[0].mxu0 %v1380
    %v1448 = vpop.f32.mrb[0].mxu0
    %v1449 = vadd.f32 0.0, %v1448
    %v1450 = vpop.f32.mrb[0].mxu0
    %v1451 = vadd.f32 0.0, %v1450
    %1452 = vdwg.mxu0
    %1453 = vmatprep.subr.mxu0 0.0
    %1454 = vmatpush1.msra.mxu0 %v442
    %1455 = vmatprep.subr.mxu0 0.0
    %1456 = vmatpush1.msra.mxu0 %v445
    %1457 = vmatprep.subr.mxu0 0.0
    %1458 = vmatpush1.msra.mxu0 %v448
    %1459 = vmatprep.subr.mxu0 0.0
    %1460 = vmatpush1.msra.mxu0 %v451
    %1461 = vmatprep.subr.mxu0 0.0
    %1462 = vmatpush1.msra.mxu0 %v454
    %1463 = vmatprep.subr.mxu0 0.0
    %1464 = vmatpush1.msra.mxu0 %v457
    %1465 = vmatprep.subr.mxu0 0.0
    %1466 = vmatpush1.msra.mxu0 %v460
    %1467 = vmatprep.subr.mxu0 0.0
    %1468 = vmatpush1.msra.mxu0 %v463
    %1469 = vmatprep.subr.mxu0 0.0
    %1470 = vmatpush1.msra.mxu0 %v466
    %1471 = vmatprep.subr.mxu0 0.0
    %1472 = vmatpush1.msra.mxu0 %v469
    %1473 = vmatprep.subr.mxu0 0.0
    %1474 = vmatpush1.msra.mxu0 %v472
    %1475 = vmatprep.subr.mxu0 0.0
    %1476 = vmatpush1.msra.mxu0 %v475
    %1477 = vmatprep.subr.mxu0 0.0
    %1478 = vmatpush1.msra.mxu0 %v478
    %1479 = vmatprep.subr.mxu0 0.0
    %1480 = vmatpush1.msra.mxu0 %v481
    %1481 = vmatprep.subr.mxu0 0.0
    %1482 = vmatpush1.msra.mxu0 %v484
    %1483 = vmatprep.subr.mxu0 0.0
    %1484 = vmatpush1.msra.mxu0 %v487
    %1485 = vmatprep.subr.mxu0 0.0
    %1486 = vmatpush1.msra.mxu0 0.0
    %1487 = vmatprep.subr.mxu0 0.0
    %1488 = vmatpush1.msra.mxu0 0.0
    %1489 = vmatprep.subr.mxu0 0.0
    %1490 = vmatpush1.msra.mxu0 0.0
    %1491 = vmatprep.subr.mxu0 0.0
    %1492 = vmatpush1.msra.mxu0 0.0
    %1493 = vmatprep.subr.mxu0 0.0
    %1494 = vmatpush1.msra.mxu0 0.0
    %1495 = vmatprep.subr.mxu0 0.0
    %1496 = vmatpush1.msra.mxu0 0.0
    %1497 = vmatprep.subr.mxu0 0.0
    %1498 = vmatpush1.msra.mxu0 0.0
    %1499 = vmatprep.subr.mxu0 0.0
    %1500 = vmatpush1.msra.mxu0 0.0
    %1501 = vmatprep.subr.mxu0 0.0
    %1502 = vmatpush1.msra.mxu0 0.0
    %1503 = vmatprep.subr.mxu0 0.0
    %1504 = vmatpush1.msra.mxu0 0.0
    %1505 = vmatprep.subr.mxu0 0.0
    %1506 = vmatpush1.msra.mxu0 0.0
    %1507 = vmatprep.subr.mxu0 0.0
    %1508 = vmatpush1.msra.mxu0 0.0
    %1509 = vmatprep.subr.mxu0 0.0
    %1510 = vmatpush1.msra.mxu0 0.0
    %1511 = vmatprep.subr.mxu0 0.0
    %1512 = vmatpush1.msra.mxu0 0.0
    %1513 = vmatprep.subr.mxu0 0.0
    %1514 = vmatpush1.msra.mxu0 0.0
    %1515 = vmatprep.subr.mxu0 0.0
    %1516 = vmatpush1.msra.mxu0 0.0
    %1517 = vmatprep.mubr.f32.mxu0 0.0
    %1518 = vmatmul.mubr.f32.gmra.mrb[0].mxu0 %v1380
    %v1519 = vpop.f32.mrb[0].mxu0
    %v1520 = vadd.f32 0.0, %v1519
    %v1521 = vpop.f32.mrb[0].mxu0
    %1522 = vdwg.mxu0
    %v1524 = vrot.slane %v1449, 6
    %v1526 = vadd.f32 %v312, %v1524
    %v1527 = vxor.u32 %v1526, 2147483648
    %v1528 = vmul.f32 %v1527, 1.442695
    %v1529 = vpow.pop %v1528
    %v1530 = vadd.f32 %v1529, 1.0
    %v1531 = vrcp.pop %v1530
    %v1532 = vmul.f32 1.0, %v1531
    %v1534 = vrot.slane %v1451, 6
    %v1536 = vadd.f32 %v387, %v1534
    %v1537 = vxor.u32 %v1536, 2147483648
    %v1538 = vmul.f32 %v1537, 1.442695
    %v1539 = vpow.pop %v1538
    %v1540 = vadd.f32 %v1539, 1.0
    %v1541 = vrcp.pop %v1540
    %v1542 = vmul.f32 1.0, %v1541
    %v1543 = vadd.f32 %v1520, %v497
    %v1545 = vrot.slane %v1543, 6
    %v1547 = vmul.f32 %v1532, %v1545
    %v1548 = vadd.f32 %v389, %v1547
    %v1549 = vtanh.pop %v1548
    %v1550 = vsub.f32 1.0, %v1542
    %v1551 = vmul.f32 %v1550, %v1549
    %v1552 = vrot.slane %v1197, 2
    %v1554 = vmul.f32 %v1542, %v1552
    %v1555 = vadd.f32 %v1551, %v1554
    %s1556 = scalar_lea.vmem [#allocation2], 4
    %1557 = vst [vmem:[%s1556 - $0x4] sm:$0x30] %v1378
    %s1558 = scalar_lea.vmem [#allocation2], 10
    %1559 = vst [vmem:[%s1558 - $0x2] sm:$0xc] %v1555
    %v1561 = vrot.slane %v1378, 4
    %1563 = vmatprep.subr.mxu0 %v392
    %1564 = vmatpush1.msra.mxu0 %v391
    %1565 = vmatprep.subr.mxu0 %v395
    %1566 = vmatpush1.msra.mxu0 %v394
    %1567 = vmatprep.subr.mxu0 %v398
    %1568 = vmatpush1.msra.mxu0 %v397
    %1569 = vmatprep.subr.mxu0 %v401
    %1570 = vmatpush1.msra.mxu0 %v400
    %1571 = vmatprep.subr.mxu0 %v404
    %1572 = vmatpush1.msra.mxu0 %v403
    %1573 = vmatprep.subr.mxu0 %v407
    %1574 = vmatpush1.msra.mxu0 %v406
    %1575 = vmatprep.subr.mxu0 %v410
    %1576 = vmatpush1.msra.mxu0 %v409
    %1577 = vmatprep.subr.mxu0 %v413
    %1578 = vmatpush1.msra.mxu0 %v412
    %1579 = vmatprep.subr.mxu0 %v416
    %1580 = vmatpush1.msra.mxu0 %v415
    %1581 = vmatprep.subr.mxu0 %v419
    %1582 = vmatpush1.msra.mxu0 %v418
    %1583 = vmatprep.subr.mxu0 %v422
    %1584 = vmatpush1.msra.mxu0 %v421
    %1585 = vmatprep.subr.mxu0 %v425
    %1586 = vmatpush1.msra.mxu0 %v424
    %1587 = vmatprep.subr.mxu0 %v428
    %1588 = vmatpush1.msra.mxu0 %v427
    %1589 = vmatprep.subr.mxu0 %v431
    %1590 = vmatpush1.msra.mxu0 %v430
    %1591 = vmatprep.subr.mxu0 %v434
    %1592 = vmatpush1.msra.mxu0 %v433
    %1593 = vmatprep.subr.mxu0 %v437
    %1594 = vmatpush1.msra.mxu0 %v436
    %1595 = vmatprep.subr.mxu0 0.0
    %1596 = vmatpush1.msra.mxu0 0.0
    %1597 = vmatprep.subr.mxu0 0.0
    %1598 = vmatpush1.msra.mxu0 0.0
    %1599 = vmatprep.subr.mxu0 0.0
    %1600 = vmatpush1.msra.mxu0 0.0
    %1601 = vmatprep.subr.mxu0 0.0
    %1602 = vmatpush1.msra.mxu0 0.0
    %1603 = vmatprep.subr.mxu0 0.0
    %1604 = vmatpush1.msra.mxu0 0.0
    %1605 = vmatprep.subr.mxu0 0.0
    %1606 = vmatpush1.msra.mxu0 0.0
    %1607 = vmatprep.subr.mxu0 0.0
    %1608 = vmatpush1.msra.mxu0 0.0
    %1609 = vmatprep.subr.mxu0 0.0
    %1610 = vmatpush1.msra.mxu0 0.0
    %1611 = vmatprep.subr.mxu0 0.0
    %1612 = vmatpush1.msra.mxu0 0.0
    %1613 = vmatprep.subr.mxu0 0.0
    %1614 = vmatpush1.msra.mxu0 0.0
    %1615 = vmatprep.subr.mxu0 0.0
    %1616 = vmatpush1.msra.mxu0 0.0
    %1617 = vmatprep.subr.mxu0 0.0
    %1618 = vmatpush1.msra.mxu0 0.0
    %1619 = vmatprep.subr.mxu0 0.0
    %1620 = vmatpush1.msra.mxu0 0.0
    %1621 = vmatprep.subr.mxu0 0.0
    %1622 = vmatpush1.msra.mxu0 0.0
    %1623 = vmatprep.subr.mxu0 0.0
    %1624 = vmatpush1.msra.mxu0 0.0
    %1625 = vmatprep.subr.mxu0 0.0
    %1626 = vmatpush1.msra.mxu0 0.0
    %1627 = vmatprep.mubr.f32.mxu0 0.0
    %1628 = vmatmul.mubr.f32.gmra.mrb[0].mxu0 %v1561
    %v1629 = vpop.f32.mrb[0].mxu0
    %v1630 = vadd.f32 0.0, %v1629
    %v1631 = vpop.f32.mrb[0].mxu0
    %v1632 = vadd.f32 0.0, %v1631
    %1633 = vdwg.mxu0
    %1634 = vmatprep.subr.mxu0 0.0
    %1635 = vmatpush1.msra.mxu0 %v393
    %1636 = vmatprep.subr.mxu0 0.0
    %1637 = vmatpush1.msra.mxu0 %v396
    %1638 = vmatprep.subr.mxu0 0.0
    %1639 = vmatpush1.msra.mxu0 %v399
    %1640 = vmatprep.subr.mxu0 0.0
    %1641 = vmatpush1.msra.mxu0 %v402
    %1642 = vmatprep.subr.mxu0 0.0
    %1643 = vmatpush1.msra.mxu0 %v405
    %1644 = vmatprep.subr.mxu0 0.0
    %1645 = vmatpush1.msra.mxu0 %v408
    %1646 = vmatprep.subr.mxu0 0.0
    %1647 = vmatpush1.msra.mxu0 %v411
    %1648 = vmatprep.subr.mxu0 0.0
    %1649 = vmatpush1.msra.mxu0 %v414
    %1650 = vmatprep.subr.mxu0 0.0
    %1651 = vmatpush1.msra.mxu0 %v417
    %1652 = vmatprep.subr.mxu0 0.0
    %1653 = vmatpush1.msra.mxu0 %v420
    %1654 = vmatprep.subr.mxu0 0.0
    %1655 = vmatpush1.msra.mxu0 %v423
    %1656 = vmatprep.subr.mxu0 0.0
    %1657 = vmatpush1.msra.mxu0 %v426
    %1658 = vmatprep.subr.mxu0 0.0
    %1659 = vmatpush1.msra.mxu0 %v429
    %1660 = vmatprep.subr.mxu0 0.0
    %1661 = vmatpush1.msra.mxu0 %v432
    %1662 = vmatprep.subr.mxu0 0.0
    %1663 = vmatpush1.msra.mxu0 %v435
    %1664 = vmatprep.subr.mxu0 0.0
    %1665 = vmatpush1.msra.mxu0 %v438
    %1666 = vmatprep.subr.mxu0 0.0
    %1667 = vmatpush1.msra.mxu0 0.0
    %1668 = vmatprep.subr.mxu0 0.0
    %1669 = vmatpush1.msra.mxu0 0.0
    %1670 = vmatprep.subr.mxu0 0.0
    %1671 = vmatpush1.msra.mxu0 0.0
    %1672 = vmatprep.subr.mxu0 0.0
    %1673 = vmatpush1.msra.mxu0 0.0
    %1674 = vmatprep.subr.mxu0 0.0
    %1675 = vmatpush1.msra.mxu0 0.0
    %1676 = vmatprep.subr.mxu0 0.0
    %1677 = vmatpush1.msra.mxu0 0.0
    %1678 = vmatprep.subr.mxu0 0.0
    %1679 = vmatpush1.msra.mxu0 0.0
    %1680 = vmatprep.subr.mxu0 0.0
    %1681 = vmatpush1.msra.mxu0 0.0
    %1682 = vmatprep.subr.mxu0 0.0
    %1683 = vmatpush1.msra.mxu0 0.0
    %1684 = vmatprep.subr.mxu0 0.0
    %1685 = vmatpush1.msra.mxu0 0.0
    %1686 = vmatprep.subr.mxu0 0.0
    %1687 = vmatpush1.msra.mxu0 0.0
    %1688 = vmatprep.subr.mxu0 0.0
    %1689 = vmatpush1.msra.mxu0 0.0
    %1690 = vmatprep.subr.mxu0 0.0
    %1691 = vmatpush1.msra.mxu0 0.0
    %1692 = vmatprep.subr.mxu0 0.0
    %1693 = vmatpush1.msra.mxu0 0.0
    %1694 = vmatprep.subr.mxu0 0.0
    %1695 = vmatpush1.msra.mxu0 0.0
    %1696 = vmatprep.subr.mxu0 0.0
    %1697 = vmatpush1.msra.mxu0 0.0
    %1698 = vmatprep.mubr.f32.mxu0 0.0
    %1699 = vmatmul.mubr.f32.gmra.mrb[0].mxu0 %v1561
    %v1700 = vpop.f32.mrb[0].mxu0
    %v1701 = vadd.f32 0.0, %v1700
    %v1702 = vpop.f32.mrb[0].mxu0
    %1703 = vdwg.mxu0
    %v1705 = vrot.slane %v1630, 2
    %v1707 = vadd.f32 %v227, %v1705
    %v1708 = vxor.u32 %v1707, 2147483648
    %v1709 = vmul.f32 %v1708, 1.442695
    %v1710 = vpow.pop %v1709
    %v1711 = vadd.f32 %v1710, 1.0
    %v1712 = vrcp.pop %v1711
    %v1713 = vmul.f32 1.0, %v1712
    %v1715 = vrot.slane %v1632, 2
    %v1717 = vadd.f32 %v229, %v1715
    %v1718 = vxor.u32 %v1717, 2147483648
    %v1719 = vmul.f32 %v1718, 1.442695
    %v1720 = vpow.pop %v1719
    %v1721 = vadd.f32 %v1720, 1.0
    %v1722 = vrcp.pop %v1721
    %v1723 = vmul.f32 1.0, %v1722
    %v1724 = vadd.f32 %v1701, %v492
    %v1726 = vrot.slane %v1724, 2
    %v1728 = vmul.f32 %v1713, %v1726
    %v1729 = vadd.f32 %v304, %v1728
    %v1730 = vtanh.pop %v1729
    %v1731 = vsub.f32 1.0, %v1723
    %v1732 = vmul.f32 %v1731, %v1730
    %v1733 = vrot.slane %v1378, 6
    %v1735 = vmul.f32 %v1723, %v1733
    %v1736 = vadd.f32 %v1732, %v1735
    %v1738 = vrot.slane %v1555, 2
    %1740 = vmatprep.subr.mxu0 %v441
    %1741 = vmatpush1.msra.mxu0 %v440
    %1742 = vmatprep.subr.mxu0 %v444
    %1743 = vmatpush1.msra.mxu0 %v443
    %1744 = vmatprep.subr.mxu0 %v447
    %1745 = vmatpush1.msra.mxu0 %v446
    %1746 = vmatprep.subr.mxu0 %v450
    %1747 = vmatpush1.msra.mxu0 %v449
    %1748 = vmatprep.subr.mxu0 %v453
    %1749 = vmatpush1.msra.mxu0 %v452
    %1750 = vmatprep.subr.mxu0 %v456
    %1751 = vmatpush1.msra.mxu0 %v455
    %1752 = vmatprep.subr.mxu0 %v459
    %1753 = vmatpush1.msra.mxu0 %v458
    %1754 = vmatprep.subr.mxu0 %v462
    %1755 = vmatpush1.msra.mxu0 %v461
    %1756 = vmatprep.subr.mxu0 %v465
    %1757 = vmatpush1.msra.mxu0 %v464
    %1758 = vmatprep.subr.mxu0 %v468
    %1759 = vmatpush1.msra.mxu0 %v467
    %1760 = vmatprep.subr.mxu0 %v471
    %1761 = vmatpush1.msra.mxu0 %v470
    %1762 = vmatprep.subr.mxu0 %v474
    %1763 = vmatpush1.msra.mxu0 %v473
    %1764 = vmatprep.subr.mxu0 %v477
    %1765 = vmatpush1.msra.mxu0 %v476
    %1766 = vmatprep.subr.mxu0 %v480
    %1767 = vmatpush1.msra.mxu0 %v479
    %1768 = vmatprep.subr.mxu0 %v483
    %1769 = vmatpush1.msra.mxu0 %v482
    %1770 = vmatprep.subr.mxu0 %v486
    %1771 = vmatpush1.msra.mxu0 %v485
    %1772 = vmatprep.subr.mxu0 0.0
    %1773 = vmatpush1.msra.mxu0 0.0
    %1774 = vmatprep.subr.mxu0 0.0
    %1775 = vmatpush1.msra.mxu0 0.0
    %1776 = vmatprep.subr.mxu0 0.0
    %1777 = vmatpush1.msra.mxu0 0.0
    %1778 = vmatprep.subr.mxu0 0.0
    %1779 = vmatpush1.msra.mxu0 0.0
    %1780 = vmatprep.subr.mxu0 0.0
    %1781 = vmatpush1.msra.mxu0 0.0
    %1782 = vmatprep.subr.mxu0 0.0
    %1783 = vmatpush1.msra.mxu0 0.0
    %1784 = vmatprep.subr.mxu0 0.0
    %1785 = vmatpush1.msra.mxu0 0.0
    %1786 = vmatprep.subr.mxu0 0.0
    %1787 = vmatpush1.msra.mxu0 0.0
    %1788 = vmatprep.subr.mxu0 0.0
    %1789 = vmatpush1.msra.mxu0 0.0
    %1790 = vmatprep.subr.mxu0 0.0
    %1791 = vmatpush1.msra.mxu0 0.0
    %1792 = vmatprep.subr.mxu0 0.0
    %1793 = vmatpush1.msra.mxu0 0.0
    %1794 = vmatprep.subr.mxu0 0.0
    %1795 = vmatpush1.msra.mxu0 0.0
    %1796 = vmatprep.subr.mxu0 0.0
    %1797 = vmatpush1.msra.mxu0 0.0
    %1798 = vmatprep.subr.mxu0 0.0
    %1799 = vmatpush1.msra.mxu0 0.0
    %1800 = vmatprep.subr.mxu0 0.0
    %1801 = vmatpush1.msra.mxu0 0.0
    %1802 = vmatprep.subr.mxu0 0.0
    %1803 = vmatpush1.msra.mxu0 0.0
    %1804 = vmatprep.mubr.f32.mxu0 0.0
    %1805 = vmatmul.mubr.f32.gmra.mrb[0].mxu0 %v1738
    %v1806 = vpop.f32.mrb[0].mxu0
    %v1807 = vadd.f32 0.0, %v1806
    %v1808 = vpop.f32.mrb[0].mxu0
    %v1809 = vadd.f32 0.0, %v1808
    %1810 = vdwg.mxu0
    %1811 = vmatprep.subr.mxu0 0.0
    %1812 = vmatpush1.msra.mxu0 %v442
    %1813 = vmatprep.subr.mxu0 0.0
    %1814 = vmatpush1.msra.mxu0 %v445
    %1815 = vmatprep.subr.mxu0 0.0
    %1816 = vmatpush1.msra.mxu0 %v448
    %1817 = vmatprep.subr.mxu0 0.0
    %1818 = vmatpush1.msra.mxu0 %v451
    %1819 = vmatprep.subr.mxu0 0.0
    %1820 = vmatpush1.msra.mxu0 %v454
    %1821 = vmatprep.subr.mxu0 0.0
    %1822 = vmatpush1.msra.mxu0 %v457
    %1823 = vmatprep.subr.mxu0 0.0
    %1824 = vmatpush1.msra.mxu0 %v460
    %1825 = vmatprep.subr.mxu0 0.0
    %1826 = vmatpush1.msra.mxu0 %v463
    %1827 = vmatprep.subr.mxu0 0.0
    %1828 = vmatpush1.msra.mxu0 %v466
    %1829 = vmatprep.subr.mxu0 0.0
    %1830 = vmatpush1.msra.mxu0 %v469
    %1831 = vmatprep.subr.mxu0 0.0
    %1832 = vmatpush1.msra.mxu0 %v472
    %1833 = vmatprep.subr.mxu0 0.0
    %1834 = vmatpush1.msra.mxu0 %v475
    %1835 = vmatprep.subr.mxu0 0.0
    %1836 = vmatpush1.msra.mxu0 %v478
    %1837 = vmatprep.subr.mxu0 0.0
    %1838 = vmatpush1.msra.mxu0 %v481
    %1839 = vmatprep.subr.mxu0 0.0
    %1840 = vmatpush1.msra.mxu0 %v484
    %1841 = vmatprep.subr.mxu0 0.0
    %1842 = vmatpush1.msra.mxu0 %v487
    %1843 = vmatprep.subr.mxu0 0.0
    %1844 = vmatpush1.msra.mxu0 0.0
    %1845 = vmatprep.subr.mxu0 0.0
    %1846 = vmatpush1.msra.mxu0 0.0
    %1847 = vmatprep.subr.mxu0 0.0
    %1848 = vmatpush1.msra.mxu0 0.0
    %1849 = vmatprep.subr.mxu0 0.0
    %1850 = vmatpush1.msra.mxu0 0.0
    %1851 = vmatprep.subr.mxu0 0.0
    %1852 = vmatpush1.msra.mxu0 0.0
    %1853 = vmatprep.subr.mxu0 0.0
    %1854 = vmatpush1.msra.mxu0 0.0
    %1855 = vmatprep.subr.mxu0 0.0
    %1856 = vmatpush1.msra.mxu0 0.0
    %1857 = vmatprep.subr.mxu0 0.0
    %1858 = vmatpush1.msra.mxu0 0.0
    %1859 = vmatprep.subr.mxu0 0.0
    %1860 = vmatpush1.msra.mxu0 0.0
    %1861 = vmatprep.subr.mxu0 0.0
    %1862 = vmatpush1.msra.mxu0 0.0
    %1863 = vmatprep.subr.mxu0 0.0
    %1864 = vmatpush1.msra.mxu0 0.0
    %1865 = vmatprep.subr.mxu0 0.0
    %1866 = vmatpush1.msra.mxu0 0.0
    %1867 = vmatprep.subr.mxu0 0.0
    %1868 = vmatpush1.msra.mxu0 0.0
    %1869 = vmatprep.subr.mxu0 0.0
    %1870 = vmatpush1.msra.mxu0 0.0
    %1871 = vmatprep.subr.mxu0 0.0
    %1872 = vmatpush1.msra.mxu0 0.0
    %1873 = vmatprep.subr.mxu0 0.0
    %1874 = vmatpush1.msra.mxu0 0.0
    %1875 = vmatprep.mubr.f32.mxu0 0.0
    %1876 = vmatmul.mubr.f32.gmra.mrb[0].mxu0 %v1738
    %v1877 = vpop.f32.mrb[0].mxu0
    %v1878 = vadd.f32 0.0, %v1877
    %v1879 = vpop.f32.mrb[0].mxu0
    %1880 = vdwg.mxu0
    %v1881 = vadd.f32 %v312, %v1807
    %v1882 = vxor.u32 %v1881, 2147483648
    %v1883 = vmul.f32 %v1882, 1.442695
    %v1884 = vpow.pop %v1883
    %v1885 = vadd.f32 %v1884, 1.0
    %v1886 = vrcp.pop %v1885
    %v1887 = vmul.f32 1.0, %v1886
    %v1888 = vadd.f32 %v387, %v1809
    %v1889 = vxor.u32 %v1888, 2147483648
    %v1890 = vmul.f32 %v1889, 1.442695
    %v1891 = vpow.pop %v1890
    %v1892 = vadd.f32 %v1891, 1.0
    %v1893 = vrcp.pop %v1892
    %v1894 = vmul.f32 1.0, %v1893
    %v1895 = vadd.f32 %v1878, %v497
    %v1896 = vmul.f32 %v1887, %v1895
    %v1897 = vadd.f32 %v389, %v1896
    %v1898 = vtanh.pop %v1897
    %v1899 = vsub.f32 1.0, %v1894
    %v1900 = vmul.f32 %v1899, %v1898
    %v1901 = vmul.f32 %v1894, %v1738
    %v1902 = vadd.f32 %v1900, %v1901
    %s1903 = scalar_lea.vmem [#allocation2], 6
    %1904 = vst [vmem:[%s1903 - $0x6] sm:$0xc0] %v1736
    %s1905 = scalar_lea.vmem [#allocation2], 8
    %1906 = vst [vmem:[%s1905] sm:$0x3] %v1902
    %v1908 = vrot.slane %v1736, 6
    %1910 = vmatprep.subr.mxu0 %v392
    %1911 = vmatpush1.msra.mxu0 %v391
    %1912 = vmatprep.subr.mxu0 %v395
    %1913 = vmatpush1.msra.mxu0 %v394
    %1914 = vmatprep.subr.mxu0 %v398
    %1915 = vmatpush1.msra.mxu0 %v397
    %1916 = vmatprep.subr.mxu0 %v401
    %1917 = vmatpush1.msra.mxu0 %v400
    %1918 = vmatprep.subr.mxu0 %v404
    %1919 = vmatpush1.msra.mxu0 %v403
    %1920 = vmatprep.subr.mxu0 %v407
    %1921 = vmatpush1.msra.mxu0 %v406
    %1922 = vmatprep.subr.mxu0 %v410
    %1923 = vmatpush1.msra.mxu0 %v409
    %1924 = vmatprep.subr.mxu0 %v413
    %1925 = vmatpush1.msra.mxu0 %v412
    %1926 = vmatprep.subr.mxu0 %v416
    %1927 = vmatpush1.msra.mxu0 %v415
    %1928 = vmatprep.subr.mxu0 %v419
    %1929 = vmatpush1.msra.mxu0 %v418
    %1930 = vmatprep.subr.mxu0 %v422
    %1931 = vmatpush1.msra.mxu0 %v421
    %1932 = vmatprep.subr.mxu0 %v425
    %1933 = vmatpush1.msra.mxu0 %v424
    %1934 = vmatprep.subr.mxu0 %v428
    %1935 = vmatpush1.msra.mxu0 %v427
    %1936 = vmatprep.subr.mxu0 %v431
    %1937 = vmatpush1.msra.mxu0 %v430
    %1938 = vmatprep.subr.mxu0 %v434
    %1939 = vmatpush1.msra.mxu0 %v433
    %1940 = vmatprep.subr.mxu0 %v437
    %1941 = vmatpush1.msra.mxu0 %v436
    %1942 = vmatprep.subr.mxu0 0.0
    %1943 = vmatpush1.msra.mxu0 0.0
    %1944 = vmatprep.subr.mxu0 0.0
    %1945 = vmatpush1.msra.mxu0 0.0
    %1946 = vmatprep.subr.mxu0 0.0
    %1947 = vmatpush1.msra.mxu0 0.0
    %1948 = vmatprep.subr.mxu0 0.0
    %1949 = vmatpush1.msra.mxu0 0.0
    %1950 = vmatprep.subr.mxu0 0.0
    %1951 = vmatpush1.msra.mxu0 0.0
    %1952 = vmatprep.subr.mxu0 0.0
    %1953 = vmatpush1.msra.mxu0 0.0
    %1954 = vmatprep.subr.mxu0 0.0
    %1955 = vmatpush1.msra.mxu0 0.0
    %1956 = vmatprep.subr.mxu0 0.0
    %1957 = vmatpush1.msra.mxu0 0.0
    %1958 = vmatprep.subr.mxu0 0.0
    %1959 = vmatpush1.msra.mxu0 0.0
    %1960 = vmatprep.subr.mxu0 0.0
    %1961 = vmatpush1.msra.mxu0 0.0
    %1962 = vmatprep.subr.mxu0 0.0
    %1963 = vmatpush1.msra.mxu0 0.0
    %1964 = vmatprep.subr.mxu0 0.0
    %1965 = vmatpush1.msra.mxu0 0.0
    %1966 = vmatprep.subr.mxu0 0.0
    %1967 = vmatpush1.msra.mxu0 0.0
    %1968 = vmatprep.subr.mxu0 0.0
    %1969 = vmatpush1.msra.mxu0 0.0
    %1970 = vmatprep.subr.mxu0 0.0
    %1971 = vmatpush1.msra.mxu0 0.0
    %1972 = vmatprep.subr.mxu0 0.0
    %1973 = vmatpush1.msra.mxu0 0.0
    %1974 = vmatprep.mubr.f32.mxu0 0.0
    %1975 = vmatmul.mubr.f32.gmra.mrb[0].mxu0 %v1908
    %v1976 = vpop.f32.mrb[0].mxu0
    %v1977 = vadd.f32 0.0, %v1976
    %v1978 = vpop.f32.mrb[0].mxu0
    %v1979 = vadd.f32 0.0, %v1978
    %1980 = vdwg.mxu0
    %1981 = vmatprep.subr.mxu0 0.0
    %1982 = vmatpush1.msra.mxu0 %v393
    %1983 = vmatprep.subr.mxu0 0.0
    %1984 = vmatpush1.msra.mxu0 %v396
    %1985 = vmatprep.subr.mxu0 0.0
    %1986 = vmatpush1.msra.mxu0 %v399
    %1987 = vmatprep.subr.mxu0 0.0
    %1988 = vmatpush1.msra.mxu0 %v402
    %1989 = vmatprep.subr.mxu0 0.0
    %1990 = vmatpush1.msra.mxu0 %v405
    %1991 = vmatprep.subr.mxu0 0.0
    %1992 = vmatpush1.msra.mxu0 %v408
    %1993 = vmatprep.subr.mxu0 0.0
    %1994 = vmatpush1.msra.mxu0 %v411
    %1995 = vmatprep.subr.mxu0 0.0
    %1996 = vmatpush1.msra.mxu0 %v414
    %1997 = vmatprep.subr.mxu0 0.0
    %1998 = vmatpush1.msra.mxu0 %v417
    %1999 = vmatprep.subr.mxu0 0.0
    %2000 = vmatpush1.msra.mxu0 %v420
    %2001 = vmatprep.subr.mxu0 0.0
    %2002 = vmatpush1.msra.mxu0 %v423
    %2003 = vmatprep.subr.mxu0 0.0
    %2004 = vmatpush1.msra.mxu0 %v426
    %2005 = vmatprep.subr.mxu0 0.0
    %2006 = vmatpush1.msra.mxu0 %v429
    %2007 = vmatprep.subr.mxu0 0.0
    %2008 = vmatpush1.msra.mxu0 %v432
    %2009 = vmatprep.subr.mxu0 0.0
    %2010 = vmatpush1.msra.mxu0 %v435
    %2011 = vmatprep.subr.mxu0 0.0
    %2012 = vmatpush1.msra.mxu0 %v438
    %2013 = vmatprep.subr.mxu0 0.0
    %2014 = vmatpush1.msra.mxu0 0.0
    %2015 = vmatprep.subr.mxu0 0.0
    %2016 = vmatpush1.msra.mxu0 0.0
    %2017 = vmatprep.subr.mxu0 0.0
    %2018 = vmatpush1.msra.mxu0 0.0
    %2019 = vmatprep.subr.mxu0 0.0
    %2020 = vmatpush1.msra.mxu0 0.0
    %2021 = vmatprep.subr.mxu0 0.0
    %2022 = vmatpush1.msra.mxu0 0.0
    %2023 = vmatprep.subr.mxu0 0.0
    %2024 = vmatpush1.msra.mxu0 0.0
    %2025 = vmatprep.subr.mxu0 0.0
    %2026 = vmatpush1.msra.mxu0 0.0
    %2027 = vmatprep.subr.mxu0 0.0
    %2028 = vmatpush1.msra.mxu0 0.0
    %2029 = vmatprep.subr.mxu0 0.0
    %2030 = vmatpush1.msra.mxu0 0.0
    %2031 = vmatprep.subr.mxu0 0.0
    %2032 = vmatpush1.msra.mxu0 0.0
    %2033 = vmatprep.subr.mxu0 0.0
    %2034 = vmatpush1.msra.mxu0 0.0
    %2035 = vmatprep.subr.mxu0 0.0
    %2036 = vmatpush1.msra.mxu0 0.0
    %2037 = vmatprep.subr.mxu0 0.0
    %2038 = vmatpush1.msra.mxu0 0.0
    %2039 = vmatprep.subr.mxu0 0.0
    %2040 = vmatpush1.msra.mxu0 0.0
    %2041 = vmatprep.subr.mxu0 0.0
    %2042 = vmatpush1.msra.mxu0 0.0
    %2043 = vmatprep.subr.mxu0 0.0
    %2044 = vmatpush1.msra.mxu0 0.0
    %2045 = vmatprep.mubr.f32.mxu0 0.0
    %2046 = vmatmul.mubr.f32.gmra.mrb[0].mxu0 %v1908
    %v2047 = vpop.f32.mrb[0].mxu0
    %v2048 = vadd.f32 0.0, %v2047
    %v2049 = vpop.f32.mrb[0].mxu0
    %2050 = vdwg.mxu0
    %v2051 = vadd.f32 %v233, %v1977
    %v2052 = vxor.u32 %v2051, 2147483648
    %v2053 = vmul.f32 %v2052, 1.442695
    %v2054 = vpow.pop %v2053
    %v2055 = vadd.f32 %v2054, 1.0
    %v2056 = vrcp.pop %v2055
    %v2057 = vmul.f32 1.0, %v2056
    %v2058 = vadd.f32 %v235, %v1979
    %v2059 = vxor.u32 %v2058, 2147483648
    %v2060 = vmul.f32 %v2059, 1.442695
    %v2061 = vpow.pop %v2060
    %v2062 = vadd.f32 %v2061, 1.0
    %v2063 = vrcp.pop %v2062
    %v2064 = vmul.f32 1.0, %v2063
    %v2065 = vadd.f32 %v2048, %v492
    %v2066 = vmul.f32 %v2057, %v2065
    %v2067 = vadd.f32 %v310, %v2066
    %v2068 = vtanh.pop %v2067
    %v2069 = vsub.f32 1.0, %v2064
    %v2070 = vmul.f32 %v2069, %v2068
    %v2071 = vmul.f32 %v2064, %v1908
    %v2072 = vadd.f32 %v2070, %v2071
    %2073 = vmatprep.subr.mxu0 %v441
    %2074 = vmatpush1.msra.mxu0 %v440
    %2075 = vmatprep.subr.mxu0 %v444
    %2076 = vmatpush1.msra.mxu0 %v443
    %2077 = vmatprep.subr.mxu0 %v447
    %2078 = vmatpush1.msra.mxu0 %v446
    %2079 = vmatprep.subr.mxu0 %v450
    %2080 = vmatpush1.msra.mxu0 %v449
    %2081 = vmatprep.subr.mxu0 %v453
    %2082 = vmatpush1.msra.mxu0 %v452
    %2083 = vmatprep.subr.mxu0 %v456
    %2084 = vmatpush1.msra.mxu0 %v455
    %2085 = vmatprep.subr.mxu0 %v459
    %2086 = vmatpush1.msra.mxu0 %v458
    %2087 = vmatprep.subr.mxu0 %v462
    %2088 = vmatpush1.msra.mxu0 %v461
    %2089 = vmatprep.subr.mxu0 %v465
    %2090 = vmatpush1.msra.mxu0 %v464
    %2091 = vmatprep.subr.mxu0 %v468
    %2092 = vmatpush1.msra.mxu0 %v467
    %2093 = vmatprep.subr.mxu0 %v471
    %2094 = vmatpush1.msra.mxu0 %v470
    %2095 = vmatprep.subr.mxu0 %v474
    %2096 = vmatpush1.msra.mxu0 %v473
    %2097 = vmatprep.subr.mxu0 %v477
    %2098 = vmatpush1.msra.mxu0 %v476
    %2099 = vmatprep.subr.mxu0 %v480
    %2100 = vmatpush1.msra.mxu0 %v479
    %2101 = vmatprep.subr.mxu0 %v483
    %2102 = vmatpush1.msra.mxu0 %v482
    %2103 = vmatprep.subr.mxu0 %v486
    %2104 = vmatpush1.msra.mxu0 %v485
    %2105 = vmatprep.subr.mxu0 0.0
    %2106 = vmatpush1.msra.mxu0 0.0
    %2107 = vmatprep.subr.mxu0 0.0
    %2108 = vmatpush1.msra.mxu0 0.0
    %2109 = vmatprep.subr.mxu0 0.0
    %2110 = vmatpush1.msra.mxu0 0.0
    %2111 = vmatprep.subr.mxu0 0.0
    %2112 = vmatpush1.msra.mxu0 0.0
    %2113 = vmatprep.subr.mxu0 0.0
    %2114 = vmatpush1.msra.mxu0 0.0
    %2115 = vmatprep.subr.mxu0 0.0
    %2116 = vmatpush1.msra.mxu0 0.0
    %2117 = vmatprep.subr.mxu0 0.0
    %2118 = vmatpush1.msra.mxu0 0.0
    %2119 = vmatprep.subr.mxu0 0.0
    %2120 = vmatpush1.msra.mxu0 0.0
    %2121 = vmatprep.subr.mxu0 0.0
    %2122 = vmatpush1.msra.mxu0 0.0
    %2123 = vmatprep.subr.mxu0 0.0
    %2124 = vmatpush1.msra.mxu0 0.0
    %2125 = vmatprep.subr.mxu0 0.0
    %2126 = vmatpush1.msra.mxu0 0.0
    %2127 = vmatprep.subr.mxu0 0.0
    %2128 = vmatpush1.msra.mxu0 0.0
    %2129 = vmatprep.subr.mxu0 0.0
    %2130 = vmatpush1.msra.mxu0 0.0
    %2131 = vmatprep.subr.mxu0 0.0
    %2132 = vmatpush1.msra.mxu0 0.0
    %2133 = vmatprep.subr.mxu0 0.0
    %2134 = vmatpush1.msra.mxu0 0.0
    %2135 = vmatprep.subr.mxu0 0.0
    %2136 = vmatpush1.msra.mxu0 0.0
    %2137 = vmatprep.mubr.f32.mxu0 0.0
    %2138 = vmatmul.mubr.f32.gmra.mrb[0].mxu0 %v1902
    %v2139 = vpop.f32.mrb[0].mxu0
    %v2140 = vadd.f32 0.0, %v2139
    %v2141 = vpop.f32.mrb[0].mxu0
    %v2142 = vadd.f32 0.0, %v2141
    %2143 = vdwg.mxu0
    %2144 = vmatprep.subr.mxu0 0.0
    %2145 = vmatpush1.msra.mxu0 %v442
    %2146 = vmatprep.subr.mxu0 0.0
    %2147 = vmatpush1.msra.mxu0 %v445
    %2148 = vmatprep.subr.mxu0 0.0
    %2149 = vmatpush1.msra.mxu0 %v448
    %2150 = vmatprep.subr.mxu0 0.0
    %2151 = vmatpush1.msra.mxu0 %v451
    %2152 = vmatprep.subr.mxu0 0.0
    %2153 = vmatpush1.msra.mxu0 %v454
    %2154 = vmatprep.subr.mxu0 0.0
    %2155 = vmatpush1.msra.mxu0 %v457
    %2156 = vmatprep.subr.mxu0 0.0
    %2157 = vmatpush1.msra.mxu0 %v460
    %2158 = vmatprep.subr.mxu0 0.0
    %2159 = vmatpush1.msra.mxu0 %v463
    %2160 = vmatprep.subr.mxu0 0.0
    %2161 = vmatpush1.msra.mxu0 %v466
    %2162 = vmatprep.subr.mxu0 0.0
    %2163 = vmatpush1.msra.mxu0 %v469
    %2164 = vmatprep.subr.mxu0 0.0
    %2165 = vmatpush1.msra.mxu0 %v472
    %2166 = vmatprep.subr.mxu0 0.0
    %2167 = vmatpush1.msra.mxu0 %v475
    %2168 = vmatprep.subr.mxu0 0.0
    %2169 = vmatpush1.msra.mxu0 %v478
    %2170 = vmatprep.subr.mxu0 0.0
    %2171 = vmatpush1.msra.mxu0 %v481
    %2172 = vmatprep.subr.mxu0 0.0
    %2173 = vmatpush1.msra.mxu0 %v484
    %2174 = vmatprep.subr.mxu0 0.0
    %2175 = vmatpush1.msra.mxu0 %v487
    %2176 = vmatprep.subr.mxu0 0.0
    %2177 = vmatpush1.msra.mxu0 0.0
    %2178 = vmatprep.subr.mxu0 0.0
    %2179 = vmatpush1.msra.mxu0 0.0
    %2180 = vmatprep.subr.mxu0 0.0
    %2181 = vmatpush1.msra.mxu0 0.0
    %2182 = vmatprep.subr.mxu0 0.0
    %2183 = vmatpush1.msra.mxu0 0.0
    %2184 = vmatprep.subr.mxu0 0.0
    %2185 = vmatpush1.msra.mxu0 0.0
    %2186 = vmatprep.subr.mxu0 0.0
    %2187 = vmatpush1.msra.mxu0 0.0
    %2188 = vmatprep.subr.mxu0 0.0
    %2189 = vmatpush1.msra.mxu0 0.0
    %2190 = vmatprep.subr.mxu0 0.0
    %2191 = vmatpush1.msra.mxu0 0.0
    %2192 = vmatprep.subr.mxu0 0.0
    %2193 = vmatpush1.msra.mxu0 0.0
    %2194 = vmatprep.subr.mxu0 0.0
    %2195 = vmatpush1.msra.mxu0 0.0
    %2196 = vmatprep.subr.mxu0 0.0
    %2197 = vmatpush1.msra.mxu0 0.0
    %2198 = vmatprep.subr.mxu0 0.0
    %2199 = vmatpush1.msra.mxu0 0.0
    %2200 = vmatprep.subr.mxu0 0.0
    %2201 = vmatpush1.msra.mxu0 0.0
    %2202 = vmatprep.subr.mxu0 0.0
    %2203 = vmatpush1.msra.mxu0 0.0
    %2204 = vmatprep.subr.mxu0 0.0
    %2205 = vmatpush1.msra.mxu0 0.0
    %2206 = vmatprep.subr.mxu0 0.0
    %2207 = vmatpush1.msra.mxu0 0.0
    %2208 = vmatprep.mubr.f32.mxu0 0.0
    %2209 = vmatmul.mubr.f32.gmra.mrb[0].mxu0 %v1902
    %v2210 = vpop.f32.mrb[0].mxu0
    %v2211 = vadd.f32 0.0, %v2210
    %v2212 = vpop.f32.mrb[0].mxu0
    %2213 = vdwg.mxu0
    %v2215 = vrot.slane %v2140, 2
    %v2217 = vadd.f32 %v306, %v2215
    %v2218 = vxor.u32 %v2217, 2147483648
    %v2219 = vmul.f32 %v2218, 1.442695
    %v2220 = vpow.pop %v2219
    %v2221 = vadd.f32 %v2220, 1.0
    %v2222 = vrcp.pop %v2221
    %v2223 = vmul.f32 1.0, %v2222
    %v2225 = vrot.slane %v2142, 2
    %v2227 = vadd.f32 %v381, %v2225
    %v2228 = vxor.u32 %v2227, 2147483648
    %v2229 = vmul.f32 %v2228, 1.442695
    %v2230 = vpow.pop %v2229
    %v2231 = vadd.f32 %v2230, 1.0
    %v2232 = vrcp.pop %v2231
    %v2233 = vmul.f32 1.0, %v2232
    %v2234 = vadd.f32 %v2211, %v497
    %v2236 = vrot.slane %v2234, 2
    %v2238 = vmul.f32 %v2223, %v2236
    %v2239 = vadd.f32 %v383, %v2238
    %v2240 = vtanh.pop %v2239
    %v2241 = vsub.f32 1.0, %v2233
    %v2242 = vmul.f32 %v2241, %v2240
    %v2244 = vrot.slane %v1902, 2
    %v2246 = vmul.f32 %v2233, %v2244
    %v2247 = vadd.f32 %v2242, %v2246
    %v2248 = vld [vmem:[%s1905] sm:$0x3]
    %v2249 = vmul.f32 %v2072, %v502
    %v2250 = vmul.f32 %v2248, %v507
    %v2251 = vadd.f32 %v2249, %v2250
    %vm2252 = vcmask 1041408
    %v2253 = vsel %vm2252, %v2251, 0.0
    %2254 = vadd.xlane.f32.xlu0 %v2253
    %v2255 = vpop.xlane.xlu0 %2254
    %v2256 = vsub.f32 -inf, %v2255
    %v2257 = vmul.f32 %v2256, 1.442695
    %v2258 = vpow.pop %v2257
    %v2259 = vsub.f32 %v2255, %v2255
    %v2260 = vmul.f32 %v2259, 1.442695
    %v2261 = vpow.pop %v2260
    %v2262 = vmul.f32 %v2258, 0.0
    %v2263 = vadd.f32 %v2262, %v2261
    %v2264 = vmul.f32 %v2261, %v2072
    %v2265 = vadd.f32 %v2262, %v2264
    %v2266 = vmul.f32 %v2261, %v2248
    %v2267 = vadd.f32 %v2262, %v2266
    %v2268 = vld [vmem:[%s1903] sm:$0x3]
    %v2269 = vmul.f32 %v2268, %v502
    %v2270 = vmul.f32 %v2247, %v507
    %v2272 = vrot.slane %v2270, 6
    %v2274 = vadd.f32 %v2269, %v2272
    %v2275 = vsel %vm2252, %v2274, 0.0
    %2276 = vadd.xlane.f32.xlu0 %v2275
    %v2277 = vpop.xlane.xlu0 %2276
    %v2278 = vmax.f32 %v2255, %v2277
    %v2279 = vsub.f32 %v2255, %v2278
    %v2280 = vmul.f32 %v2279, 1.442695
    %v2281 = vpow.pop %v2280
    %v2282 = vsub.f32 %v2277, %v2278
    %v2283 = vmul.f32 %v2282, 1.442695
    %v2284 = vpow.pop %v2283
    %v2285 = vmul.f32 %v2281, %v2263
    %v2286 = vadd.f32 %v2285, %v2284
    %v2287 = vmul.f32 %v2281, %v2265
    %v2288 = vmul.f32 %v2284, %v2268
    %v2289 = vadd.f32 %v2287, %v2288
    %v2290 = vmul.f32 %v2281, %v2267
    %v2292 = vrot.slane %v2247, 6
    %v2294 = vmul.f32 %v2284, %v2292
    %v2295 = vadd.f32 %v2290, %v2294
    %2296 = vmatprep.subr.mxu0 %v392
    %2297 = vmatpush1.msra.mxu0 %v391
    %2298 = vmatprep.subr.mxu0 %v395
    %2299 = vmatpush1.msra.mxu0 %v394
    %2300 = vmatprep.subr.mxu0 %v398
    %2301 = vmatpush1.msra.mxu0 %v397
    %2302 = vmatprep.subr.mxu0 %v401
    %2303 = vmatpush1.msra.mxu0 %v400
    %2304 = vmatprep.subr.mxu0 %v404
    %2305 = vmatpush1.msra.mxu0 %v403
    %2306 = vmatprep.subr.mxu0 %v407
    %2307 = vmatpush1.msra.mxu0 %v406
    %2308 = vmatprep.subr.mxu0 %v410
    %2309 = vmatpush1.msra.mxu0 %v409
    %2310 = vmatprep.subr.mxu0 %v413
    %2311 = vmatpush1.msra.mxu0 %v412
    %2312 = vmatprep.subr.mxu0 %v416
    %2313 = vmatpush1.msra.mxu0 %v415
    %2314 = vmatprep.subr.mxu0 %v419
    %2315 = vmatpush1.msra.mxu0 %v418
    %2316 = vmatprep.subr.mxu0 %v422
    %2317 = vmatpush1.msra.mxu0 %v421
    %2318 = vmatprep.subr.mxu0 %v425
    %2319 = vmatpush1.msra.mxu0 %v424
    %2320 = vmatprep.subr.mxu0 %v428
    %2321 = vmatpush1.msra.mxu0 %v427
    %2322 = vmatprep.subr.mxu0 %v431
    %2323 = vmatpush1.msra.mxu0 %v430
    %2324 = vmatprep.subr.mxu0 %v434
    %2325 = vmatpush1.msra.mxu0 %v433
    %2326 = vmatprep.subr.mxu0 %v437
    %2327 = vmatpush1.msra.mxu0 %v436
    %2328 = vmatprep.subr.mxu0 0.0
    %2329 = vmatpush1.msra.mxu0 0.0
    %2330 = vmatprep.subr.mxu0 0.0
    %2331 = vmatpush1.msra.mxu0 0.0
    %2332 = vmatprep.subr.mxu0 0.0
    %2333 = vmatpush1.msra.mxu0 0.0
    %2334 = vmatprep.subr.mxu0 0.0
    %2335 = vmatpush1.msra.mxu0 0.0
    %2336 = vmatprep.subr.mxu0 0.0
    %2337 = vmatpush1.msra.mxu0 0.0
    %2338 = vmatprep.subr.mxu0 0.0
    %2339 = vmatpush1.msra.mxu0 0.0
    %2340 = vmatprep.subr.mxu0 0.0
    %2341 = vmatpush1.msra.mxu0 0.0
    %2342 = vmatprep.subr.mxu0 0.0
    %2343 = vmatpush1.msra.mxu0 0.0
    %2344 = vmatprep.subr.mxu0 0.0
    %2345 = vmatpush1.msra.mxu0 0.0
    %2346 = vmatprep.subr.mxu0 0.0
    %2347 = vmatpush1.msra.mxu0 0.0
    %2348 = vmatprep.subr.mxu0 0.0
    %2349 = vmatpush1.msra.mxu0 0.0
    %2350 = vmatprep.subr.mxu0 0.0
    %2351 = vmatpush1.msra.mxu0 0.0
    %2352 = vmatprep.subr.mxu0 0.0
    %2353 = vmatpush1.msra.mxu0 0.0
    %2354 = vmatprep.subr.mxu0 0.0
    %2355 = vmatpush1.msra.mxu0 0.0
    %2356 = vmatprep.subr.mxu0 0.0
    %2357 = vmatpush1.msra.mxu0 0.0
    %2358 = vmatprep.subr.mxu0 0.0
    %2359 = vmatpush1.msra.mxu0 0.0
    %2360 = vmatprep.mubr.f32.mxu0 0.0
    %2361 = vmatmul.mubr.f32.gmra.mrb[0].mxu0 %v2072
    %v2362 = vpop.f32.mrb[0].mxu0
    %v2363 = vadd.f32 0.0, %v2362
    %v2364 = vpop.f32.mrb[0].mxu0
    %v2365 = vadd.f32 0.0, %v2364
    %2366 = vdwg.mxu0
    %2367 = vmatprep.subr.mxu0 0.0
    %2368 = vmatpush1.msra.mxu0 %v393
    %2369 = vmatprep.subr.mxu0 0.0
    %2370 = vmatpush1.msra.mxu0 %v396
    %2371 = vmatprep.subr.mxu0 0.0
    %2372 = vmatpush1.msra.mxu0 %v399
    %2373 = vmatprep.subr.mxu0 0.0
    %2374 = vmatpush1.msra.mxu0 %v402
    %2375 = vmatprep.subr.mxu0 0.0
    %2376 = vmatpush1.msra.mxu0 %v405
    %2377 = vmatprep.subr.mxu0 0.0
    %2378 = vmatpush1.msra.mxu0 %v408
    %2379 = vmatprep.subr.mxu0 0.0
    %2380 = vmatpush1.msra.mxu0 %v411
    %2381 = vmatprep.subr.mxu0 0.0
    %2382 = vmatpush1.msra.mxu0 %v414
    %2383 = vmatprep.subr.mxu0 0.0
    %2384 = vmatpush1.msra.mxu0 %v417
    %2385 = vmatprep.subr.mxu0 0.0
    %2386 = vmatpush1.msra.mxu0 %v420
    %2387 = vmatprep.subr.mxu0 0.0
    %2388 = vmatpush1.msra.mxu0 %v423
    %2389 = vmatprep.subr.mxu0 0.0
    %2390 = vmatpush1.msra.mxu0 %v426
    %2391 = vmatprep.subr.mxu0 0.0
    %2392 = vmatpush1.msra.mxu0 %v429
    %2393 = vmatprep.subr.mxu0 0.0
    %2394 = vmatpush1.msra.mxu0 %v432
    %2395 = vmatprep.subr.mxu0 0.0
    %2396 = vmatpush1.msra.mxu0 %v435
    %2397 = vmatprep.subr.mxu0 0.0
    %2398 = vmatpush1.msra.mxu0 %v438
    %2399 = vmatprep.subr.mxu0 0.0
    %2400 = vmatpush1.msra.mxu0 0.0
    %2401 = vmatprep.subr.mxu0 0.0
    %2402 = vmatpush1.msra.mxu0 0.0
    %2403 = vmatprep.subr.mxu0 0.0
    %2404 = vmatpush1.msra.mxu0 0.0
    %2405 = vmatprep.subr.mxu0 0.0
    %2406 = vmatpush1.msra.mxu0 0.0
    %2407 = vmatprep.subr.mxu0 0.0
    %2408 = vmatpush1.msra.mxu0 0.0
    %2409 = vmatprep.subr.mxu0 0.0
    %2410 = vmatpush1.msra.mxu0 0.0
    %2411 = vmatprep.subr.mxu0 0.0
    %2412 = vmatpush1.msra.mxu0 0.0
    %2413 = vmatprep.subr.mxu0 0.0
    %2414 = vmatpush1.msra.mxu0 0.0
    %2415 = vmatprep.subr.mxu0 0.0
    %2416 = vmatpush1.msra.mxu0 0.0
    %2417 = vmatprep.subr.mxu0 0.0
    %2418 = vmatpush1.msra.mxu0 0.0
    %2419 = vmatprep.subr.mxu0 0.0
    %2420 = vmatpush1.msra.mxu0 0.0
    %2421 = vmatprep.subr.mxu0 0.0
    %2422 = vmatpush1.msra.mxu0 0.0
    %2423 = vmatprep.subr.mxu0 0.0
    %2424 = vmatpush1.msra.mxu0 0.0
    %2425 = vmatprep.subr.mxu0 0.0
    %2426 = vmatpush1.msra.mxu0 0.0
    %2427 = vmatprep.subr.mxu0 0.0
    %2428 = vmatpush1.msra.mxu0 0.0
    %2429 = vmatprep.subr.mxu0 0.0
    %2430 = vmatpush1.msra.mxu0 0.0
    %2431 = vmatprep.mubr.f32.mxu0 0.0
    %2432 = vmatmul.mubr.f32.gmra.mrb[0].mxu0 %v2072
    %v2433 = vpop.f32.mrb[0].mxu0
    %v2434 = vadd.f32 0.0, %v2433
    %v2435 = vpop.f32.mrb[0].mxu0
    %2436 = vdwg.mxu0
    %v2438 = vrot.slane %v2363, 6
    %v2440 = vadd.f32 %v233, %v2438
    %v2441 = vxor.u32 %v2440, 2147483648
    %v2442 = vmul.f32 %v2441, 1.442695
    %v2443 = vpow.pop %v2442
    %v2444 = vadd.f32 %v2443, 1.0
    %v2445 = vrcp.pop %v2444
    %v2446 = vmul.f32 1.0, %v2445
    %v2448 = vrot.slane %v2365, 6
    %v2450 = vadd.f32 %v235, %v2448
    %v2451 = vxor.u32 %v2450, 2147483648
    %v2452 = vmul.f32 %v2451, 1.442695
    %v2453 = vpow.pop %v2452
    %v2454 = vadd.f32 %v2453, 1.0
    %v2455 = vrcp.pop %v2454
    %v2456 = vmul.f32 1.0, %v2455
    %v2457 = vadd.f32 %v2434, %v492
    %v2459 = vrot.slane %v2457, 6
    %v2461 = vmul.f32 %v2446, %v2459
    %v2462 = vadd.f32 %v310, %v2461
    %v2463 = vtanh.pop %v2462
    %v2464 = vsub.f32 1.0, %v2456
    %v2465 = vmul.f32 %v2464, %v2463
    %v2467 = vrot.slane %v2072, 6
    %v2469 = vmul.f32 %v2456, %v2467
    %v2470 = vadd.f32 %v2465, %v2469
    %2471 = vmatprep.subr.mxu0 %v441
    %2472 = vmatpush1.msra.mxu0 %v440
    %2473 = vmatprep.subr.mxu0 %v444
    %2474 = vmatpush1.msra.mxu0 %v443
    %2475 = vmatprep.subr.mxu0 %v447
    %2476 = vmatpush1.msra.mxu0 %v446
    %2477 = vmatprep.subr.mxu0 %v450
    %2478 = vmatpush1.msra.mxu0 %v449
    %2479 = vmatprep.subr.mxu0 %v453
    %2480 = vmatpush1.msra.mxu0 %v452
    %2481 = vmatprep.subr.mxu0 %v456
    %2482 = vmatpush1.msra.mxu0 %v455
    %2483 = vmatprep.subr.mxu0 %v459
    %2484 = vmatpush1.msra.mxu0 %v458
    %2485 = vmatprep.subr.mxu0 %v462
    %2486 = vmatpush1.msra.mxu0 %v461
    %2487 = vmatprep.subr.mxu0 %v465
    %2488 = vmatpush1.msra.mxu0 %v464
    %2489 = vmatprep.subr.mxu0 %v468
    %2490 = vmatpush1.msra.mxu0 %v467
    %2491 = vmatprep.subr.mxu0 %v471
    %2492 = vmatpush1.msra.mxu0 %v470
    %2493 = vmatprep.subr.mxu0 %v474
    %2494 = vmatpush1.msra.mxu0 %v473
    %2495 = vmatprep.subr.mxu0 %v477
    %2496 = vmatpush1.msra.mxu0 %v476
    %2497 = vmatprep.subr.mxu0 %v480
    %2498 = vmatpush1.msra.mxu0 %v479
    %2499 = vmatprep.subr.mxu0 %v483
    %2500 = vmatpush1.msra.mxu0 %v482
    %2501 = vmatprep.subr.mxu0 %v486
    %2502 = vmatpush1.msra.mxu0 %v485
    %2503 = vmatprep.subr.mxu0 0.0
    %2504 = vmatpush1.msra.mxu0 0.0
    %2505 = vmatprep.subr.mxu0 0.0
    %2506 = vmatpush1.msra.mxu0 0.0
    %2507 = vmatprep.subr.mxu0 0.0
    %2508 = vmatpush1.msra.mxu0 0.0
    %2509 = vmatprep.subr.mxu0 0.0
    %2510 = vmatpush1.msra.mxu0 0.0
    %2511 = vmatprep.subr.mxu0 0.0
    %2512 = vmatpush1.msra.mxu0 0.0
    %2513 = vmatprep.subr.mxu0 0.0
    %2514 = vmatpush1.msra.mxu0 0.0
    %2515 = vmatprep.subr.mxu0 0.0
    %2516 = vmatpush1.msra.mxu0 0.0
    %2517 = vmatprep.subr.mxu0 0.0
    %2518 = vmatpush1.msra.mxu0 0.0
    %2519 = vmatprep.subr.mxu0 0.0
    %2520 = vmatpush1.msra.mxu0 0.0
    %2521 = vmatprep.subr.mxu0 0.0
    %2522 = vmatpush1.msra.mxu0 0.0
    %2523 = vmatprep.subr.mxu0 0.0
    %2524 = vmatpush1.msra.mxu0 0.0
    %2525 = vmatprep.subr.mxu0 0.0
    %2526 = vmatpush1.msra.mxu0 0.0
    %2527 = vmatprep.subr.mxu0 0.0
    %2528 = vmatpush1.msra.mxu0 0.0
    %2529 = vmatprep.subr.mxu0 0.0
    %2530 = vmatpush1.msra.mxu0 0.0
    %2531 = vmatprep.subr.mxu0 0.0
    %2532 = vmatpush1.msra.mxu0 0.0
    %2533 = vmatprep.subr.mxu0 0.0
    %2534 = vmatpush1.msra.mxu0 0.0
    %2535 = vmatprep.mubr.f32.mxu0 0.0
    %2536 = vmatmul.mubr.f32.gmra.mrb[0].mxu0 %v2292
    %v2537 = vpop.f32.mrb[0].mxu0
    %v2538 = vadd.f32 0.0, %v2537
    %v2539 = vpop.f32.mrb[0].mxu0
    %v2540 = vadd.f32 0.0, %v2539
    %2541 = vdwg.mxu0
    %2542 = vmatprep.subr.mxu0 0.0
    %2543 = vmatpush1.msra.mxu0 %v442
    %2544 = vmatprep.subr.mxu0 0.0
    %2545 = vmatpush1.msra.mxu0 %v445
    %2546 = vmatprep.subr.mxu0 0.0
    %2547 = vmatpush1.msra.mxu0 %v448
    %2548 = vmatprep.subr.mxu0 0.0
    %2549 = vmatpush1.msra.mxu0 %v451
    %2550 = vmatprep.subr.mxu0 0.0
    %2551 = vmatpush1.msra.mxu0 %v454
    %2552 = vmatprep.subr.mxu0 0.0
    %2553 = vmatpush1.msra.mxu0 %v457
    %2554 = vmatprep.subr.mxu0 0.0
    %2555 = vmatpush1.msra.mxu0 %v460
    %2556 = vmatprep.subr.mxu0 0.0
    %2557 = vmatpush1.msra.mxu0 %v463
    %2558 = vmatprep.subr.mxu0 0.0
    %2559 = vmatpush1.msra.mxu0 %v466
    %2560 = vmatprep.subr.mxu0 0.0
    %2561 = vmatpush1.msra.mxu0 %v469
    %2562 = vmatprep.subr.mxu0 0.0
    %2563 = vmatpush1.msra.mxu0 %v472
    %2564 = vmatprep.subr.mxu0 0.0
    %2565 = vmatpush1.msra.mxu0 %v475
    %2566 = vmatprep.subr.mxu0 0.0
    %2567 = vmatpush1.msra.mxu0 %v478
    %2568 = vmatprep.subr.mxu0 0.0
    %2569 = vmatpush1.msra.mxu0 %v481
    %2570 = vmatprep.subr.mxu0 0.0
    %2571 = vmatpush1.msra.mxu0 %v484
    %2572 = vmatprep.subr.mxu0 0.0
    %2573 = vmatpush1.msra.mxu0 %v487
    %2574 = vmatprep.subr.mxu0 0.0
    %2575 = vmatpush1.msra.mxu0 0.0
    %2576 = vmatprep.subr.mxu0 0.0
    %2577 = vmatpush1.msra.mxu0 0.0
    %2578 = vmatprep.subr.mxu0 0.0
    %2579 = vmatpush1.msra.mxu0 0.0
    %2580 = vmatprep.subr.mxu0 0.0
    %2581 = vmatpush1.msra.mxu0 0.0
    %2582 = vmatprep.subr.mxu0 0.0
    %2583 = vmatpush1.msra.mxu0 0.0
    %2584 = vmatprep.subr.mxu0 0.0
    %2585 = vmatpush1.msra.mxu0 0.0
    %2586 = vmatprep.subr.mxu0 0.0
    %2587 = vmatpush1.msra.mxu0 0.0
    %2588 = vmatprep.subr.mxu0 0.0
    %2589 = vmatpush1.msra.mxu0 0.0
    %2590 = vmatprep.subr.mxu0 0.0
    %2591 = vmatpush1.msra.mxu0 0.0
    %2592 = vmatprep.subr.mxu0 0.0
    %2593 = vmatpush1.msra.mxu0 0.0
    %2594 = vmatprep.subr.mxu0 0.0
    %2595 = vmatpush1.msra.mxu0 0.0
    %2596 = vmatprep.subr.mxu0 0.0
    %2597 = vmatpush1.msra.mxu0 0.0
    %2598 = vmatprep.subr.mxu0 0.0
    %2599 = vmatpush1.msra.mxu0 0.0
    %2600 = vmatprep.subr.mxu0 0.0
    %2601 = vmatpush1.msra.mxu0 0.0
    %2602 = vmatprep.subr.mxu0 0.0
    %2603 = vmatpush1.msra.mxu0 0.0
    %2604 = vmatprep.subr.mxu0 0.0
    %2605 = vmatpush1.msra.mxu0 0.0
    %2606 = vmatprep.mubr.f32.mxu0 0.0
    %2607 = vmatmul.mubr.f32.gmra.mrb[0].mxu0 %v2292
    %v2608 = vpop.f32.mrb[0].mxu0
    %v2609 = vadd.f32 0.0, %v2608
    %v2610 = vpop.f32.mrb[0].mxu0
    %2611 = vdwg.mxu0
    %v2613 = vrot.slane %v2538, 4
    %v2615 = vadd.f32 %v306, %v2613
    %v2616 = vxor.u32 %v2615, 2147483648
    %v2617 = vmul.f32 %v2616, 1.442695
    %v2618 = vpow.pop %v2617
    %v2619 = vadd.f32 %v2618, 1.0
    %v2620 = vrcp.pop %v2619
    %v2621 = vmul.f32 1.0, %v2620
    %v2623 = vrot.slane %v2540, 4
    %v2625 = vadd.f32 %v381, %v2623
    %v2626 = vxor.u32 %v2625, 2147483648
    %v2627 = vmul.f32 %v2626, 1.442695
    %v2628 = vpow.pop %v2627
    %v2629 = vadd.f32 %v2628, 1.0
    %v2630 = vrcp.pop %v2629
    %v2631 = vmul.f32 1.0, %v2630
    %v2632 = vadd.f32 %v2609, %v497
    %v2634 = vrot.slane %v2632, 4
    %v2636 = vmul.f32 %v2621, %v2634
    %v2637 = vadd.f32 %v383, %v2636
    %v2638 = vtanh.pop %v2637
    %v2639 = vsub.f32 1.0, %v2631
    %v2640 = vmul.f32 %v2639, %v2638
    %v2641 = vrot.slane %v2247, 2
    %v2643 = vmul.f32 %v2631, %v2641
    %v2644 = vadd.f32 %v2640, %v2643
    %v2645 = vld [vmem:[%s1558] sm:$0x3]
    %v2646 = vmul.f32 %v2470, %v502
    %v2647 = vmul.f32 %v2645, %v507
    %v2649 = vrot.slane %v2647, 6
    %v2651 = vadd.f32 %v2646, %v2649
    %vm2652 = vcmask 1043458
    %v2653 = vsel %vm2652, %v2651, 0.0
    %2654 = vadd.xlane.f32.xlu0 %v2653
    %v2655 = vpop.xlane.xlu0 %2654
    %v2657 = vrot.slane %v2655, 2
    %v2659 = vmax.f32 %v2278, %v2657
    %v2660 = vsub.f32 %v2278, %v2659
    %v2661 = vmul.f32 %v2660, 1.442695
    %v2662 = vpow.pop %v2661
    %v2664 = vrot.slane %v2659, 6
    %v2666 = vsub.f32 %v2655, %v2664
    %v2667 = vmul.f32 %v2666, 1.442695
    %v2668 = vpow.pop %v2667
    %v2669 = vmul.f32 %v2662, %v2286
    %v2671 = vrot.slane %v2668, 2
    %v2673 = vadd.f32 %v2669, %v2671
    %2675 = vset.pattern.permute.xlu0 0
    %2676 = vperm.xlu0 %2675, %v2662
    %v2677 = vpop.permute.xlu0 %2676
    %v2679 = vmul.f32 %v2677, %v2289
    %2680 = vset.pattern.permute.xlu0 0
    %2681 = vperm.xlu0 %2680, %v2668
    %v2682 = vpop.permute.xlu0 %2681
    %v2684 = vmul.f32 %v2682, %v2470
    %v2686 = vrot.slane %v2684, 2
    %v2688 = vadd.f32 %v2679, %v2686
    %v2689 = vmul.f32 %v2677, %v2295
    %v2691 = vrot.slane %v2645, 6
    %v2693 = vmul.f32 %v2682, %v2691
    %v2695 = vrot.slane %v2693, 2
    %v2697 = vadd.f32 %v2689, %v2695
    %v2698 = vld [vmem:[%s1556] sm:$0x3]
    %v2699 = vmul.f32 %v2698, %v502
    %v2700 = vmul.f32 %v2644, %v507
    %v2702 = vrot.slane %v2700, 4
    %v2704 = vadd.f32 %v2699, %v2702
    %v2705 = vsel %vm2252, %v2704, 0.0
    %2706 = vadd.xlane.f32.xlu0 %v2705
    %v2707 = vpop.xlane.xlu0 %2706
    %v2708 = vmax.f32 %v2659, %v2707
    %v2709 = vsub.f32 %v2659, %v2708
    %v2710 = vmul.f32 %v2709, 1.442695
    %v2711 = vpow.pop %v2710
    %v2712 = vsub.f32 %v2707, %v2708
    %v2713 = vmul.f32 %v2712, 1.442695
    %v2714 = vpow.pop %v2713
    %v2715 = vmul.f32 %v2711, %v2673
    %v2716 = vadd.f32 %v2715, %v2714
    %2718 = vset.pattern.permute.xlu0 0
    %2719 = vperm.xlu0 %2718, %v2711
    %v2720 = vpop.permute.xlu0 %2719
    %v2722 = vmul.f32 %v2720, %v2688
    %2724 = vset.pattern.permute.xlu0 0
    %2725 = vperm.xlu0 %2724, %v2714
    %v2726 = vpop.permute.xlu0 %2725
    %v2728 = vmul.f32 %v2726, %v2698
    %v2729 = vadd.f32 %v2722, %v2728
    %v2730 = vmul.f32 %v2720, %v2697
    %v2732 = vrot.slane %v2644, 4
    %v2734 = vmul.f32 %v2726, %v2732
    %v2735 = vadd.f32 %v2730, %v2734
    %v2737 = vrot.slane %v2470, 2
    %2739 = vmatprep.subr.mxu0 %v392
    %2740 = vmatpush1.msra.mxu0 %v391
    %2741 = vmatprep.subr.mxu0 %v395
    %2742 = vmatpush1.msra.mxu0 %v394
    %2743 = vmatprep.subr.mxu0 %v398
    %2744 = vmatpush1.msra.mxu0 %v397
    %2745 = vmatprep.subr.mxu0 %v401
    %2746 = vmatpush1.msra.mxu0 %v400
    %2747 = vmatprep.subr.mxu0 %v404
    %2748 = vmatpush1.msra.mxu0 %v403
    %2749 = vmatprep.subr.mxu0 %v407
    %2750 = vmatpush1.msra.mxu0 %v406
    %2751 = vmatprep.subr.mxu0 %v410
    %2752 = vmatpush1.msra.mxu0 %v409
    %2753 = vmatprep.subr.mxu0 %v413
    %2754 = vmatpush1.msra.mxu0 %v412
    %2755 = vmatprep.subr.mxu0 %v416
    %2756 = vmatpush1.msra.mxu0 %v415
    %2757 = vmatprep.subr.mxu0 %v419
    %2758 = vmatpush1.msra.mxu0 %v418
    %2759 = vmatprep.subr.mxu0 %v422
    %2760 = vmatpush1.msra.mxu0 %v421
    %2761 = vmatprep.subr.mxu0 %v425
    %2762 = vmatpush1.msra.mxu0 %v424
    %2763 = vmatprep.subr.mxu0 %v428
    %2764 = vmatpush1.msra.mxu0 %v427
    %2765 = vmatprep.subr.mxu0 %v431
    %2766 = vmatpush1.msra.mxu0 %v430
    %2767 = vmatprep.subr.mxu0 %v434
    %2768 = vmatpush1.msra.mxu0 %v433
    %2769 = vmatprep.subr.mxu0 %v437
    %2770 = vmatpush1.msra.mxu0 %v436
    %2771 = vmatprep.subr.mxu0 0.0
    %2772 = vmatpush1.msra.mxu0 0.0
    %2773 = vmatprep.subr.mxu0 0.0
    %2774 = vmatpush1.msra.mxu0 0.0
    %2775 = vmatprep.subr.mxu0 0.0
    %2776 = vmatpush1.msra.mxu0 0.0
    %2777 = vmatprep.subr.mxu0 0.0
    %2778 = vmatpush1.msra.mxu0 0.0
    %2779 = vmatprep.subr.mxu0 0.0
    %2780 = vmatpush1.msra.mxu0 0.0
    %2781 = vmatprep.subr.mxu0 0.0
    %2782 = vmatpush1.msra.mxu0 0.0
    %2783 = vmatprep.subr.mxu0 0.0
    %2784 = vmatpush1.msra.mxu0 0.0
    %2785 = vmatprep.subr.mxu0 0.0
    %2786 = vmatpush1.msra.mxu0 0.0
    %2787 = vmatprep.subr.mxu0 0.0
    %2788 = vmatpush1.msra.mxu0 0.0
    %2789 = vmatprep.subr.mxu0 0.0
    %2790 = vmatpush1.msra.mxu0 0.0
    %2791 = vmatprep.subr.mxu0 0.0
    %2792 = vmatpush1.msra.mxu0 0.0
    %2793 = vmatprep.subr.mxu0 0.0
    %2794 = vmatpush1.msra.mxu0 0.0
    %2795 = vmatprep.subr.mxu0 0.0
    %2796 = vmatpush1.msra.mxu0 0.0
    %2797 = vmatprep.subr.mxu0 0.0
    %2798 = vmatpush1.msra.mxu0 0.0
    %2799 = vmatprep.subr.mxu0 0.0
    %2800 = vmatpush1.msra.mxu0 0.0
    %2801 = vmatprep.subr.mxu0 0.0
    %2802 = vmatpush1.msra.mxu0 0.0
    %2803 = vmatprep.mubr.f32.mxu0 0.0
    %2804 = vmatmul.mubr.f32.gmra.mrb[0].mxu0 %v2737
    %v2805 = vpop.f32.mrb[0].mxu0
    %v2806 = vadd.f32 0.0, %v2805
    %v2807 = vpop.f32.mrb[0].mxu0
    %v2808 = vadd.f32 0.0, %v2807
    %2809 = vdwg.mxu0
    %2810 = vmatprep.subr.mxu0 0.0
    %2811 = vmatpush1.msra.mxu0 %v393
    %2812 = vmatprep.subr.mxu0 0.0
    %2813 = vmatpush1.msra.mxu0 %v396
    %2814 = vmatprep.subr.mxu0 0.0
    %2815 = vmatpush1.msra.mxu0 %v399
    %2816 = vmatprep.subr.mxu0 0.0
    %2817 = vmatpush1.msra.mxu0 %v402
    %2818 = vmatprep.subr.mxu0 0.0
    %2819 = vmatpush1.msra.mxu0 %v405
    %2820 = vmatprep.subr.mxu0 0.0
    %2821 = vmatpush1.msra.mxu0 %v408
    %2822 = vmatprep.subr.mxu0 0.0
    %2823 = vmatpush1.msra.mxu0 %v411
    %2824 = vmatprep.subr.mxu0 0.0
    %2825 = vmatpush1.msra.mxu0 %v414
    %2826 = vmatprep.subr.mxu0 0.0
    %2827 = vmatpush1.msra.mxu0 %v417
    %2828 = vmatprep.subr.mxu0 0.0
    %2829 = vmatpush1.msra.mxu0 %v420
    %2830 = vmatprep.subr.mxu0 0.0
    %2831 = vmatpush1.msra.mxu0 %v423
    %2832 = vmatprep.subr.mxu0 0.0
    %2833 = vmatpush1.msra.mxu0 %v426
    %2834 = vmatprep.subr.mxu0 0.0
    %2835 = vmatpush1.msra.mxu0 %v429
    %2836 = vmatprep.subr.mxu0 0.0
    %2837 = vmatpush1.msra.mxu0 %v432
    %2838 = vmatprep.subr.mxu0 0.0
    %2839 = vmatpush1.msra.mxu0 %v435
    %2840 = vmatprep.subr.mxu0 0.0
    %2841 = vmatpush1.msra.mxu0 %v438
    %2842 = vmatprep.subr.mxu0 0.0
    %2843 = vmatpush1.msra.mxu0 0.0
    %2844 = vmatprep.subr.mxu0 0.0
    %2845 = vmatpush1.msra.mxu0 0.0
    %2846 = vmatprep.subr.mxu0 0.0
    %2847 = vmatpush1.msra.mxu0 0.0
    %2848 = vmatprep.subr.mxu0 0.0
    %2849 = vmatpush1.msra.mxu0 0.0
    %2850 = vmatprep.subr.mxu0 0.0
    %2851 = vmatpush1.msra.mxu0 0.0
    %2852 = vmatprep.subr.mxu0 0.0
    %2853 = vmatpush1.msra.mxu0 0.0
    %2854 = vmatprep.subr.mxu0 0.0
    %2855 = vmatpush1.msra.mxu0 0.0
    %2856 = vmatprep.subr.mxu0 0.0
    %2857 = vmatpush1.msra.mxu0 0.0
    %2858 = vmatprep.subr.mxu0 0.0
    %2859 = vmatpush1.msra.mxu0 0.0
    %2860 = vmatprep.subr.mxu0 0.0
    %2861 = vmatpush1.msra.mxu0 0.0
    %2862 = vmatprep.subr.mxu0 0.0
    %2863 = vmatpush1.msra.mxu0 0.0
    %2864 = vmatprep.subr.mxu0 0.0
    %2865 = vmatpush1.msra.mxu0 0.0
    %2866 = vmatprep.subr.mxu0 0.0
    %2867 = vmatpush1.msra.mxu0 0.0
    %2868 = vmatprep.subr.mxu0 0.0
    %2869 = vmatpush1.msra.mxu0 0.0
    %2870 = vmatprep.subr.mxu0 0.0
    %2871 = vmatpush1.msra.mxu0 0.0
    %2872 = vmatprep.subr.mxu0 0.0
    %2873 = vmatpush1.msra.mxu0 0.0
    %2874 = vmatprep.mubr.f32.mxu0 0.0
    %2875 = vmatmul.mubr.f32.gmra.mrb[0].mxu0 %v2737
    %v2876 = vpop.f32.mrb[0].mxu0
    %v2877 = vadd.f32 0.0, %v2876
    %v2878 = vpop.f32.mrb[0].mxu0
    %2879 = vdwg.mxu0
    %v2881 = vrot.slane %v2806, 4
    %v2883 = vadd.f32 %v233, %v2881
    %v2884 = vxor.u32 %v2883, 2147483648
    %v2885 = vmul.f32 %v2884, 1.442695
    %v2886 = vpow.pop %v2885
    %v2887 = vadd.f32 %v2886, 1.0
    %v2888 = vrcp.pop %v2887
    %v2889 = vmul.f32 1.0, %v2888
    %v2891 = vrot.slane %v2808, 4
    %v2893 = vadd.f32 %v235, %v2891
    %v2894 = vxor.u32 %v2893, 2147483648
    %v2895 = vmul.f32 %v2894, 1.442695
    %v2896 = vpow.pop %v2895
    %v2897 = vadd.f32 %v2896, 1.0
    %v2898 = vrcp.pop %v2897
    %v2899 = vmul.f32 1.0, %v2898
    %v2900 = vadd.f32 %v2877, %v492
    %v2902 = vrot.slane %v2900, 4
    %v2904 = vmul.f32 %v2889, %v2902
    %v2905 = vadd.f32 %v310, %v2904
    %v2906 = vtanh.pop %v2905
    %v2907 = vsub.f32 1.0, %v2899
    %v2908 = vmul.f32 %v2907, %v2906
    %v2909 = vrot.slane %v2470, 6
    %v2911 = vmul.f32 %v2899, %v2909
    %v2912 = vadd.f32 %v2908, %v2911
    %2913 = vmatprep.subr.mxu0 %v441
    %2914 = vmatpush1.msra.mxu0 %v440
    %2915 = vmatprep.subr.mxu0 %v444
    %2916 = vmatpush1.msra.mxu0 %v443
    %2917 = vmatprep.subr.mxu0 %v447
    %2918 = vmatpush1.msra.mxu0 %v446
    %2919 = vmatprep.subr.mxu0 %v450
    %2920 = vmatpush1.msra.mxu0 %v449
    %2921 = vmatprep.subr.mxu0 %v453
    %2922 = vmatpush1.msra.mxu0 %v452
    %2923 = vmatprep.subr.mxu0 %v456
    %2924 = vmatpush1.msra.mxu0 %v455
    %2925 = vmatprep.subr.mxu0 %v459
    %2926 = vmatpush1.msra.mxu0 %v458
    %2927 = vmatprep.subr.mxu0 %v462
    %2928 = vmatpush1.msra.mxu0 %v461
    %2929 = vmatprep.subr.mxu0 %v465
    %2930 = vmatpush1.msra.mxu0 %v464
    %2931 = vmatprep.subr.mxu0 %v468
    %2932 = vmatpush1.msra.mxu0 %v467
    %2933 = vmatprep.subr.mxu0 %v471
    %2934 = vmatpush1.msra.mxu0 %v470
    %2935 = vmatprep.subr.mxu0 %v474
    %2936 = vmatpush1.msra.mxu0 %v473
    %2937 = vmatprep.subr.mxu0 %v477
    %2938 = vmatpush1.msra.mxu0 %v476
    %2939 = vmatprep.subr.mxu0 %v480
    %2940 = vmatpush1.msra.mxu0 %v479
    %2941 = vmatprep.subr.mxu0 %v483
    %2942 = vmatpush1.msra.mxu0 %v482
    %2943 = vmatprep.subr.mxu0 %v486
    %2944 = vmatpush1.msra.mxu0 %v485
    %2945 = vmatprep.subr.mxu0 0.0
    %2946 = vmatpush1.msra.mxu0 0.0
    %2947 = vmatprep.subr.mxu0 0.0
    %2948 = vmatpush1.msra.mxu0 0.0
    %2949 = vmatprep.subr.mxu0 0.0
    %2950 = vmatpush1.msra.mxu0 0.0
    %2951 = vmatprep.subr.mxu0 0.0
    %2952 = vmatpush1.msra.mxu0 0.0
    %2953 = vmatprep.subr.mxu0 0.0
    %2954 = vmatpush1.msra.mxu0 0.0
    %2955 = vmatprep.subr.mxu0 0.0
    %2956 = vmatpush1.msra.mxu0 0.0
    %2957 = vmatprep.subr.mxu0 0.0
    %2958 = vmatpush1.msra.mxu0 0.0
    %2959 = vmatprep.subr.mxu0 0.0
    %2960 = vmatpush1.msra.mxu0 0.0
    %2961 = vmatprep.subr.mxu0 0.0
    %2962 = vmatpush1.msra.mxu0 0.0
    %2963 = vmatprep.subr.mxu0 0.0
    %2964 = vmatpush1.msra.mxu0 0.0
    %2965 = vmatprep.subr.mxu0 0.0
    %2966 = vmatpush1.msra.mxu0 0.0
    %2967 = vmatprep.subr.mxu0 0.0
    %2968 = vmatpush1.msra.mxu0 0.0
    %2969 = vmatprep.subr.mxu0 0.0
    %2970 = vmatpush1.msra.mxu0 0.0
    %2971 = vmatprep.subr.mxu0 0.0
    %2972 = vmatpush1.msra.mxu0 0.0
    %2973 = vmatprep.subr.mxu0 0.0
    %2974 = vmatpush1.msra.mxu0 0.0
    %2975 = vmatprep.subr.mxu0 0.0
    %2976 = vmatpush1.msra.mxu0 0.0
    %2977 = vmatprep.mubr.f32.mxu0 0.0
    %2978 = vmatmul.mubr.f32.gmra.mrb[0].mxu0 %v2732
    %v2979 = vpop.f32.mrb[0].mxu0
    %v2980 = vadd.f32 0.0, %v2979
    %v2981 = vpop.f32.mrb[0].mxu0
    %v2982 = vadd.f32 0.0, %v2981
    %2983 = vdwg.mxu0
    %2984 = vmatprep.subr.mxu0 0.0
    %2985 = vmatpush1.msra.mxu0 %v442
    %2986 = vmatprep.subr.mxu0 0.0
    %2987 = vmatpush1.msra.mxu0 %v445
    %2988 = vmatprep.subr.mxu0 0.0
    %2989 = vmatpush1.msra.mxu0 %v448
    %2990 = vmatprep.subr.mxu0 0.0
    %2991 = vmatpush1.msra.mxu0 %v451
    %2992 = vmatprep.subr.mxu0 0.0
    %2993 = vmatpush1.msra.mxu0 %v454
    %2994 = vmatprep.subr.mxu0 0.0
    %2995 = vmatpush1.msra.mxu0 %v457
    %2996 = vmatprep.subr.mxu0 0.0
    %2997 = vmatpush1.msra.mxu0 %v460
    %2998 = vmatprep.subr.mxu0 0.0
    %2999 = vmatpush1.msra.mxu0 %v463
    %3000 = vmatprep.subr.mxu0 0.0
    %3001 = vmatpush1.msra.mxu0 %v466
    %3002 = vmatprep.subr.mxu0 0.0
    %3003 = vmatpush1.msra.mxu0 %v469
    %3004 = vmatprep.subr.mxu0 0.0
    %3005 = vmatpush1.msra.mxu0 %v472
    %3006 = vmatprep.subr.mxu0 0.0
    %3007 = vmatpush1.msra.mxu0 %v475
    %3008 = vmatprep.subr.mxu0 0.0
    %3009 = vmatpush1.msra.mxu0 %v478
    %3010 = vmatprep.subr.mxu0 0.0
    %3011 = vmatpush1.msra.mxu0 %v481
    %3012 = vmatprep.subr.mxu0 0.0
    %3013 = vmatpush1.msra.mxu0 %v484
    %3014 = vmatprep.subr.mxu0 0.0
    %3015 = vmatpush1.msra.mxu0 %v487
    %3016 = vmatprep.subr.mxu0 0.0
    %3017 = vmatpush1.msra.mxu0 0.0
    %3018 = vmatprep.subr.mxu0 0.0
    %3019 = vmatpush1.msra.mxu0 0.0
    %3020 = vmatprep.subr.mxu0 0.0
    %3021 = vmatpush1.msra.mxu0 0.0
    %3022 = vmatprep.subr.mxu0 0.0
    %3023 = vmatpush1.msra.mxu0 0.0
    %3024 = vmatprep.subr.mxu0 0.0
    %3025 = vmatpush1.msra.mxu0 0.0
    %3026 = vmatprep.subr.mxu0 0.0
    %3027 = vmatpush1.msra.mxu0 0.0
    %3028 = vmatprep.subr.mxu0 0.0
    %3029 = vmatpush1.msra.mxu0 0.0
    %3030 = vmatprep.subr.mxu0 0.0
    %3031 = vmatpush1.msra.mxu0 0.0
    %3032 = vmatprep.subr.mxu0 0.0
    %3033 = vmatpush1.msra.mxu0 0.0
    %3034 = vmatprep.subr.mxu0 0.0
    %3035 = vmatpush1.msra.mxu0 0.0
    %3036 = vmatprep.subr.mxu0 0.0
    %3037 = vmatpush1.msra.mxu0 0.0
    %3038 = vmatprep.subr.mxu0 0.0
    %3039 = vmatpush1.msra.mxu0 0.0
    %3040 = vmatprep.subr.mxu0 0.0
    %3041 = vmatpush1.msra.mxu0 0.0
    %3042 = vmatprep.subr.mxu0 0.0
    %3043 = vmatpush1.msra.mxu0 0.0
    %3044 = vmatprep.subr.mxu0 0.0
    %3045 = vmatpush1.msra.mxu0 0.0
    %3046 = vmatprep.subr.mxu0 0.0
    %3047 = vmatpush1.msra.mxu0 0.0
    %3048 = vmatprep.mubr.f32.mxu0 0.0
    %3049 = vmatmul.mubr.f32.gmra.mrb[0].mxu0 %v2732
    %v3050 = vpop.f32.mrb[0].mxu0
    %v3051 = vadd.f32 0.0, %v3050
    %v3052 = vpop.f32.mrb[0].mxu0
    %3053 = vdwg.mxu0
    %v3055 = vrot.slane %v2980, 6
    %v3057 = vadd.f32 %v306, %v3055
    %v3058 = vxor.u32 %v3057, 2147483648
    %v3059 = vmul.f32 %v3058, 1.442695
    %v3060 = vpow.pop %v3059
    %v3061 = vadd.f32 %v3060, 1.0
    %v3062 = vrcp.pop %v3061
    %v3063 = vmul.f32 1.0, %v3062
    %v3065 = vrot.slane %v2982, 6
    %v3067 = vadd.f32 %v381, %v3065
    %v3068 = vxor.u32 %v3067, 2147483648
    %v3069 = vmul.f32 %v3068, 1.442695
    %v3070 = vpow.pop %v3069
    %v3071 = vadd.f32 %v3070, 1.0
    %v3072 = vrcp.pop %v3071
    %v3073 = vmul.f32 1.0, %v3072
    %v3074 = vadd.f32 %v3051, %v497
    %v3076 = vrot.slane %v3074, 6
    %v3078 = vmul.f32 %v3063, %v3076
    %v3079 = vadd.f32 %v383, %v3078
    %v3080 = vtanh.pop %v3079
    %v3081 = vsub.f32 1.0, %v3073
    %v3082 = vmul.f32 %v3081, %v3080
    %v3083 = vrot.slane %v2644, 2
    %v3085 = vmul.f32 %v3073, %v3083
    %v3086 = vadd.f32 %v3082, %v3085
    %v3087 = vld [vmem:[%s1200] sm:$0x3]
    %v3088 = vmul.f32 %v2912, %v502
    %v3089 = vmul.f32 %v3087, %v507
    %v3091 = vrot.slane %v3089, 4
    %v3093 = vadd.f32 %v3088, %v3091
    %vm3094 = vcmask 1045508
    %v3095 = vsel %vm3094, %v3093, 0.0
    %3096 = vadd.xlane.f32.xlu0 %v3095
    %v3097 = vpop.xlane.xlu0 %3096
    %v3099 = vrot.slane %v3097, 4
    %v3101 = vmax.f32 %v2708, %v3099
    %v3102 = vsub.f32 %v2708, %v3101
    %v3103 = vmul.f32 %v3102, 1.442695
    %v3104 = vpow.pop %v3103
    %v3106 = vrot.slane %v3101, 4
    %v3108 = vsub.f32 %v3097, %v3106
    %v3109 = vmul.f32 %v3108, 1.442695
    %v3110 = vpow.pop %v3109
    %v3111 = vmul.f32 %v3104, %v2716
    %v3113 = vrot.slane %v3110, 4
    %v3115 = vadd.f32 %v3111, %v3113
    %3117 = vset.pattern.permute.xlu0 0
    %3118 = vperm.xlu0 %3117, %v3104
    %v3119 = vpop.permute.xlu0 %3118
    %v3121 = vmul.f32 %v3119, %v2729
    %3122 = vset.pattern.permute.xlu0 0
    %3123 = vperm.xlu0 %3122, %v3110
    %v3124 = vpop.permute.xlu0 %3123
    %v3126 = vmul.f32 %v3124, %v2912
    %v3128 = vrot.slane %v3126, 4
    %v3130 = vadd.f32 %v3121, %v3128
    %v3131 = vmul.f32 %v3119, %v2735
    %v3133 = vrot.slane %v3087, 4
    %v3135 = vmul.f32 %v3124, %v3133
    %v3137 = vrot.slane %v3135, 4
    %v3139 = vadd.f32 %v3131, %v3137
    %v3140 = vld [vmem:[%s1198] sm:$0x3]
    %v3141 = vmul.f32 %v3140, %v502
    %v3142 = vmul.f32 %v3086, %v507
    %v3144 = vrot.slane %v3142, 2
    %v3146 = vadd.f32 %v3141, %v3144
    %v3147 = vsel %vm2252, %v3146, 0.0
    %3148 = vadd.xlane.f32.xlu0 %v3147
    %v3149 = vpop.xlane.xlu0 %3148
    %v3150 = vmax.f32 %v3101, %v3149
    %v3151 = vsub.f32 %v3101, %v3150
    %v3152 = vmul.f32 %v3151, 1.442695
    %v3153 = vpow.pop %v3152
    %v3154 = vsub.f32 %v3149, %v3150
    %v3155 = vmul.f32 %v3154, 1.442695
    %v3156 = vpow.pop %v3155
    %v3157 = vmul.f32 %v3153, %v3115
    %v3158 = vadd.f32 %v3157, %v3156
    %3160 = vset.pattern.permute.xlu0 0
    %3161 = vperm.xlu0 %3160, %v3153
    %v3162 = vpop.permute.xlu0 %3161
    %v3164 = vmul.f32 %v3162, %v3130
    %3166 = vset.pattern.permute.xlu0 0
    %3167 = vperm.xlu0 %3166, %v3156
    %v3168 = vpop.permute.xlu0 %3167
    %v3170 = vmul.f32 %v3168, %v3140
    %v3171 = vadd.f32 %v3164, %v3170
    %v3172 = vmul.f32 %v3162, %v3139
    %v3174 = vrot.slane %v3086, 2
    %v3176 = vmul.f32 %v3168, %v3174
    %v3177 = vadd.f32 %v3172, %v3176
    %v3179 = vrot.slane %v2912, 4
    %3181 = vmatprep.subr.mxu0 %v392
    %3182 = vmatpush1.msra.mxu0 %v391
    %3183 = vmatprep.subr.mxu0 %v395
    %3184 = vmatpush1.msra.mxu0 %v394
    %3185 = vmatprep.subr.mxu0 %v398
    %3186 = vmatpush1.msra.mxu0 %v397
    %3187 = vmatprep.subr.mxu0 %v401
    %3188 = vmatpush1.msra.mxu0 %v400
    %3189 = vmatprep.subr.mxu0 %v404
    %3190 = vmatpush1.msra.mxu0 %v403
    %3191 = vmatprep.subr.mxu0 %v407
    %3192 = vmatpush1.msra.mxu0 %v406
    %3193 = vmatprep.subr.mxu0 %v410
    %3194 = vmatpush1.msra.mxu0 %v409
    %3195 = vmatprep.subr.mxu0 %v413
    %3196 = vmatpush1.msra.mxu0 %v412
    %3197 = vmatprep.subr.mxu0 %v416
    %3198 = vmatpush1.msra.mxu0 %v415
    %3199 = vmatprep.subr.mxu0 %v419
    %3200 = vmatpush1.msra.mxu0 %v418
    %3201 = vmatprep.subr.mxu0 %v422
    %3202 = vmatpush1.msra.mxu0 %v421
    %3203 = vmatprep.subr.mxu0 %v425
    %3204 = vmatpush1.msra.mxu0 %v424
    %3205 = vmatprep.subr.mxu0 %v428
    %3206 = vmatpush1.msra.mxu0 %v427
    %3207 = vmatprep.subr.mxu0 %v431
    %3208 = vmatpush1.msra.mxu0 %v430
    %3209 = vmatprep.subr.mxu0 %v434
    %3210 = vmatpush1.msra.mxu0 %v433
    %3211 = vmatprep.subr.mxu0 %v437
    %3212 = vmatpush1.msra.mxu0 %v436
    %3213 = vmatprep.subr.mxu0 0.0
    %3214 = vmatpush1.msra.mxu0 0.0
    %3215 = vmatprep.subr.mxu0 0.0
    %3216 = vmatpush1.msra.mxu0 0.0
    %3217 = vmatprep.subr.mxu0 0.0
    %3218 = vmatpush1.msra.mxu0 0.0
    %3219 = vmatprep.subr.mxu0 0.0
    %3220 = vmatpush1.msra.mxu0 0.0
    %3221 = vmatprep.subr.mxu0 0.0
    %3222 = vmatpush1.msra.mxu0 0.0
    %3223 = vmatprep.subr.mxu0 0.0
    %3224 = vmatpush1.msra.mxu0 0.0
    %3225 = vmatprep.subr.mxu0 0.0
    %3226 = vmatpush1.msra.mxu0 0.0
    %3227 = vmatprep.subr.mxu0 0.0
    %3228 = vmatpush1.msra.mxu0 0.0
    %3229 = vmatprep.subr.mxu0 0.0
    %3230 = vmatpush1.msra.mxu0 0.0
    %3231 = vmatprep.subr.mxu0 0.0
    %3232 = vmatpush1.msra.mxu0 0.0
    %3233 = vmatprep.subr.mxu0 0.0
    %3234 = vmatpush1.msra.mxu0 0.0
    %3235 = vmatprep.subr.mxu0 0.0
    %3236 = vmatpush1.msra.mxu0 0.0
    %3237 = vmatprep.subr.mxu0 0.0
    %3238 = vmatpush1.msra.mxu0 0.0
    %3239 = vmatprep.subr.mxu0 0.0
    %3240 = vmatpush1.msra.mxu0 0.0
    %3241 = vmatprep.subr.mxu0 0.0
    %3242 = vmatpush1.msra.mxu0 0.0
    %3243 = vmatprep.subr.mxu0 0.0
    %3244 = vmatpush1.msra.mxu0 0.0
    %3245 = vmatprep.mubr.f32.mxu0 0.0
    %3246 = vmatmul.mubr.f32.gmra.mrb[0].mxu0 %v3179
    %v3247 = vpop.f32.mrb[0].mxu0
    %v3248 = vadd.f32 0.0, %v3247
    %v3249 = vpop.f32.mrb[0].mxu0
    %v3250 = vadd.f32 0.0, %v3249
    %3251 = vdwg.mxu0
    %3252 = vmatprep.subr.mxu0 0.0
    %3253 = vmatpush1.msra.mxu0 %v393
    %3254 = vmatprep.subr.mxu0 0.0
    %3255 = vmatpush1.msra.mxu0 %v396
    %3256 = vmatprep.subr.mxu0 0.0
    %3257 = vmatpush1.msra.mxu0 %v399
    %3258 = vmatprep.subr.mxu0 0.0
    %3259 = vmatpush1.msra.mxu0 %v402
    %3260 = vmatprep.subr.mxu0 0.0
    %3261 = vmatpush1.msra.mxu0 %v405
    %3262 = vmatprep.subr.mxu0 0.0
    %3263 = vmatpush1.msra.mxu0 %v408
    %3264 = vmatprep.subr.mxu0 0.0
    %3265 = vmatpush1.msra.mxu0 %v411
    %3266 = vmatprep.subr.mxu0 0.0
    %3267 = vmatpush1.msra.mxu0 %v414
    %3268 = vmatprep.subr.mxu0 0.0
    %3269 = vmatpush1.msra.mxu0 %v417
    %3270 = vmatprep.subr.mxu0 0.0
    %3271 = vmatpush1.msra.mxu0 %v420
    %3272 = vmatprep.subr.mxu0 0.0
    %3273 = vmatpush1.msra.mxu0 %v423
    %3274 = vmatprep.subr.mxu0 0.0
    %3275 = vmatpush1.msra.mxu0 %v426
    %3276 = vmatprep.subr.mxu0 0.0
    %3277 = vmatpush1.msra.mxu0 %v429
    %3278 = vmatprep.subr.mxu0 0.0
    %3279 = vmatpush1.msra.mxu0 %v432
    %3280 = vmatprep.subr.mxu0 0.0
    %3281 = vmatpush1.msra.mxu0 %v435
    %3282 = vmatprep.subr.mxu0 0.0
    %3283 = vmatpush1.msra.mxu0 %v438
    %3284 = vmatprep.subr.mxu0 0.0
    %3285 = vmatpush1.msra.mxu0 0.0
    %3286 = vmatprep.subr.mxu0 0.0
    %3287 = vmatpush1.msra.mxu0 0.0
    %3288 = vmatprep.subr.mxu0 0.0
    %3289 = vmatpush1.msra.mxu0 0.0
    %3290 = vmatprep.subr.mxu0 0.0
    %3291 = vmatpush1.msra.mxu0 0.0
    %3292 = vmatprep.subr.mxu0 0.0
    %3293 = vmatpush1.msra.mxu0 0.0
    %3294 = vmatprep.subr.mxu0 0.0
    %3295 = vmatpush1.msra.mxu0 0.0
    %3296 = vmatprep.subr.mxu0 0.0
    %3297 = vmatpush1.msra.mxu0 0.0
    %3298 = vmatprep.subr.mxu0 0.0
    %3299 = vmatpush1.msra.mxu0 0.0
    %3300 = vmatprep.subr.mxu0 0.0
    %3301 = vmatpush1.msra.mxu0 0.0
    %3302 = vmatprep.subr.mxu0 0.0
    %3303 = vmatpush1.msra.mxu0 0.0
    %3304 = vmatprep.subr.mxu0 0.0
    %3305 = vmatpush1.msra.mxu0 0.0
    %3306 = vmatprep.subr.mxu0 0.0
    %3307 = vmatpush1.msra.mxu0 0.0
    %3308 = vmatprep.subr.mxu0 0.0
    %3309 = vmatpush1.msra.mxu0 0.0
    %3310 = vmatprep.subr.mxu0 0.0
    %3311 = vmatpush1.msra.mxu0 0.0
    %3312 = vmatprep.subr.mxu0 0.0
    %3313 = vmatpush1.msra.mxu0 0.0
    %3314 = vmatprep.subr.mxu0 0.0
    %3315 = vmatpush1.msra.mxu0 0.0
    %3316 = vmatprep.mubr.f32.mxu0 0.0
    %3317 = vmatmul.mubr.f32.gmra.mrb[0].mxu0 %v3179
    %v3318 = vpop.f32.mrb[0].mxu0
    %v3319 = vadd.f32 0.0, %v3318
    %v3320 = vpop.f32.mrb[0].mxu0
    %3321 = vdwg.mxu0
    %v3323 = vrot.slane %v3248, 2
    %v3325 = vadd.f32 %v233, %v3323
    %v3326 = vxor.u32 %v3325, 2147483648
    %v3327 = vmul.f32 %v3326, 1.442695
    %v3328 = vpow.pop %v3327
    %v3329 = vadd.f32 %v3328, 1.0
    %v3330 = vrcp.pop %v3329
    %v3331 = vmul.f32 1.0, %v3330
    %v3333 = vrot.slane %v3250, 2
    %v3335 = vadd.f32 %v235, %v3333
    %v3336 = vxor.u32 %v3335, 2147483648
    %v3337 = vmul.f32 %v3336, 1.442695
    %v3338 = vpow.pop %v3337
    %v3339 = vadd.f32 %v3338, 1.0
    %v3340 = vrcp.pop %v3339
    %v3341 = vmul.f32 1.0, %v3340
    %v3342 = vadd.f32 %v3319, %v492
    %v3344 = vrot.slane %v3342, 2
    %v3346 = vmul.f32 %v3331, %v3344
    %v3347 = vadd.f32 %v310, %v3346
    %v3348 = vtanh.pop %v3347
    %v3349 = vsub.f32 1.0, %v3341
    %v3350 = vmul.f32 %v3349, %v3348
    %v3351 = vrot.slane %v2912, 6
    %v3353 = vmul.f32 %v3341, %v3351
    %v3354 = vadd.f32 %v3350, %v3353
    %3355 = vmatprep.subr.mxu0 %v441
    %3356 = vmatpush1.msra.mxu0 %v440
    %3357 = vmatprep.subr.mxu0 %v444
    %3358 = vmatpush1.msra.mxu0 %v443
    %3359 = vmatprep.subr.mxu0 %v447
    %3360 = vmatpush1.msra.mxu0 %v446
    %3361 = vmatprep.subr.mxu0 %v450
    %3362 = vmatpush1.msra.mxu0 %v449
    %3363 = vmatprep.subr.mxu0 %v453
    %3364 = vmatpush1.msra.mxu0 %v452
    %3365 = vmatprep.subr.mxu0 %v456
    %3366 = vmatpush1.msra.mxu0 %v455
    %3367 = vmatprep.subr.mxu0 %v459
    %3368 = vmatpush1.msra.mxu0 %v458
    %3369 = vmatprep.subr.mxu0 %v462
    %3370 = vmatpush1.msra.mxu0 %v461
    %3371 = vmatprep.subr.mxu0 %v465
    %3372 = vmatpush1.msra.mxu0 %v464
    %3373 = vmatprep.subr.mxu0 %v468
    %3374 = vmatpush1.msra.mxu0 %v467
    %3375 = vmatprep.subr.mxu0 %v471
    %3376 = vmatpush1.msra.mxu0 %v470
    %3377 = vmatprep.subr.mxu0 %v474
    %3378 = vmatpush1.msra.mxu0 %v473
    %3379 = vmatprep.subr.mxu0 %v477
    %3380 = vmatpush1.msra.mxu0 %v476
    %3381 = vmatprep.subr.mxu0 %v480
    %3382 = vmatpush1.msra.mxu0 %v479
    %3383 = vmatprep.subr.mxu0 %v483
    %3384 = vmatpush1.msra.mxu0 %v482
    %3385 = vmatprep.subr.mxu0 %v486
    %3386 = vmatpush1.msra.mxu0 %v485
    %3387 = vmatprep.subr.mxu0 0.0
    %3388 = vmatpush1.msra.mxu0 0.0
    %3389 = vmatprep.subr.mxu0 0.0
    %3390 = vmatpush1.msra.mxu0 0.0
    %3391 = vmatprep.subr.mxu0 0.0
    %3392 = vmatpush1.msra.mxu0 0.0
    %3393 = vmatprep.subr.mxu0 0.0
    %3394 = vmatpush1.msra.mxu0 0.0
    %3395 = vmatprep.subr.mxu0 0.0
    %3396 = vmatpush1.msra.mxu0 0.0
    %3397 = vmatprep.subr.mxu0 0.0
    %3398 = vmatpush1.msra.mxu0 0.0
    %3399 = vmatprep.subr.mxu0 0.0
    %3400 = vmatpush1.msra.mxu0 0.0
    %3401 = vmatprep.subr.mxu0 0.0
    %3402 = vmatpush1.msra.mxu0 0.0
    %3403 = vmatprep.subr.mxu0 0.0
    %3404 = vmatpush1.msra.mxu0 0.0
    %3405 = vmatprep.subr.mxu0 0.0
    %3406 = vmatpush1.msra.mxu0 0.0
    %3407 = vmatprep.subr.mxu0 0.0
    %3408 = vmatpush1.msra.mxu0 0.0
    %3409 = vmatprep.subr.mxu0 0.0
    %3410 = vmatpush1.msra.mxu0 0.0
    %3411 = vmatprep.subr.mxu0 0.0
    %3412 = vmatpush1.msra.mxu0 0.0
    %3413 = vmatprep.subr.mxu0 0.0
    %3414 = vmatpush1.msra.mxu0 0.0
    %3415 = vmatprep.subr.mxu0 0.0
    %3416 = vmatpush1.msra.mxu0 0.0
    %3417 = vmatprep.subr.mxu0 0.0
    %3418 = vmatpush1.msra.mxu0 0.0
    %3419 = vmatprep.mubr.f32.mxu0 0.0
    %3420 = vmatmul.mubr.f32.gmra.mrb[0].mxu0 %v3174
    %v3421 = vpop.f32.mrb[0].mxu0
    %v3422 = vadd.f32 0.0, %v3421
    %v3423 = vpop.f32.mrb[0].mxu0
    %v3424 = vadd.f32 0.0, %v3423
    %3425 = vdwg.mxu0
    %3426 = vmatprep.subr.mxu0 0.0
    %3427 = vmatpush1.msra.mxu0 %v442
    %3428 = vmatprep.subr.mxu0 0.0
    %3429 = vmatpush1.msra.mxu0 %v445
    %3430 = vmatprep.subr.mxu0 0.0
    %3431 = vmatpush1.msra.mxu0 %v448
    %3432 = vmatprep.subr.mxu0 0.0
    %3433 = vmatpush1.msra.mxu0 %v451
    %3434 = vmatprep.subr.mxu0 0.0
    %3435 = vmatpush1.msra.mxu0 %v454
    %3436 = vmatprep.subr.mxu0 0.0
    %3437 = vmatpush1.msra.mxu0 %v457
    %3438 = vmatprep.subr.mxu0 0.0
    %3439 = vmatpush1.msra.mxu0 %v460
    %3440 = vmatprep.subr.mxu0 0.0
    %3441 = vmatpush1.msra.mxu0 %v463
    %3442 = vmatprep.subr.mxu0 0.0
    %3443 = vmatpush1.msra.mxu0 %v466
    %3444 = vmatprep.subr.mxu0 0.0
    %3445 = vmatpush1.msra.mxu0 %v469
    %3446 = vmatprep.subr.mxu0 0.0
    %3447 = vmatpush1.msra.mxu0 %v472
    %3448 = vmatprep.subr.mxu0 0.0
    %3449 = vmatpush1.msra.mxu0 %v475
    %3450 = vmatprep.subr.mxu0 0.0
    %3451 = vmatpush1.msra.mxu0 %v478
    %3452 = vmatprep.subr.mxu0 0.0
    %3453 = vmatpush1.msra.mxu0 %v481
    %3454 = vmatprep.subr.mxu0 0.0
    %3455 = vmatpush1.msra.mxu0 %v484
    %3456 = vmatprep.subr.mxu0 0.0
    %3457 = vmatpush1.msra.mxu0 %v487
    %3458 = vmatprep.subr.mxu0 0.0
    %3459 = vmatpush1.msra.mxu0 0.0
    %3460 = vmatprep.subr.mxu0 0.0
    %3461 = vmatpush1.msra.mxu0 0.0
    %3462 = vmatprep.subr.mxu0 0.0
    %3463 = vmatpush1.msra.mxu0 0.0
    %3464 = vmatprep.subr.mxu0 0.0
    %3465 = vmatpush1.msra.mxu0 0.0
    %3466 = vmatprep.subr.mxu0 0.0
    %3467 = vmatpush1.msra.mxu0 0.0
    %3468 = vmatprep.subr.mxu0 0.0
    %3469 = vmatpush1.msra.mxu0 0.0
    %3470 = vmatprep.subr.mxu0 0.0
    %3471 = vmatpush1.msra.mxu0 0.0
    %3472 = vmatprep.subr.mxu0 0.0
    %3473 = vmatpush1.msra.mxu0 0.0
    %3474 = vmatprep.subr.mxu0 0.0
    %3475 = vmatpush1.msra.mxu0 0.0
    %3476 = vmatprep.subr.mxu0 0.0
    %3477 = vmatpush1.msra.mxu0 0.0
    %3478 = vmatprep.subr.mxu0 0.0
    %3479 = vmatpush1.msra.mxu0 0.0
    %3480 = vmatprep.subr.mxu0 0.0
    %3481 = vmatpush1.msra.mxu0 0.0
    %3482 = vmatprep.subr.mxu0 0.0
    %3483 = vmatpush1.msra.mxu0 0.0
    %3484 = vmatprep.subr.mxu0 0.0
    %3485 = vmatpush1.msra.mxu0 0.0
    %3486 = vmatprep.subr.mxu0 0.0
    %3487 = vmatpush1.msra.mxu0 0.0
    %3488 = vmatprep.subr.mxu0 0.0
    %3489 = vmatpush1.msra.mxu0 0.0
    %3490 = vmatprep.mubr.f32.mxu0 0.0
    %3491 = vmatmul.mubr.f32.gmra.mrb[0].mxu0 %v3174
    %v3492 = vpop.f32.mrb[0].mxu0
    %v3493 = vadd.f32 0.0, %v3492
    %v3494 = vpop.f32.mrb[0].mxu0
    %3495 = vdwg.mxu0
    %v3496 = vadd.f32 %v306, %v3422
    %v3497 = vxor.u32 %v3496, 2147483648
    %v3498 = vmul.f32 %v3497, 1.442695
    %v3499 = vpow.pop %v3498
    %v3500 = vadd.f32 %v3499, 1.0
    %v3501 = vrcp.pop %v3500
    %v3502 = vmul.f32 1.0, %v3501
    %v3503 = vadd.f32 %v381, %v3424
    %v3504 = vxor.u32 %v3503, 2147483648
    %v3505 = vmul.f32 %v3504, 1.442695
    %v3506 = vpow.pop %v3505
    %v3507 = vadd.f32 %v3506, 1.0
    %v3508 = vrcp.pop %v3507
    %v3509 = vmul.f32 1.0, %v3508
    %v3510 = vadd.f32 %v3493, %v497
    %v3511 = vmul.f32 %v3502, %v3510
    %v3512 = vadd.f32 %v383, %v3511
    %v3513 = vtanh.pop %v3512
    %v3514 = vsub.f32 1.0, %v3509
    %v3515 = vmul.f32 %v3514, %v3513
    %v3516 = vmul.f32 %v3509, %v3174
    %v3517 = vadd.f32 %v3515, %v3516
    %v3518 = vld [vmem:[%s844] sm:$0x3]
    %v3519 = vmul.f32 %v3354, %v502
    %v3520 = vmul.f32 %v3518, %v507
    %v3522 = vrot.slane %v3520, 2
    %v3524 = vadd.f32 %v3519, %v3522
    %vm3525 = vcmask 1047558
    %v3526 = vsel %vm3525, %v3524, 0.0
    %3527 = vadd.xlane.f32.xlu0 %v3526
    %v3528 = vpop.xlane.xlu0 %3527
    %v3530 = vrot.slane %v3528, 6
    %v3532 = vmax.f32 %v3150, %v3530
    %v3533 = vsub.f32 %v3150, %v3532
    %v3534 = vmul.f32 %v3533, 1.442695
    %v3535 = vpow.pop %v3534
    %v3537 = vrot.slane %v3532, 2
    %v3539 = vsub.f32 %v3528, %v3537
    %v3540 = vmul.f32 %v3539, 1.442695
    %v3541 = vpow.pop %v3540
    %v3542 = vmul.f32 %v3535, %v3158
    %v3544 = vrot.slane %v3541, 6
    %v3546 = vadd.f32 %v3542, %v3544
    %3548 = vset.pattern.permute.xlu0 0
    %3549 = vperm.xlu0 %3548, %v3535
    %v3550 = vpop.permute.xlu0 %3549
    %v3552 = vmul.f32 %v3550, %v3171
    %3553 = vset.pattern.permute.xlu0 0
    %3554 = vperm.xlu0 %3553, %v3541
    %v3555 = vpop.permute.xlu0 %3554
    %v3557 = vmul.f32 %v3555, %v3354
    %v3559 = vrot.slane %v3557, 6
    %v3561 = vadd.f32 %v3552, %v3559
    %v3562 = vmul.f32 %v3550, %v3177
    %v3564 = vrot.slane %v3518, 2
    %v3566 = vmul.f32 %v3555, %v3564
    %v3568 = vrot.slane %v3566, 6
    %v3570 = vadd.f32 %v3562, %v3568
    %v3571 = vld [vmem:[#allocation2] sm:$0x3]
    %v3572 = vmul.f32 %v3571, %v502
    %v3573 = vmul.f32 %v3517, %v507
    %v3574 = vadd.f32 %v3572, %v3573
    %v3575 = vsel %vm2252, %v3574, 0.0
    %3576 = vadd.xlane.f32.xlu0 %v3575
    %v3577 = vpop.xlane.xlu0 %3576
    %v3578 = vmax.f32 %v3532, %v3577
    %v3579 = vsub.f32 %v3532, %v3578
    %v3580 = vmul.f32 %v3579, 1.442695
    %v3581 = vpow.pop %v3580
    %v3582 = vsub.f32 %v3577, %v3578
    %v3583 = vmul.f32 %v3582, 1.442695
    %v3584 = vpow.pop %v3583
    %v3585 = vmul.f32 %v3581, %v3546
    %v3586 = vadd.f32 %v3585, %v3584
    %3588 = vset.pattern.permute.xlu0 0
    %3589 = vperm.xlu0 %3588, %v3581
    %v3590 = vpop.permute.xlu0 %3589
    %v3592 = vmul.f32 %v3590, %v3561
    %3594 = vset.pattern.permute.xlu0 0
    %3595 = vperm.xlu0 %3594, %v3584
    %v3596 = vpop.permute.xlu0 %3595
    %v3598 = vmul.f32 %v3596, %v3571
    %v3599 = vadd.f32 %v3592, %v3598
    %v3600 = vmul.f32 %v3590, %v3570
    %v3601 = vmul.f32 %v3596, %v3517
    %v3602 = vadd.f32 %v3600, %v3601
    %v3603 = vrcp.pop %v3586
    %v3604 = vmul.f32 1.0, %v3603
    %3606 = vset.pattern.permute.xlu0 0
    %3607 = vperm.xlu0 %3606, %v3604
    %v3608 = vpop.permute.xlu0 %3607
    %v3610 = vmul.f32 %v3599, %v3608
    %3611 = vst [vmem:[#allocation9] sm:$0x3] %v3610
    %v3612 = vmul.f32 %v3602, %v3608
    %3613 = vst [vmem:[#allocation9 + $0x2] sm:$0x3] %v3612
    // Predicated region
    $region34: #{tpu_custom_call.1} parent=1 // pred_check
      _
    $region35: #{tpu_custom_call.1} parent=1 // pred_check_branch
      %3615 = sbr.rel (0) target = $region37
    $region36: #{tpu_custom_call.1} parent=1 // pred_region
      %s3617 = ssub.s32 64, 64
      %3618 = vsyncadd [#allocation5], %s3617
      %s3620 = sshll.u32 [#allocation9], 4
      %s3621 = int_to_ptr.vmem [resolvable:$true] %s3620
      %3623 = dma.vmem_to_hbm [thread:$0]  %s3621, 64, %s5, [#allocation5]
    $region37: #{tpu_custom_call.1} parent=1 // pred_fallthru
      _
    // Predicated region
    $region38: #{tpu_custom_call.1} parent=1 // pred_check
      _
    $region39: #{tpu_custom_call.1} parent=1 // pred_check_branch
      %3625 = sbr.rel (0) target = $region41
    $region40: #{tpu_custom_call.1} parent=1 // pred_region
      %3626 = dma.done [#allocation5], 64
    $region41: #{tpu_custom_call.1} parent=1 // pred_fallthru
      _
    %3627 = vsyncpa [#allocation4], 1
    %3628 = vsyncpa [#allocation7], 1
    %3629 = vsyncpa [#allocation5], 1

</llo_original>
